<compile_context>
chip_gen: v7x
topology: tpu7x:2x2x1
jax: 0.10.0
libtpu: 0.0.40
codegen_flags: <defaults>
</compile_context>

<pallas_src>
import jax
import jax.numpy as jnp
from jax.experimental import pallas as pl
from jax.experimental.pallas import tpu as pltpu

K_IN = 100      # logical input feature count (PyTorch fc1 in_features)
K_PAD = 128     # padded contraction dim for layer 1
N_OUT = 7       # number of classes


def _round_up(x, m):
    return (x + m - 1) // m * m


def _mlp_kernel(x_ref,
                w1_ref, b1_ref,
                w2_ref, b2_ref,
                w3_ref, b3_ref,
                w4_ref, b4_ref,
                w5_ref, b5_ref,
                o_ref):
    # MXU-input dtype (bf16); accumulation is always f32 via
    # preferred_element_type, biases are f32 added after accumulation.
    cdt = w1_ref.dtype

    def layer(h, w_ref, b_ref):
        return jnp.dot(h.astype(cdt), w_ref[...],
                       preferred_element_type=jnp.float32) + b_ref[...]

    h = jnp.maximum(layer(x_ref[...], w1_ref, b1_ref), 0.0)
    h = jnp.maximum(layer(h, w2_ref, b2_ref), 0.0)
    h = jnp.maximum(layer(h, w3_ref, b3_ref), 0.0)
    h = jnp.maximum(layer(h, w4_ref, b4_ref), 0.0)
    logits = layer(h, w5_ref, b5_ref)

    # Numerically stable softmax over the class dim; divide goes to the EUP.
    m = jnp.max(logits, axis=1, keepdims=True)
    e = jnp.exp(logits - m)
    denom = jnp.sum(e, axis=1, keepdims=True)
    o_ref[...] = (e * pl.reciprocal(denom, approx=True)).astype(o_ref.dtype)


def _resident_spec(a):
    """Whole-array block that is re-used (same block index) on every grid step."""
    nd = a.ndim
    return pl.BlockSpec(a.shape, lambda i, _nd=nd: (0,) * _nd)


def mlp_forward(x, params, *, batch_tile=256):
    """x: (B, 100) float32. params: dict w1..w5 (bf16, [in,out]), b1..b5 (f32, [1,out]).

    Returns softmax probabilities of shape (B, 7) in float32.
    """
    B, K = x.shape
    assert K == K_IN, K

    # Batch tile: multiple of 8 (sublane), capped at 256 (MXU row dim).
    TB = min(batch_tile, _round_up(B, 8))
    B_pad = _round_up(B, TB)

    # Pad batch to a multiple of TB and features 100 -> 128 (zeros).
    x_pad = jnp.zeros((B_pad, K_PAD), jnp.float32).at[:B, :K_IN].set(x)

    weights_and_biases = (
        params["w1"], params["b1"],
        params["w2"], params["b2"],
        params["w3"], params["b3"],
        params["w4"], params["b4"],
        params["w5"], params["b5"],
    )

    in_specs = [pl.BlockSpec((TB, K_PAD), lambda i: (i, 0))]
    in_specs += [_resident_spec(a) for a in weights_and_biases]

    out = pl.pallas_call(
        _mlp_kernel,
        out_shape=jax.ShapeDtypeStruct((B_pad, N_OUT), jnp.float32),
        grid=(B_pad // TB,),
        in_specs=in_specs,
        out_specs=pl.BlockSpec((TB, N_OUT), lambda i: (i, 0)),
        compiler_params=pltpu.CompilerParams(
            dimension_semantics=("parallel",)),   # megacore sharding on v7x
    )(x_pad, *weights_and_biases)

    return out[:B]


def init_params(key, param_dtype=jnp.bfloat16):
    """Parameter init matching the nn.Linear shapes (torch default uniform bound).

    Weights are stored as [in_features, out_features] (transpose of torch's
    [out, in]) so the kernel computes x @ W + b directly; w1 is zero-padded
    along the contraction dim from 100 to 128. Weights are bf16 (halves HBM
    traffic / VMEM residency), biases stay f32 as (1, out_features).
    """
    dims = [(K_IN, 1024), (1024, 512), (512, 512), (512, 128), (128, N_OUT)]
    params = {}
    for idx, (fan_in, fan_out) in enumerate(dims, start=1):
        key, kw, kb = jax.random.split(key, 3)
        bound = float(fan_in) ** -0.5
        w = jax.random.uniform(kw, (fan_in, fan_out), jnp.float32, -bound, bound)
        b = jax.random.uniform(kb, (1, fan_out), jnp.float32, -bound, bound)
        if idx == 1:  # one-time zero-pad of the layer-1 contraction dim
            w = jnp.zeros((K_PAD, fan_out), jnp.float32).at[:fan_in, :].set(w)
        params[f"w{idx}"] = w.astype(param_dtype)
        params[f"b{idx}"] = b
    return params


if __name__ == "__main__":
    key = jax.random.PRNGKey(0)
    key, kx = jax.random.split(key)

    B = 8  # small demo batch
    x = jax.random.normal(kx, (B, K_IN), dtype=jnp.float32)
    params = init_params(key)

    out = jax.block_until_ready(mlp_forward(x, params))

    assert out.shape == (B, N_OUT), out.shape
    # softmax rows sum to ~1 (approx reciprocal => loose tolerance)
    assert jnp.allclose(jnp.sum(out, axis=1), 1.0, atol=5e-3)

    # Pure-JAX reference with the same precision choices (bf16 weights/acts,
    # f32 accumulation & biases).
    def ref(x, p):
        def lin(h, w, b):
            return jnp.dot(h.astype(w.dtype), w,
                           preferred_element_type=jnp.float32) + b
        xp = jnp.zeros((x.shape[0], K_PAD), jnp.float32).at[:, :K_IN].set(x)
        h = jnp.maximum(lin(xp, p["w1"], p["b1"]), 0.0)
        h = jnp.maximum(lin(h, p["w2"], p["b2"]), 0.0)
        h = jnp.maximum(lin(h, p["w3"], p["b3"]), 0.0)
        h = jnp.maximum(lin(h, p["w4"], p["b4"]), 0.0)
        return jax.nn.softmax(lin(h, p["w5"], p["b5"]), axis=1)

    assert jnp.allclose(out, ref(x, params), atol=1e-2, rtol=1e-2)

    print("KERNEL_OK")
</pallas_src>

<mosaic_0001>
module attributes {stable_mosaic.version = 11 : i64} {
  func.func @_mlp_kernel(%arg0: i32, %arg1: memref<8x128xf32, #tpu.memory_space<vmem>>, %arg2: memref<128x1024xbf16, #tpu.memory_space<vmem>>, %arg3: memref<1x1024xf32, #tpu.memory_space<vmem>>, %arg4: memref<1024x512xbf16, #tpu.memory_space<vmem>>, %arg5: memref<1x512xf32, #tpu.memory_space<vmem>>, %arg6: memref<512x512xbf16, #tpu.memory_space<vmem>>, %arg7: memref<1x512xf32, #tpu.memory_space<vmem>>, %arg8: memref<512x128xbf16, #tpu.memory_space<vmem>>, %arg9: memref<1x128xf32, #tpu.memory_space<vmem>>, %arg10: memref<128x7xbf16, #tpu.memory_space<vmem>>, %arg11: memref<1x7xf32, #tpu.memory_space<vmem>>, %arg12: memref<8x7xf32, #tpu.memory_space<vmem>>) attributes {dimension_semantics = [#tpu.dimension_semantics<parallel>], iteration_bounds = array<i64: 1>, scalar_prefetch = 0 : i64, scratch_operands = 0 : i64, tpu.core_type = #tpu.core_type<tc>, window_params = [{transform_indices = @transform_0, window_bounds = array<i64: 8, 128>}, {pipeline_mode = #tpu.pipeline_mode<synchronous>, transform_indices = @transform_1, window_bounds = array<i64: 128, 1024>}, {pipeline_mode = #tpu.pipeline_mode<synchronous>, transform_indices = @transform_2, window_bounds = array<i64: 1, 1024>}, {pipeline_mode = #tpu.pipeline_mode<synchronous>, transform_indices = @transform_3, window_bounds = array<i64: 1024, 512>}, {pipeline_mode = #tpu.pipeline_mode<synchronous>, transform_indices = @transform_4, window_bounds = array<i64: 1, 512>}, {pipeline_mode = #tpu.pipeline_mode<synchronous>, transform_indices = @transform_5, window_bounds = array<i64: 512, 512>}, {pipeline_mode = #tpu.pipeline_mode<synchronous>, transform_indices = @transform_6, window_bounds = array<i64: 1, 512>}, {pipeline_mode = #tpu.pipeline_mode<synchronous>, transform_indices = @transform_7, window_bounds = array<i64: 512, 128>}, {pipeline_mode = #tpu.pipeline_mode<synchronous>, transform_indices = @transform_8, window_bounds = array<i64: 1, 128>}, {pipeline_mode = #tpu.pipeline_mode<synchronous>, transform_indices = @transform_9, window_bounds = array<i64: 128, 7>}, {pipeline_mode = #tpu.pipeline_mode<synchronous>, transform_indices = @transform_10, window_bounds = array<i64: 1, 7>}, {transform_indices = @transform_11, window_bounds = array<i64: 8, 7>}]} {
    %c0 = arith.constant 0 : index
    %c0_0 = arith.constant 0 : index
    %0 = vector.load %arg1[%c0, %c0_0] : memref<8x128xf32, #tpu.memory_space<vmem>>, vector<8x128xf32>
    %1 = arith.truncf %0 : vector<8x128xf32> to vector<8x128xbf16>
    %c0_1 = arith.constant 0 : index
    %c0_2 = arith.constant 0 : index
    %2 = vector.load %arg2[%c0_1, %c0_2] : memref<128x1024xbf16, #tpu.memory_space<vmem>>, vector<128x1024xbf16>
    %cst = arith.constant dense<0.000000e+00> : vector<8x1024xf32>
    %3 = tpu.matmul %1, %2, %cst {dimension_numbers = #tpu.dot_dimension_numbers<[1], [0], [0], [1], [0, 0, 1, 1], [], []>} : vector<8x128xbf16>, vector<128x1024xbf16>, vector<8x1024xf32> -> vector<8x1024xf32>
    %c0_3 = arith.constant 0 : index
    %c0_4 = arith.constant 0 : index
    %4 = vector.load %arg3[%c0_3, %c0_4] : memref<1x1024xf32, #tpu.memory_space<vmem>>, vector<1x1024xf32>
    %5 = vector.broadcast %4 : vector<1x1024xf32> to vector<8x1024xf32>
    %6 = arith.addf %3, %5 : vector<8x1024xf32>
    %cst_5 = arith.constant 0.000000e+00 : f32
    %7 = vector.broadcast %cst_5 : f32 to vector<8x1024xf32>
    %8 = arith.maximumf %6, %7 : vector<8x1024xf32>
    %9 = arith.truncf %8 : vector<8x1024xf32> to vector<8x1024xbf16>
    %c0_6 = arith.constant 0 : index
    %c0_7 = arith.constant 0 : index
    %10 = vector.load %arg4[%c0_6, %c0_7] : memref<1024x512xbf16, #tpu.memory_space<vmem>>, vector<1024x512xbf16>
    %cst_8 = arith.constant dense<0.000000e+00> : vector<8x512xf32>
    %11 = tpu.matmul %9, %10, %cst_8 {dimension_numbers = #tpu.dot_dimension_numbers<[1], [0], [0], [1], [0, 0, 1, 1], [], []>} : vector<8x1024xbf16>, vector<1024x512xbf16>, vector<8x512xf32> -> vector<8x512xf32>
    %c0_9 = arith.constant 0 : index
    %c0_10 = arith.constant 0 : index
    %12 = vector.load %arg5[%c0_9, %c0_10] : memref<1x512xf32, #tpu.memory_space<vmem>>, vector<1x512xf32>
    %13 = vector.broadcast %12 : vector<1x512xf32> to vector<8x512xf32>
    %14 = arith.addf %11, %13 : vector<8x512xf32>
    %cst_11 = arith.constant 0.000000e+00 : f32
    %15 = vector.broadcast %cst_11 : f32 to vector<8x512xf32>
    %16 = arith.maximumf %14, %15 : vector<8x512xf32>
    %17 = arith.truncf %16 : vector<8x512xf32> to vector<8x512xbf16>
    %c0_12 = arith.constant 0 : index
    %c0_13 = arith.constant 0 : index
    %18 = vector.load %arg6[%c0_12, %c0_13] : memref<512x512xbf16, #tpu.memory_space<vmem>>, vector<512x512xbf16>
    %cst_14 = arith.constant dense<0.000000e+00> : vector<8x512xf32>
    %19 = tpu.matmul %17, %18, %cst_14 {dimension_numbers = #tpu.dot_dimension_numbers<[1], [0], [0], [1], [0, 0, 1, 1], [], []>} : vector<8x512xbf16>, vector<512x512xbf16>, vector<8x512xf32> -> vector<8x512xf32>
    %c0_15 = arith.constant 0 : index
    %c0_16 = arith.constant 0 : index
    %20 = vector.load %arg7[%c0_15, %c0_16] : memref<1x512xf32, #tpu.memory_space<vmem>>, vector<1x512xf32>
    %21 = vector.broadcast %20 : vector<1x512xf32> to vector<8x512xf32>
    %22 = arith.addf %19, %21 : vector<8x512xf32>
    %cst_17 = arith.constant 0.000000e+00 : f32
    %23 = vector.broadcast %cst_17 : f32 to vector<8x512xf32>
    %24 = arith.maximumf %22, %23 : vector<8x512xf32>
    %25 = arith.truncf %24 : vector<8x512xf32> to vector<8x512xbf16>
    %c0_18 = arith.constant 0 : index
    %c0_19 = arith.constant 0 : index
    %26 = vector.load %arg8[%c0_18, %c0_19] : memref<512x128xbf16, #tpu.memory_space<vmem>>, vector<512x128xbf16>
    %cst_20 = arith.constant dense<0.000000e+00> : vector<8x128xf32>
    %27 = tpu.matmul %25, %26, %cst_20 {dimension_numbers = #tpu.dot_dimension_numbers<[1], [0], [0], [1], [0, 0, 1, 1], [], []>} : vector<8x512xbf16>, vector<512x128xbf16>, vector<8x128xf32> -> vector<8x128xf32>
    %c0_21 = arith.constant 0 : index
    %c0_22 = arith.constant 0 : index
    %28 = vector.load %arg9[%c0_21, %c0_22] : memref<1x128xf32, #tpu.memory_space<vmem>>, vector<1x128xf32>
    %29 = vector.broadcast %28 : vector<1x128xf32> to vector<8x128xf32>
    %30 = arith.addf %27, %29 : vector<8x128xf32>
    %cst_23 = arith.constant 0.000000e+00 : f32
    %31 = vector.broadcast %cst_23 : f32 to vector<8x128xf32>
    %32 = arith.maximumf %30, %31 : vector<8x128xf32>
    %33 = arith.truncf %32 : vector<8x128xf32> to vector<8x128xbf16>
    %c0_24 = arith.constant 0 : index
    %c0_25 = arith.constant 0 : index
    %34 = vector.load %arg10[%c0_24, %c0_25] : memref<128x7xbf16, #tpu.memory_space<vmem>>, vector<128x7xbf16>
    %cst_26 = arith.constant dense<0.000000e+00> : vector<8x7xf32>
    %35 = tpu.matmul %33, %34, %cst_26 {dimension_numbers = #tpu.dot_dimension_numbers<[1], [0], [0], [1], [0, 0, 1, 1], [], []>} : vector<8x128xbf16>, vector<128x7xbf16>, vector<8x7xf32> -> vector<8x7xf32>
    %c0_27 = arith.constant 0 : index
    %c0_28 = arith.constant 0 : index
    %36 = vector.load %arg11[%c0_27, %c0_28] : memref<1x7xf32, #tpu.memory_space<vmem>>, vector<1x7xf32>
    %37 = vector.broadcast %36 : vector<1x7xf32> to vector<8x7xf32>
    %38 = arith.addf %35, %37 : vector<8x7xf32>
    %cst_29 = arith.constant dense<0xFF800000> : vector<8xf32>
    %39 = vector.multi_reduction <maximumf>, %38, %cst_29 [1] : vector<8x7xf32> to vector<8xf32>
    %40 = vector.shape_cast %39 : vector<8xf32> to vector<8x1xf32>
    %41 = vector.broadcast %40 : vector<8x1xf32> to vector<8x7xf32>
    %42 = arith.subf %38, %41 : vector<8x7xf32>
    %43 = math.exp %42 : vector<8x7xf32>
    %cst_30 = arith.constant dense<0.000000e+00> : vector<8xf32>
    %44 = vector.multi_reduction <add>, %43, %cst_30 [1] : vector<8x7xf32> to vector<8xf32>
    %45 = vector.shape_cast %44 : vector<8xf32> to vector<8x1xf32>
    %46 = tpu.reciprocal %45 {approx = true} : vector<8x1xf32> -> vector<8x1xf32>
    %47 = vector.broadcast %46 : vector<8x1xf32> to vector<8x7xf32>
    %48 = arith.mulf %43, %47 : vector<8x7xf32>
    %c0_31 = arith.constant 0 : index
    %c0_32 = arith.constant 0 : index
    %49 = vector.load %arg12[%c0_31, %c0_32] : memref<8x7xf32, #tpu.memory_space<vmem>>, vector<8x7xf32>
    tpu.vector_store %arg12[%c0_31, %c0_32], %48 {strides = array<i32>} : memref<8x7xf32, #tpu.memory_space<vmem>>, vector<8x7xf32>,
    return
  }
  func.func @transform_0(%arg0: i32) -> (i32, i32) {
    %c0_i32 = arith.constant 0 : i32
    %c0_i32_0 = arith.constant 0 : i32
    return %arg0, %c0_i32 : i32, i32
  }
  func.func @transform_1(%arg0: i32) -> (i32, i32) {
    %c0_i32 = arith.constant 0 : i32
    %c0_i32_0 = arith.constant 0 : i32
    %c0_i32_1 = arith.constant 0 : i32
    return %c0_i32, %c0_i32_0 : i32, i32
  }
  func.func @transform_2(%arg0: i32) -> (i32, i32) {
    %c0_i32 = arith.constant 0 : i32
    %c0_i32_0 = arith.constant 0 : i32
    %c0_i32_1 = arith.constant 0 : i32
    return %c0_i32, %c0_i32_0 : i32, i32
  }
  func.func @transform_3(%arg0: i32) -> (i32, i32) {
    %c0_i32 = arith.constant 0 : i32
    %c0_i32_0 = arith.constant 0 : i32
    %c0_i32_1 = arith.constant 0 : i32
    return %c0_i32, %c0_i32_0 : i32, i32
  }
  func.func @transform_4(%arg0: i32) -> (i32, i32) {
    %c0_i32 = arith.constant 0 : i32
    %c0_i32_0 = arith.constant 0 : i32
    %c0_i32_1 = arith.constant 0 : i32
    return %c0_i32, %c0_i32_0 : i32, i32
  }
  func.func @transform_5(%arg0: i32) -> (i32, i32) {
    %c0_i32 = arith.constant 0 : i32
    %c0_i32_0 = arith.constant 0 : i32
    %c0_i32_1 = arith.constant 0 : i32
    return %c0_i32, %c0_i32_0 : i32, i32
  }
  func.func @transform_6(%arg0: i32) -> (i32, i32) {
    %c0_i32 = arith.constant 0 : i32
    %c0_i32_0 = arith.constant 0 : i32
    %c0_i32_1 = arith.constant 0 : i32
    return %c0_i32, %c0_i32_0 : i32, i32
  }
  func.func @transform_7(%arg0: i32) -> (i32, i32) {
    %c0_i32 = arith.constant 0 : i32
    %c0_i32_0 = arith.constant 0 : i32
    %c0_i32_1 = arith.constant 0 : i32
    return %c0_i32, %c0_i32_0 : i32, i32
  }
  func.func @transform_8(%arg0: i32) -> (i32, i32) {
    %c0_i32 = arith.constant 0 : i32
    %c0_i32_0 = arith.constant 0 : i32
    %c0_i32_1 = arith.constant 0 : i32
    return %c0_i32, %c0_i32_0 : i32, i32
  }
  func.func @transform_9(%arg0: i32) -> (i32, i32) {
    %c0_i32 = arith.constant 0 : i32
    %c0_i32_0 = arith.constant 0 : i32
    %c0_i32_1 = arith.constant 0 : i32
    return %c0_i32, %c0_i32_0 : i32, i32
  }
  func.func @transform_10(%arg0: i32) -> (i32, i32) {
    %c0_i32 = arith.constant 0 : i32
    %c0_i32_0 = arith.constant 0 : i32
    %c0_i32_1 = arith.constant 0 : i32
    return %c0_i32, %c0_i32_0 : i32, i32
  }
  func.func @transform_11(%arg0: i32) -> (i32, i32) {
    %c0_i32 = arith.constant 0 : i32
    %c0_i32_0 = arith.constant 0 : i32
    return %arg0, %c0_i32 : i32, i32
  }
}

</mosaic_0001>

<llo_original>
// kernel: tpu_custom_call.1
$region0: #{tpu_custom_call.1}
  #allocation0 [shape = 'u32[]', space=smem, size = 0x4, offset = 0x4, fixed_abs, tag = 'smem constant byte address 0x4 - core index']
  #allocation1 [shape = 'u32[144,128]{1,0:T(1,128)}', space=vmem, size = 0x12000, scoped, tag = 'internal scratch']
  %s0 = inlined_call_operand.vmem [shape: f32[8,128], index: 0, kind: input, shape index: {}]
  %s1 = inlined_call_operand.hbm [shape: bf16[128,1024], index: 1, kind: input, shape index: {}]
  %s2 = inlined_call_operand.vmem [shape: f32[1,1024], index: 2, kind: input, shape index: {}]
  %s3 = inlined_call_operand.hbm [shape: bf16[1024,512], index: 3, kind: input, shape index: {}]
  %s4 = inlined_call_operand.vmem [shape: f32[1,512], index: 4, kind: input, shape index: {}]
  %s5 = inlined_call_operand.hbm [shape: bf16[512,512], index: 5, kind: input, shape index: {}]
  %s6 = inlined_call_operand.vmem [shape: f32[1,512], index: 6, kind: input, shape index: {}]
  %s7 = inlined_call_operand.hbm [shape: bf16[512,128], index: 7, kind: input, shape index: {}]
  %s8 = inlined_call_operand.vmem [shape: f32[1,128], index: 8, kind: input, shape index: {}]
  %s9 = inlined_call_operand.vmem [shape: bf16[128,7], index: 9, kind: input, shape index: {}]
  %s10 = inlined_call_operand.vmem [shape: f32[1,7], index: 10, kind: input, shape index: {}]
  %s11 = inlined_call_operand.hbm [shape: f32[8,7], index: 11, kind: output, shape index: {}]
  %s12 = sld [smem:[#allocation0]]
  $region70: #{tpu_custom_call.1} parent=0
    _
  %s14 = ssub.s32 1, %s12
  %s15 = scalar_select 0, %s14, %s12
  $region1: #{tpu_custom_call.1} parent=0
    #allocation2 [shape = 'u8[262144]{0}', space=vmem, size = 0x40000, scoped, tag = 'input window, operand 1, single buffered']
    #allocation3 [shape = 's32[1]{0}', space=sflag, size = 0x4, scoped, tag = 'scoped memory for tpu_custom_call.1']
    #allocation4 [shape = 's32[1]{0}', space=sflag, size = 0x4, scoped, tag = 'scoped memory for tpu_custom_call.1']
    #allocation5 [shape = 'u8[1048576]{0}', space=vmem, size = 0x100000, scoped, tag = 'input window, operand 3, single buffered']
    #allocation6 [shape = 's32[1]{0}', space=sflag, size = 0x4, scoped, tag = 'scoped memory for tpu_custom_call.1']
    #allocation7 [shape = 'u8[524288]{0}', space=vmem, size = 0x80000, scoped, tag = 'input window, operand 5, single buffered']
    #allocation8 [shape = 'u8[131072]{0}', space=vmem, size = 0x20000, scoped, tag = 'input window, operand 7, single buffered']
    #allocation9 [shape = 's32[1]{0}', space=sflag, size = 0x4, scoped, tag = 'scoped memory for tpu_custom_call.1']
    #allocation10 [shape = 'u8[4096]{0}', space=vmem, size = 0x1000, scoped, tag = 'output window, operand 0, single buffered']
    %16 = vsyncpa [#allocation3], 0
    %17 = vsyncpa [#allocation6], 0
    %18 = vsyncpa [#allocation9], 0
    %19 = vsyncpa [#allocation4], 0
    // Predicated region
    $region2: #{tpu_custom_call.1} parent=1 // pred_check
      _
    $region3: #{tpu_custom_call.1} parent=1 // pred_check_branch
      %21 = sbr.rel (0) target = $region5
    $region4: #{tpu_custom_call.1} parent=1 // pred_region
      _
    $region5: #{tpu_custom_call.1} parent=1 // pred_fallthru
      _
    // Predicated region
    $region6: #{tpu_custom_call.1} parent=1 // pred_check
      _
    $region7: #{tpu_custom_call.1} parent=1 // pred_check_branch
      %23 = sbr.rel (0) target = $region9
    $region8: #{tpu_custom_call.1} parent=1 // pred_region
      %s25 = ssub.s32 8192, 8192
      %26 = vsyncadd [#allocation3], %s25
      %s27 = sshll.u32 [#allocation2], 4
      %s28 = int_to_ptr.vmem [resolvable:$true] %s27
      %33 = dma.hbm_to_vmem [thread:$0]  %s1, 8192, %s28, [#allocation3], 512, 512, 32
    $region9: #{tpu_custom_call.1} parent=1 // pred_fallthru
      _
    // Predicated region
    $region10: #{tpu_custom_call.1} parent=1 // pred_check
      _
    $region11: #{tpu_custom_call.1} parent=1 // pred_check_branch
      %35 = sbr.rel (0) target = $region13
    $region12: #{tpu_custom_call.1} parent=1 // pred_region
      _
    $region13: #{tpu_custom_call.1} parent=1 // pred_fallthru
      _
    // Predicated region
    $region14: #{tpu_custom_call.1} parent=1 // pred_check
      _
    $region15: #{tpu_custom_call.1} parent=1 // pred_check_branch
      %37 = sbr.rel (0) target = $region17
    $region16: #{tpu_custom_call.1} parent=1 // pred_region
      %s39 = ssub.s32 32768, 32768
      %40 = vsyncadd [#allocation6], %s39
      %s41 = sshll.u32 [#allocation5], 4
      %s42 = int_to_ptr.vmem [resolvable:$true] %s41
      %47 = dma.hbm_to_vmem [thread:$0]  %s3, 32768, %s42, [#allocation6], 256, 256, 16
    $region17: #{tpu_custom_call.1} parent=1 // pred_fallthru
      _
    // Predicated region
    $region18: #{tpu_custom_call.1} parent=1 // pred_check
      _
    $region19: #{tpu_custom_call.1} parent=1 // pred_check_branch
      %49 = sbr.rel (0) target = $region21
    $region20: #{tpu_custom_call.1} parent=1 // pred_region
      _
    $region21: #{tpu_custom_call.1} parent=1 // pred_fallthru
      _
    // Predicated region
    $region22: #{tpu_custom_call.1} parent=1 // pred_check
      _
    $region23: #{tpu_custom_call.1} parent=1 // pred_check_branch
      %51 = sbr.rel (0) target = $region25
    $region24: #{tpu_custom_call.1} parent=1 // pred_region
      %s53 = ssub.s32 16384, 16384
      %54 = vsyncadd [#allocation6], %s53
      %s55 = sshll.u32 [#allocation7], 4
      %s56 = int_to_ptr.vmem [resolvable:$true] %s55
      %61 = dma.hbm_to_vmem [thread:$0]  %s5, 16384, %s56, [#allocation6], 256, 256, 16
    $region25: #{tpu_custom_call.1} parent=1 // pred_fallthru
      _
    // Predicated region
    $region26: #{tpu_custom_call.1} parent=1 // pred_check
      _
    $region27: #{tpu_custom_call.1} parent=1 // pred_check_branch
      %63 = sbr.rel (0) target = $region29
    $region28: #{tpu_custom_call.1} parent=1 // pred_region
      _
    $region29: #{tpu_custom_call.1} parent=1 // pred_fallthru
      _
    // Predicated region
    $region30: #{tpu_custom_call.1} parent=1 // pred_check
      _
    $region31: #{tpu_custom_call.1} parent=1 // pred_check_branch
      %65 = sbr.rel (0) target = $region33
    $region32: #{tpu_custom_call.1} parent=1 // pred_region
      %s67 = ssub.s32 4096, 4096
      %68 = vsyncadd [#allocation9], %s67
      %s69 = sshll.u32 [#allocation8], 4
      %s70 = int_to_ptr.vmem [resolvable:$true] %s69
      %75 = dma.hbm_to_vmem [thread:$0]  %s7, 4096, %s70, [#allocation9], 64, 64, 4
    $region33: #{tpu_custom_call.1} parent=1 // pred_fallthru
      _
    // Predicated region
    $region34: #{tpu_custom_call.1} parent=1 // pred_check
      _
    $region35: #{tpu_custom_call.1} parent=1 // pred_check_branch
      %77 = sbr.rel (0) target = $region37
    $region36: #{tpu_custom_call.1} parent=1 // pred_region
      _
    $region37: #{tpu_custom_call.1} parent=1 // pred_fallthru
      _
    // Predicated region
    $region38: #{tpu_custom_call.1} parent=1 // pred_check
      _
    $region39: #{tpu_custom_call.1} parent=1 // pred_check_branch
      %79 = sbr.rel (0) target = $region41
    $region40: #{tpu_custom_call.1} parent=1 // pred_region
      _
    $region41: #{tpu_custom_call.1} parent=1 // pred_fallthru
      _
    // Predicated region
    $region42: #{tpu_custom_call.1} parent=1 // pred_check
      _
    $region43: #{tpu_custom_call.1} parent=1 // pred_check_branch
      %81 = sbr.rel (0) target = $region45
    $region44: #{tpu_custom_call.1} parent=1 // pred_region
      _
    $region45: #{tpu_custom_call.1} parent=1 // pred_fallthru
      _
    // Predicated region
    $region46: #{tpu_custom_call.1} parent=1 // pred_check
      _
    $region47: #{tpu_custom_call.1} parent=1 // pred_check_branch
      %83 = sbr.rel (0) target = $region49
    $region48: #{tpu_custom_call.1} parent=1 // pred_region
      %84 = dma.done [#allocation3], 8192
    $region49: #{tpu_custom_call.1} parent=1 // pred_fallthru
      _
    // Predicated region
    $region50: #{tpu_custom_call.1} parent=1 // pred_check
      _
    $region51: #{tpu_custom_call.1} parent=1 // pred_check_branch
      %86 = sbr.rel (0) target = $region53
    $region52: #{tpu_custom_call.1} parent=1 // pred_region
      %87 = dma.done [#allocation6], 32768
    $region53: #{tpu_custom_call.1} parent=1 // pred_fallthru
      _
    // Predicated region
    $region54: #{tpu_custom_call.1} parent=1 // pred_check
      _
    $region55: #{tpu_custom_call.1} parent=1 // pred_check_branch
      %89 = sbr.rel (0) target = $region57
    $region56: #{tpu_custom_call.1} parent=1 // pred_region
      %90 = dma.done [#allocation6], 16384
    $region57: #{tpu_custom_call.1} parent=1 // pred_fallthru
      _
    // Predicated region
    $region58: #{tpu_custom_call.1} parent=1 // pred_check
      _
    $region59: #{tpu_custom_call.1} parent=1 // pred_check_branch
      %92 = sbr.rel (0) target = $region61
    $region60: #{tpu_custom_call.1} parent=1 // pred_region
      %93 = dma.done [#allocation9], 4096
    $region61: #{tpu_custom_call.1} parent=1 // pred_fallthru
      _
    %v95 = vld [vmem:[%s0] sm:$0xff]
    %v96 = vpack.c.bf16 %v95, %v95
    %v97 = vld [vmem:[#allocation2] sm:$0xff]
    %v98 = vld [vmem:[#allocation2 + $0x8] sm:$0xff]
    %v99 = vld [vmem:[#allocation2 + $0x10] sm:$0xff]
    %v100 = vld [vmem:[#allocation2 + $0x18] sm:$0xff]
    %v101 = vld [vmem:[#allocation2 + $0x20] sm:$0xff]
    %v102 = vld [vmem:[#allocation2 + $0x28] sm:$0xff]
    %v103 = vld [vmem:[#allocation2 + $0x30] sm:$0xff]
    %v104 = vld [vmem:[#allocation2 + $0x38] sm:$0xff]
    %v105 = vld [vmem:[#allocation2 + $0x40] sm:$0xff]
    %v106 = vld [vmem:[#allocation2 + $0x48] sm:$0xff]
    %v107 = vld [vmem:[#allocation2 + $0x50] sm:$0xff]
    %v108 = vld [vmem:[#allocation2 + $0x58] sm:$0xff]
    %v109 = vld [vmem:[#allocation2 + $0x60] sm:$0xff]
    %v110 = vld [vmem:[#allocation2 + $0x68] sm:$0xff]
    %v111 = vld [vmem:[#allocation2 + $0x70] sm:$0xff]
    %v112 = vld [vmem:[#allocation2 + $0x78] sm:$0xff]
    %v113 = vld [vmem:[#allocation2 + $0x80] sm:$0xff]
    %v114 = vld [vmem:[#allocation2 + $0x88] sm:$0xff]
    %v115 = vld [vmem:[#allocation2 + $0x90] sm:$0xff]
    %v116 = vld [vmem:[#allocation2 + $0x98] sm:$0xff]
    %v117 = vld [vmem:[#allocation2 + $0xa0] sm:$0xff]
    %v118 = vld [vmem:[#allocation2 + $0xa8] sm:$0xff]
    %v119 = vld [vmem:[#allocation2 + $0xb0] sm:$0xff]
    %v120 = vld [vmem:[#allocation2 + $0xb8] sm:$0xff]
    %v121 = vld [vmem:[#allocation2 + $0xc0] sm:$0xff]
    %v122 = vld [vmem:[#allocation2 + $0xc8] sm:$0xff]
    %v123 = vld [vmem:[#allocation2 + $0xd0] sm:$0xff]
    %v124 = vld [vmem:[#allocation2 + $0xd8] sm:$0xff]
    %v125 = vld [vmem:[#allocation2 + $0xe0] sm:$0xff]
    %v126 = vld [vmem:[#allocation2 + $0xe8] sm:$0xff]
    %v127 = vld [vmem:[#allocation2 + $0xf0] sm:$0xff]
    %v128 = vld [vmem:[#allocation2 + $0xf8] sm:$0xff]
    %v129 = vld [vmem:[#allocation2 + $0x100] sm:$0xff]
    %v130 = vld [vmem:[#allocation2 + $0x108] sm:$0xff]
    %v131 = vld [vmem:[#allocation2 + $0x110] sm:$0xff]
    %v132 = vld [vmem:[#allocation2 + $0x118] sm:$0xff]
    %v133 = vld [vmem:[#allocation2 + $0x120] sm:$0xff]
    %v134 = vld [vmem:[#allocation2 + $0x128] sm:$0xff]
    %v135 = vld [vmem:[#allocation2 + $0x130] sm:$0xff]
    %v136 = vld [vmem:[#allocation2 + $0x138] sm:$0xff]
    %v137 = vld [vmem:[#allocation2 + $0x140] sm:$0xff]
    %v138 = vld [vmem:[#allocation2 + $0x148] sm:$0xff]
    %v139 = vld [vmem:[#allocation2 + $0x150] sm:$0xff]
    %v140 = vld [vmem:[#allocation2 + $0x158] sm:$0xff]
    %v141 = vld [vmem:[#allocation2 + $0x160] sm:$0xff]
    %v142 = vld [vmem:[#allocation2 + $0x168] sm:$0xff]
    %v143 = vld [vmem:[#allocation2 + $0x170] sm:$0xff]
    %v144 = vld [vmem:[#allocation2 + $0x178] sm:$0xff]
    %v145 = vld [vmem:[#allocation2 + $0x180] sm:$0xff]
    %v146 = vld [vmem:[#allocation2 + $0x188] sm:$0xff]
    %v147 = vld [vmem:[#allocation2 + $0x190] sm:$0xff]
    %v148 = vld [vmem:[#allocation2 + $0x198] sm:$0xff]
    %v149 = vld [vmem:[#allocation2 + $0x1a0] sm:$0xff]
    %v150 = vld [vmem:[#allocation2 + $0x1a8] sm:$0xff]
    %v151 = vld [vmem:[#allocation2 + $0x1b0] sm:$0xff]
    %v152 = vld [vmem:[#allocation2 + $0x1b8] sm:$0xff]
    %v153 = vld [vmem:[#allocation2 + $0x1c0] sm:$0xff]
    %v154 = vld [vmem:[#allocation2 + $0x1c8] sm:$0xff]
    %v155 = vld [vmem:[#allocation2 + $0x1d0] sm:$0xff]
    %v156 = vld [vmem:[#allocation2 + $0x1d8] sm:$0xff]
    %v157 = vld [vmem:[#allocation2 + $0x1e0] sm:$0xff]
    %v158 = vld [vmem:[#allocation2 + $0x1e8] sm:$0xff]
    %v159 = vld [vmem:[#allocation2 + $0x1f0] sm:$0xff]
    %v160 = vld [vmem:[#allocation2 + $0x1f8] sm:$0xff]
    %v161 = vld [vmem:[%s2] sm:$0xff]
    %v163 = vlaneseq
    %v164 = vshrl.u32 %v163, 7
    %v165 = vsub.s32 0, %v164
    %v166 = vrot.slane %v161, %v165
    %v167 = vlaneseq
    %v168 = vshrl.u32 %v167, 7
    %v169 = vsub.s32 1, %v168
    %v170 = vrot.slane %v161, %v169
    %v171 = vlaneseq
    %v172 = vshrl.u32 %v171, 7
    %v173 = vsub.s32 2, %v172
    %v174 = vrot.slane %v161, %v173
    %v175 = vlaneseq
    %v176 = vshrl.u32 %v175, 7
    %v177 = vsub.s32 3, %v176
    %v178 = vrot.slane %v161, %v177
    %v179 = vlaneseq
    %v180 = vshrl.u32 %v179, 7
    %v181 = vsub.s32 4, %v180
    %v182 = vrot.slane %v161, %v181
    %v183 = vlaneseq
    %v184 = vshrl.u32 %v183, 7
    %v185 = vsub.s32 5, %v184
    %v186 = vrot.slane %v161, %v185
    %v187 = vlaneseq
    %v188 = vshrl.u32 %v187, 7
    %v189 = vsub.s32 6, %v188
    %v190 = vrot.slane %v161, %v189
    %v191 = vlaneseq
    %v192 = vshrl.u32 %v191, 7
    %v193 = vsub.s32 7, %v192
    %v194 = vrot.slane %v161, %v193
    %v267 = vunpack.c.l.b16 %v97
    %v268 = vunpack.c.h.b16 %v97
    %v269 = vunpack.c.l.b16 %v98
    %v270 = vunpack.c.h.b16 %v98
    %v271 = vunpack.c.l.b16 %v99
    %v272 = vunpack.c.h.b16 %v99
    %v273 = vunpack.c.l.b16 %v100
    %v274 = vunpack.c.h.b16 %v100
    %v275 = vunpack.c.l.b16 %v101
    %v276 = vunpack.c.h.b16 %v101
    %v277 = vunpack.c.l.b16 %v102
    %v278 = vunpack.c.h.b16 %v102
    %v279 = vunpack.c.l.b16 %v103
    %v280 = vunpack.c.h.b16 %v103
    %v281 = vunpack.c.l.b16 %v104
    %v282 = vunpack.c.h.b16 %v104
    %v283 = vunpack.c.l.b16 %v105
    %v284 = vunpack.c.h.b16 %v105
    %v285 = vunpack.c.l.b16 %v106
    %v286 = vunpack.c.h.b16 %v106
    %v287 = vunpack.c.l.b16 %v107
    %v288 = vunpack.c.h.b16 %v107
    %v289 = vunpack.c.l.b16 %v108
    %v290 = vunpack.c.h.b16 %v108
    %v291 = vunpack.c.l.b16 %v109
    %v292 = vunpack.c.h.b16 %v109
    %v293 = vunpack.c.l.b16 %v110
    %v294 = vunpack.c.h.b16 %v110
    %v295 = vunpack.c.l.b16 %v111
    %v296 = vunpack.c.h.b16 %v111
    %v297 = vunpack.c.l.b16 %v112
    %v298 = vunpack.c.h.b16 %v112
    %v299 = vunpack.c.l.b16 %v113
    %v300 = vunpack.c.h.b16 %v113
    %v301 = vunpack.c.l.b16 %v114
    %v302 = vunpack.c.h.b16 %v114
    %v303 = vunpack.c.l.b16 %v115
    %v304 = vunpack.c.h.b16 %v115
    %v305 = vunpack.c.l.b16 %v116
    %v306 = vunpack.c.h.b16 %v116
    %v307 = vunpack.c.l.b16 %v117
    %v308 = vunpack.c.h.b16 %v117
    %v309 = vunpack.c.l.b16 %v118
    %v310 = vunpack.c.h.b16 %v118
    %v311 = vunpack.c.l.b16 %v119
    %v312 = vunpack.c.h.b16 %v119
    %v313 = vunpack.c.l.b16 %v120
    %v314 = vunpack.c.h.b16 %v120
    %v315 = vunpack.c.l.b16 %v121
    %v316 = vunpack.c.h.b16 %v121
    %v317 = vunpack.c.l.b16 %v122
    %v318 = vunpack.c.h.b16 %v122
    %v319 = vunpack.c.l.b16 %v123
    %v320 = vunpack.c.h.b16 %v123
    %v321 = vunpack.c.l.b16 %v124
    %v322 = vunpack.c.h.b16 %v124
    %v323 = vunpack.c.l.b16 %v125
    %v324 = vunpack.c.h.b16 %v125
    %v325 = vunpack.c.l.b16 %v126
    %v326 = vunpack.c.h.b16 %v126
    %v327 = vunpack.c.l.b16 %v127
    %v328 = vunpack.c.h.b16 %v127
    %v329 = vunpack.c.l.b16 %v128
    %v330 = vunpack.c.h.b16 %v128
    %v331 = vunpack.c.l.b16 %v129
    %v332 = vunpack.c.h.b16 %v129
    %v333 = vunpack.c.l.b16 %v130
    %v334 = vunpack.c.h.b16 %v130
    %v335 = vunpack.c.l.b16 %v131
    %v336 = vunpack.c.h.b16 %v131
    %v337 = vunpack.c.l.b16 %v132
    %v338 = vunpack.c.h.b16 %v132
    %v339 = vunpack.c.l.b16 %v133
    %v340 = vunpack.c.h.b16 %v133
    %v341 = vunpack.c.l.b16 %v134
    %v342 = vunpack.c.h.b16 %v134
    %v343 = vunpack.c.l.b16 %v135
    %v344 = vunpack.c.h.b16 %v135
    %v345 = vunpack.c.l.b16 %v136
    %v346 = vunpack.c.h.b16 %v136
    %v347 = vunpack.c.l.b16 %v137
    %v348 = vunpack.c.h.b16 %v137
    %v349 = vunpack.c.l.b16 %v138
    %v350 = vunpack.c.h.b16 %v138
    %v351 = vunpack.c.l.b16 %v139
    %v352 = vunpack.c.h.b16 %v139
    %v353 = vunpack.c.l.b16 %v140
    %v354 = vunpack.c.h.b16 %v140
    %v355 = vunpack.c.l.b16 %v141
    %v356 = vunpack.c.h.b16 %v141
    %v357 = vunpack.c.l.b16 %v142
    %v358 = vunpack.c.h.b16 %v142
    %v359 = vunpack.c.l.b16 %v143
    %v360 = vunpack.c.h.b16 %v143
    %v361 = vunpack.c.l.b16 %v144
    %v362 = vunpack.c.h.b16 %v144
    %v363 = vunpack.c.l.b16 %v145
    %v364 = vunpack.c.h.b16 %v145
    %v365 = vunpack.c.l.b16 %v146
    %v366 = vunpack.c.h.b16 %v146
    %v367 = vunpack.c.l.b16 %v147
    %v368 = vunpack.c.h.b16 %v147
    %v369 = vunpack.c.l.b16 %v148
    %v370 = vunpack.c.h.b16 %v148
    %v371 = vunpack.c.l.b16 %v149
    %v372 = vunpack.c.h.b16 %v149
    %v373 = vunpack.c.l.b16 %v150
    %v374 = vunpack.c.h.b16 %v150
    %v375 = vunpack.c.l.b16 %v151
    %v376 = vunpack.c.h.b16 %v151
    %v377 = vunpack.c.l.b16 %v152
    %v378 = vunpack.c.h.b16 %v152
    %v379 = vunpack.c.l.b16 %v153
    %v380 = vunpack.c.h.b16 %v153
    %v381 = vunpack.c.l.b16 %v154
    %v382 = vunpack.c.h.b16 %v154
    %v383 = vunpack.c.l.b16 %v155
    %v384 = vunpack.c.h.b16 %v155
    %v385 = vunpack.c.l.b16 %v156
    %v386 = vunpack.c.h.b16 %v156
    %v387 = vunpack.c.l.b16 %v157
    %v388 = vunpack.c.h.b16 %v157
    %v389 = vunpack.c.l.b16 %v158
    %v390 = vunpack.c.h.b16 %v158
    %v391 = vunpack.c.l.b16 %v159
    %v392 = vunpack.c.h.b16 %v159
    %v393 = vunpack.c.l.b16 %v160
    %v394 = vunpack.c.h.b16 %v160
    %v395 = vpack.c.b16 %v275, %v267
    %v396 = vpack.c.b16 %v276, %v268
    %v397 = vpack.c.b16 %v277, %v269
    %v398 = vpack.c.b16 %v278, %v270
    %v399 = vpack.c.b16 %v279, %v271
    %v400 = vpack.c.b16 %v280, %v272
    %v401 = vpack.c.b16 %v281, %v273
    %v402 = vpack.c.b16 %v282, %v274
    %v403 = vpack.c.b16 %v291, %v283
    %v404 = vpack.c.b16 %v292, %v284
    %v405 = vpack.c.b16 %v293, %v285
    %v406 = vpack.c.b16 %v294, %v286
    %v407 = vpack.c.b16 %v295, %v287
    %v408 = vpack.c.b16 %v296, %v288
    %v409 = vpack.c.b16 %v297, %v289
    %v410 = vpack.c.b16 %v298, %v290
    %v411 = vpack.c.b16 %v307, %v299
    %v412 = vpack.c.b16 %v308, %v300
    %v413 = vpack.c.b16 %v309, %v301
    %v414 = vpack.c.b16 %v310, %v302
    %v415 = vpack.c.b16 %v311, %v303
    %v416 = vpack.c.b16 %v312, %v304
    %v417 = vpack.c.b16 %v313, %v305
    %v418 = vpack.c.b16 %v314, %v306
    %v419 = vpack.c.b16 %v323, %v315
    %v420 = vpack.c.b16 %v324, %v316
    %v421 = vpack.c.b16 %v325, %v317
    %v422 = vpack.c.b16 %v326, %v318
    %v423 = vpack.c.b16 %v327, %v319
    %v424 = vpack.c.b16 %v328, %v320
    %v425 = vpack.c.b16 %v329, %v321
    %v426 = vpack.c.b16 %v330, %v322
    %v427 = vpack.c.b16 %v339, %v331
    %v428 = vpack.c.b16 %v340, %v332
    %v429 = vpack.c.b16 %v341, %v333
    %v430 = vpack.c.b16 %v342, %v334
    %v431 = vpack.c.b16 %v343, %v335
    %v432 = vpack.c.b16 %v344, %v336
    %v433 = vpack.c.b16 %v345, %v337
    %v434 = vpack.c.b16 %v346, %v338
    %v435 = vpack.c.b16 %v355, %v347
    %v436 = vpack.c.b16 %v356, %v348
    %v437 = vpack.c.b16 %v357, %v349
    %v438 = vpack.c.b16 %v358, %v350
    %v439 = vpack.c.b16 %v359, %v351
    %v440 = vpack.c.b16 %v360, %v352
    %v441 = vpack.c.b16 %v361, %v353
    %v442 = vpack.c.b16 %v362, %v354
    %v443 = vpack.c.b16 %v371, %v363
    %v444 = vpack.c.b16 %v372, %v364
    %v445 = vpack.c.b16 %v373, %v365
    %v446 = vpack.c.b16 %v374, %v366
    %v447 = vpack.c.b16 %v375, %v367
    %v448 = vpack.c.b16 %v376, %v368
    %v449 = vpack.c.b16 %v377, %v369
    %v450 = vpack.c.b16 %v378, %v370
    %v451 = vpack.c.b16 %v387, %v379
    %v452 = vpack.c.b16 %v388, %v380
    %v453 = vpack.c.b16 %v389, %v381
    %v454 = vpack.c.b16 %v390, %v382
    %v455 = vpack.c.b16 %v391, %v383
    %v456 = vpack.c.b16 %v392, %v384
    %v457 = vpack.c.b16 %v393, %v385
    %v458 = vpack.c.b16 %v394, %v386
    %523 = vmatprep.subr.bf16.mxu0 %v396
    %524 = vmatpush1.bf16.msra.mxu0 %v395
    %525 = vmatprep.subr.bf16.mxu0 %v404
    %526 = vmatpush1.bf16.msra.mxu0 %v403
    %527 = vmatprep.subr.bf16.mxu0 %v412
    %528 = vmatpush1.bf16.msra.mxu0 %v411
    %529 = vmatprep.subr.bf16.mxu0 %v420
    %530 = vmatpush1.bf16.msra.mxu0 %v419
    %531 = vmatprep.subr.bf16.mxu0 %v428
    %532 = vmatpush1.bf16.msra.mxu0 %v427
    %533 = vmatprep.subr.bf16.mxu0 %v436
    %534 = vmatpush1.bf16.msra.mxu0 %v435
    %535 = vmatprep.subr.bf16.mxu0 %v444
    %536 = vmatpush1.bf16.msra.mxu0 %v443
    %537 = vmatprep.subr.bf16.mxu0 %v452
    %538 = vmatpush1.bf16.msra.mxu0 %v451
    %539 = vmatprep.subr.bf16.mxu0 0
    %540 = vmatpush1.bf16.msra.mxu0 0
    %541 = vmatprep.subr.bf16.mxu0 0
    %542 = vmatpush1.bf16.msra.mxu0 0
    %543 = vmatprep.subr.bf16.mxu0 0
    %544 = vmatpush1.bf16.msra.mxu0 0
    %545 = vmatprep.subr.bf16.mxu0 0
    %546 = vmatpush1.bf16.msra.mxu0 0
    %547 = vmatprep.subr.bf16.mxu0 0
    %548 = vmatpush1.bf16.msra.mxu0 0
    %549 = vmatprep.subr.bf16.mxu0 0
    %550 = vmatpush1.bf16.msra.mxu0 0
    %551 = vmatprep.subr.bf16.mxu0 0
    %552 = vmatpush1.bf16.msra.mxu0 0
    %553 = vmatprep.subr.bf16.mxu0 0
    %554 = vmatpush1.bf16.msra.mxu0 0
    %555 = vmatprep.mubr.bf16.mxu0 0
    %556 = vmatmul.mubr.bf16.gmra.mrb[0].mxu0 %v96
    %v557 = vpop.f32.mrb[0].mxu0
    %v558 = vadd.f32 %v166, %v557
    %v559 = vpop.f32.mrb[0].mxu0
    %v560 = vadd.f32 %v170, %v559
    %v561 = vpop.f32.mrb[0].mxu0
    %v562 = vpop.f32.mrb[0].mxu0
    %563 = vdwg.mxu0
    %564 = vmatprep.subr.bf16.mxu0 %v398
    %565 = vmatpush1.bf16.msra.mxu0 %v397
    %566 = vmatprep.subr.bf16.mxu0 %v406
    %567 = vmatpush1.bf16.msra.mxu0 %v405
    %568 = vmatprep.subr.bf16.mxu0 %v414
    %569 = vmatpush1.bf16.msra.mxu0 %v413
    %570 = vmatprep.subr.bf16.mxu0 %v422
    %571 = vmatpush1.bf16.msra.mxu0 %v421
    %572 = vmatprep.subr.bf16.mxu0 %v430
    %573 = vmatpush1.bf16.msra.mxu0 %v429
    %574 = vmatprep.subr.bf16.mxu0 %v438
    %575 = vmatpush1.bf16.msra.mxu0 %v437
    %576 = vmatprep.subr.bf16.mxu0 %v446
    %577 = vmatpush1.bf16.msra.mxu0 %v445
    %578 = vmatprep.subr.bf16.mxu0 %v454
    %579 = vmatpush1.bf16.msra.mxu0 %v453
    %580 = vmatprep.subr.bf16.mxu0 0
    %581 = vmatpush1.bf16.msra.mxu0 0
    %582 = vmatprep.subr.bf16.mxu0 0
    %583 = vmatpush1.bf16.msra.mxu0 0
    %584 = vmatprep.subr.bf16.mxu0 0
    %585 = vmatpush1.bf16.msra.mxu0 0
    %586 = vmatprep.subr.bf16.mxu0 0
    %587 = vmatpush1.bf16.msra.mxu0 0
    %588 = vmatprep.subr.bf16.mxu0 0
    %589 = vmatpush1.bf16.msra.mxu0 0
    %590 = vmatprep.subr.bf16.mxu0 0
    %591 = vmatpush1.bf16.msra.mxu0 0
    %592 = vmatprep.subr.bf16.mxu0 0
    %593 = vmatpush1.bf16.msra.mxu0 0
    %594 = vmatprep.subr.bf16.mxu0 0
    %595 = vmatpush1.bf16.msra.mxu0 0
    %596 = vmatprep.mubr.bf16.mxu0 0
    %597 = vmatmul.mubr.bf16.gmra.mrb[0].mxu0 %v96
    %v598 = vpop.f32.mrb[0].mxu0
    %v599 = vadd.f32 %v174, %v598
    %v600 = vpop.f32.mrb[0].mxu0
    %v601 = vadd.f32 %v178, %v600
    %v602 = vpop.f32.mrb[0].mxu0
    %v603 = vpop.f32.mrb[0].mxu0
    %604 = vdwg.mxu0
    %605 = vmatprep.subr.bf16.mxu0 %v400
    %606 = vmatpush1.bf16.msra.mxu0 %v399
    %607 = vmatprep.subr.bf16.mxu0 %v408
    %608 = vmatpush1.bf16.msra.mxu0 %v407
    %609 = vmatprep.subr.bf16.mxu0 %v416
    %610 = vmatpush1.bf16.msra.mxu0 %v415
    %611 = vmatprep.subr.bf16.mxu0 %v424
    %612 = vmatpush1.bf16.msra.mxu0 %v423
    %613 = vmatprep.subr.bf16.mxu0 %v432
    %614 = vmatpush1.bf16.msra.mxu0 %v431
    %615 = vmatprep.subr.bf16.mxu0 %v440
    %616 = vmatpush1.bf16.msra.mxu0 %v439
    %617 = vmatprep.subr.bf16.mxu0 %v448
    %618 = vmatpush1.bf16.msra.mxu0 %v447
    %619 = vmatprep.subr.bf16.mxu0 %v456
    %620 = vmatpush1.bf16.msra.mxu0 %v455
    %621 = vmatprep.subr.bf16.mxu0 0
    %622 = vmatpush1.bf16.msra.mxu0 0
    %623 = vmatprep.subr.bf16.mxu0 0
    %624 = vmatpush1.bf16.msra.mxu0 0
    %625 = vmatprep.subr.bf16.mxu0 0
    %626 = vmatpush1.bf16.msra.mxu0 0
    %627 = vmatprep.subr.bf16.mxu0 0
    %628 = vmatpush1.bf16.msra.mxu0 0
    %629 = vmatprep.subr.bf16.mxu0 0
    %630 = vmatpush1.bf16.msra.mxu0 0
    %631 = vmatprep.subr.bf16.mxu0 0
    %632 = vmatpush1.bf16.msra.mxu0 0
    %633 = vmatprep.subr.bf16.mxu0 0
    %634 = vmatpush1.bf16.msra.mxu0 0
    %635 = vmatprep.subr.bf16.mxu0 0
    %636 = vmatpush1.bf16.msra.mxu0 0
    %637 = vmatprep.mubr.bf16.mxu0 0
    %638 = vmatmul.mubr.bf16.gmra.mrb[0].mxu0 %v96
    %v639 = vpop.f32.mrb[0].mxu0
    %v640 = vadd.f32 %v182, %v639
    %v641 = vpop.f32.mrb[0].mxu0
    %v642 = vadd.f32 %v186, %v641
    %v643 = vpop.f32.mrb[0].mxu0
    %v644 = vpop.f32.mrb[0].mxu0
    %645 = vdwg.mxu0
    %646 = vmatprep.subr.bf16.mxu0 %v402
    %647 = vmatpush1.bf16.msra.mxu0 %v401
    %648 = vmatprep.subr.bf16.mxu0 %v410
    %649 = vmatpush1.bf16.msra.mxu0 %v409
    %650 = vmatprep.subr.bf16.mxu0 %v418
    %651 = vmatpush1.bf16.msra.mxu0 %v417
    %652 = vmatprep.subr.bf16.mxu0 %v426
    %653 = vmatpush1.bf16.msra.mxu0 %v425
    %654 = vmatprep.subr.bf16.mxu0 %v434
    %655 = vmatpush1.bf16.msra.mxu0 %v433
    %656 = vmatprep.subr.bf16.mxu0 %v442
    %657 = vmatpush1.bf16.msra.mxu0 %v441
    %658 = vmatprep.subr.bf16.mxu0 %v450
    %659 = vmatpush1.bf16.msra.mxu0 %v449
    %660 = vmatprep.subr.bf16.mxu0 %v458
    %661 = vmatpush1.bf16.msra.mxu0 %v457
    %662 = vmatprep.subr.bf16.mxu0 0
    %663 = vmatpush1.bf16.msra.mxu0 0
    %664 = vmatprep.subr.bf16.mxu0 0
    %665 = vmatpush1.bf16.msra.mxu0 0
    %666 = vmatprep.subr.bf16.mxu0 0
    %667 = vmatpush1.bf16.msra.mxu0 0
    %668 = vmatprep.subr.bf16.mxu0 0
    %669 = vmatpush1.bf16.msra.mxu0 0
    %670 = vmatprep.subr.bf16.mxu0 0
    %671 = vmatpush1.bf16.msra.mxu0 0
    %672 = vmatprep.subr.bf16.mxu0 0
    %673 = vmatpush1.bf16.msra.mxu0 0
    %674 = vmatprep.subr.bf16.mxu0 0
    %675 = vmatpush1.bf16.msra.mxu0 0
    %676 = vmatprep.subr.bf16.mxu0 0
    %677 = vmatpush1.bf16.msra.mxu0 0
    %678 = vmatprep.mubr.bf16.mxu0 0
    %679 = vmatmul.mubr.bf16.gmra.mrb[0].mxu0 %v96
    %v680 = vpop.f32.mrb[0].mxu0
    %v681 = vadd.f32 %v190, %v680
    %v682 = vpop.f32.mrb[0].mxu0
    %v683 = vadd.f32 %v194, %v682
    %v684 = vpop.f32.mrb[0].mxu0
    %v685 = vpop.f32.mrb[0].mxu0
    %686 = vdwg.mxu0
    %v687 = vmax.f32 %v558, 0.0
    %v688 = vmax.f32 %v560, 0.0
    %v689 = vmax.f32 %v599, 0.0
    %v690 = vmax.f32 %v601, 0.0
    %v691 = vmax.f32 %v640, 0.0
    %v692 = vmax.f32 %v642, 0.0
    %v693 = vmax.f32 %v681, 0.0
    %v694 = vmax.f32 %v683, 0.0
    %v695 = vpack.c.bf16 %v687, %v687
    %v696 = vpack.c.bf16 %v688, %v688
    %v697 = vpack.c.bf16 %v689, %v689
    %v698 = vpack.c.bf16 %v690, %v690
    %v699 = vpack.c.bf16 %v691, %v691
    %v700 = vpack.c.bf16 %v692, %v692
    %v701 = vpack.c.bf16 %v693, %v693
    %v702 = vpack.c.bf16 %v694, %v694
    %v703 = vld [vmem:[#allocation5] sm:$0xff]
    %v704 = vld [vmem:[#allocation5 + $0x8] sm:$0xff]
    %v705 = vld [vmem:[#allocation5 + $0x10] sm:$0xff]
    %v706 = vld [vmem:[#allocation5 + $0x18] sm:$0xff]
    %v707 = vld [vmem:[#allocation5 + $0x20] sm:$0xff]
    %v708 = vld [vmem:[#allocation5 + $0x28] sm:$0xff]
    %v709 = vld [vmem:[#allocation5 + $0x30] sm:$0xff]
    %v710 = vld [vmem:[#allocation5 + $0x38] sm:$0xff]
    %v711 = vld [vmem:[#allocation5 + $0x40] sm:$0xff]
    %v712 = vld [vmem:[#allocation5 + $0x48] sm:$0xff]
    %v713 = vld [vmem:[#allocation5 + $0x50] sm:$0xff]
    %v714 = vld [vmem:[#allocation5 + $0x58] sm:$0xff]
    %v715 = vld [vmem:[#allocation5 + $0x60] sm:$0xff]
    %v716 = vld [vmem:[#allocation5 + $0x68] sm:$0xff]
    %v717 = vld [vmem:[#allocation5 + $0x70] sm:$0xff]
    %v718 = vld [vmem:[#allocation5 + $0x78] sm:$0xff]
    %v719 = vld [vmem:[#allocation5 + $0x80] sm:$0xff]
    %v720 = vld [vmem:[#allocation5 + $0x88] sm:$0xff]
    %v721 = vld [vmem:[#allocation5 + $0x90] sm:$0xff]
    %v722 = vld [vmem:[#allocation5 + $0x98] sm:$0xff]
    %v723 = vld [vmem:[#allocation5 + $0xa0] sm:$0xff]
    %v724 = vld [vmem:[#allocation5 + $0xa8] sm:$0xff]
    %v725 = vld [vmem:[#allocation5 + $0xb0] sm:$0xff]
    %v726 = vld [vmem:[#allocation5 + $0xb8] sm:$0xff]
    %v727 = vld [vmem:[#allocation5 + $0xc0] sm:$0xff]
    %v728 = vld [vmem:[#allocation5 + $0xc8] sm:$0xff]
    %v729 = vld [vmem:[#allocation5 + $0xd0] sm:$0xff]
    %v730 = vld [vmem:[#allocation5 + $0xd8] sm:$0xff]
    %v731 = vld [vmem:[#allocation5 + $0xe0] sm:$0xff]
    %v732 = vld [vmem:[#allocation5 + $0xe8] sm:$0xff]
    %v733 = vld [vmem:[#allocation5 + $0xf0] sm:$0xff]
    %v734 = vld [vmem:[#allocation5 + $0xf8] sm:$0xff]
    %v735 = vld [vmem:[#allocation5 + $0x100] sm:$0xff]
    %v736 = vld [vmem:[#allocation5 + $0x108] sm:$0xff]
    %v737 = vld [vmem:[#allocation5 + $0x110] sm:$0xff]
    %v738 = vld [vmem:[#allocation5 + $0x118] sm:$0xff]
    %v739 = vld [vmem:[#allocation5 + $0x120] sm:$0xff]
    %v740 = vld [vmem:[#allocation5 + $0x128] sm:$0xff]
    %v741 = vld [vmem:[#allocation5 + $0x130] sm:$0xff]
    %v742 = vld [vmem:[#allocation5 + $0x138] sm:$0xff]
    %v743 = vld [vmem:[#allocation5 + $0x140] sm:$0xff]
    %v744 = vld [vmem:[#allocation5 + $0x148] sm:$0xff]
    %v745 = vld [vmem:[#allocation5 + $0x150] sm:$0xff]
    %v746 = vld [vmem:[#allocation5 + $0x158] sm:$0xff]
    %v747 = vld [vmem:[#allocation5 + $0x160] sm:$0xff]
    %v748 = vld [vmem:[#allocation5 + $0x168] sm:$0xff]
    %v749 = vld [vmem:[#allocation5 + $0x170] sm:$0xff]
    %v750 = vld [vmem:[#allocation5 + $0x178] sm:$0xff]
    %v751 = vld [vmem:[#allocation5 + $0x180] sm:$0xff]
    %v752 = vld [vmem:[#allocation5 + $0x188] sm:$0xff]
    %v753 = vld [vmem:[#allocation5 + $0x190] sm:$0xff]
    %v754 = vld [vmem:[#allocation5 + $0x198] sm:$0xff]
    %v755 = vld [vmem:[#allocation5 + $0x1a0] sm:$0xff]
    %v756 = vld [vmem:[#allocation5 + $0x1a8] sm:$0xff]
    %v757 = vld [vmem:[#allocation5 + $0x1b0] sm:$0xff]
    %v758 = vld [vmem:[#allocation5 + $0x1b8] sm:$0xff]
    %v759 = vld [vmem:[#allocation5 + $0x1c0] sm:$0xff]
    %v760 = vld [vmem:[#allocation5 + $0x1c8] sm:$0xff]
    %v761 = vld [vmem:[#allocation5 + $0x1d0] sm:$0xff]
    %v762 = vld [vmem:[#allocation5 + $0x1d8] sm:$0xff]
    %v763 = vld [vmem:[#allocation5 + $0x1e0] sm:$0xff]
    %v764 = vld [vmem:[#allocation5 + $0x1e8] sm:$0xff]
    %v765 = vld [vmem:[#allocation5 + $0x1f0] sm:$0xff]
    %v766 = vld [vmem:[#allocation5 + $0x1f8] sm:$0xff]
    %v767 = vld [vmem:[#allocation5 + $0x200] sm:$0xff]
    %v768 = vld [vmem:[#allocation5 + $0x208] sm:$0xff]
    %v769 = vld [vmem:[#allocation5 + $0x210] sm:$0xff]
    %v770 = vld [vmem:[#allocation5 + $0x218] sm:$0xff]
    %v771 = vld [vmem:[#allocation5 + $0x220] sm:$0xff]
    %v772 = vld [vmem:[#allocation5 + $0x228] sm:$0xff]
    %v773 = vld [vmem:[#allocation5 + $0x230] sm:$0xff]
    %v774 = vld [vmem:[#allocation5 + $0x238] sm:$0xff]
    %v775 = vld [vmem:[#allocation5 + $0x240] sm:$0xff]
    %v776 = vld [vmem:[#allocation5 + $0x248] sm:$0xff]
    %v777 = vld [vmem:[#allocation5 + $0x250] sm:$0xff]
    %v778 = vld [vmem:[#allocation5 + $0x258] sm:$0xff]
    %v779 = vld [vmem:[#allocation5 + $0x260] sm:$0xff]
    %v780 = vld [vmem:[#allocation5 + $0x268] sm:$0xff]
    %v781 = vld [vmem:[#allocation5 + $0x270] sm:$0xff]
    %v782 = vld [vmem:[#allocation5 + $0x278] sm:$0xff]
    %v783 = vld [vmem:[#allocation5 + $0x280] sm:$0xff]
    %v784 = vld [vmem:[#allocation5 + $0x288] sm:$0xff]
    %v785 = vld [vmem:[#allocation5 + $0x290] sm:$0xff]
    %v786 = vld [vmem:[#allocation5 + $0x298] sm:$0xff]
    %v787 = vld [vmem:[#allocation5 + $0x2a0] sm:$0xff]
    %v788 = vld [vmem:[#allocation5 + $0x2a8] sm:$0xff]
    %v789 = vld [vmem:[#allocation5 + $0x2b0] sm:$0xff]
    %v790 = vld [vmem:[#allocation5 + $0x2b8] sm:$0xff]
    %v791 = vld [vmem:[#allocation5 + $0x2c0] sm:$0xff]
    %v792 = vld [vmem:[#allocation5 + $0x2c8] sm:$0xff]
    %v793 = vld [vmem:[#allocation5 + $0x2d0] sm:$0xff]
    %v794 = vld [vmem:[#allocation5 + $0x2d8] sm:$0xff]
    %v795 = vld [vmem:[#allocation5 + $0x2e0] sm:$0xff]
    %v796 = vld [vmem:[#allocation5 + $0x2e8] sm:$0xff]
    %v797 = vld [vmem:[#allocation5 + $0x2f0] sm:$0xff]
    %v798 = vld [vmem:[#allocation5 + $0x2f8] sm:$0xff]
    %v799 = vld [vmem:[#allocation5 + $0x300] sm:$0xff]
    %v800 = vld [vmem:[#allocation5 + $0x308] sm:$0xff]
    %v801 = vld [vmem:[#allocation5 + $0x310] sm:$0xff]
    %v802 = vld [vmem:[#allocation5 + $0x318] sm:$0xff]
    %v803 = vld [vmem:[#allocation5 + $0x320] sm:$0xff]
    %v804 = vld [vmem:[#allocation5 + $0x328] sm:$0xff]
    %v805 = vld [vmem:[#allocation5 + $0x330] sm:$0xff]
    %v806 = vld [vmem:[#allocation5 + $0x338] sm:$0xff]
    %v807 = vld [vmem:[#allocation5 + $0x340] sm:$0xff]
    %v808 = vld [vmem:[#allocation5 + $0x348] sm:$0xff]
    %v809 = vld [vmem:[#allocation5 + $0x350] sm:$0xff]
    %v810 = vld [vmem:[#allocation5 + $0x358] sm:$0xff]
    %v811 = vld [vmem:[#allocation5 + $0x360] sm:$0xff]
    %v812 = vld [vmem:[#allocation5 + $0x368] sm:$0xff]
    %v813 = vld [vmem:[#allocation5 + $0x370] sm:$0xff]
    %v814 = vld [vmem:[#allocation5 + $0x378] sm:$0xff]
    %v815 = vld [vmem:[#allocation5 + $0x380] sm:$0xff]
    %v816 = vld [vmem:[#allocation5 + $0x388] sm:$0xff]
    %v817 = vld [vmem:[#allocation5 + $0x390] sm:$0xff]
    %v818 = vld [vmem:[#allocation5 + $0x398] sm:$0xff]
    %v819 = vld [vmem:[#allocation5 + $0x3a0] sm:$0xff]
    %v820 = vld [vmem:[#allocation5 + $0x3a8] sm:$0xff]
    %v821 = vld [vmem:[#allocation5 + $0x3b0] sm:$0xff]
    %v822 = vld [vmem:[#allocation5 + $0x3b8] sm:$0xff]
    %v823 = vld [vmem:[#allocation5 + $0x3c0] sm:$0xff]
    %v824 = vld [vmem:[#allocation5 + $0x3c8] sm:$0xff]
    %v825 = vld [vmem:[#allocation5 + $0x3d0] sm:$0xff]
    %v826 = vld [vmem:[#allocation5 + $0x3d8] sm:$0xff]
    %v827 = vld [vmem:[#allocation5 + $0x3e0] sm:$0xff]
    %v828 = vld [vmem:[#allocation5 + $0x3e8] sm:$0xff]
    %v829 = vld [vmem:[#allocation5 + $0x3f0] sm:$0xff]
    %v830 = vld [vmem:[#allocation5 + $0x3f8] sm:$0xff]
    %v831 = vld [vmem:[#allocation5 + $0x400] sm:$0xff]
    %v832 = vld [vmem:[#allocation5 + $0x408] sm:$0xff]
    %v833 = vld [vmem:[#allocation5 + $0x410] sm:$0xff]
    %v834 = vld [vmem:[#allocation5 + $0x418] sm:$0xff]
    %v835 = vld [vmem:[#allocation5 + $0x420] sm:$0xff]
    %v836 = vld [vmem:[#allocation5 + $0x428] sm:$0xff]
    %v837 = vld [vmem:[#allocation5 + $0x430] sm:$0xff]
    %v838 = vld [vmem:[#allocation5 + $0x438] sm:$0xff]
    %v839 = vld [vmem:[#allocation5 + $0x440] sm:$0xff]
    %v840 = vld [vmem:[#allocation5 + $0x448] sm:$0xff]
    %v841 = vld [vmem:[#allocation5 + $0x450] sm:$0xff]
    %v842 = vld [vmem:[#allocation5 + $0x458] sm:$0xff]
    %v843 = vld [vmem:[#allocation5 + $0x460] sm:$0xff]
    %v844 = vld [vmem:[#allocation5 + $0x468] sm:$0xff]
    %v845 = vld [vmem:[#allocation5 + $0x470] sm:$0xff]
    %v846 = vld [vmem:[#allocation5 + $0x478] sm:$0xff]
    %v847 = vld [vmem:[#allocation5 + $0x480] sm:$0xff]
    %v848 = vld [vmem:[#allocation5 + $0x488] sm:$0xff]
    %v849 = vld [vmem:[#allocation5 + $0x490] sm:$0xff]
    %v850 = vld [vmem:[#allocation5 + $0x498] sm:$0xff]
    %v851 = vld [vmem:[#allocation5 + $0x4a0] sm:$0xff]
    %v852 = vld [vmem:[#allocation5 + $0x4a8] sm:$0xff]
    %v853 = vld [vmem:[#allocation5 + $0x4b0] sm:$0xff]
    %v854 = vld [vmem:[#allocation5 + $0x4b8] sm:$0xff]
    %v855 = vld [vmem:[#allocation5 + $0x4c0] sm:$0xff]
    %v856 = vld [vmem:[#allocation5 + $0x4c8] sm:$0xff]
    %v857 = vld [vmem:[#allocation5 + $0x4d0] sm:$0xff]
    %v858 = vld [vmem:[#allocation5 + $0x4d8] sm:$0xff]
    %v859 = vld [vmem:[#allocation5 + $0x4e0] sm:$0xff]
    %v860 = vld [vmem:[#allocation5 + $0x4e8] sm:$0xff]
    %v861 = vld [vmem:[#allocation5 + $0x4f0] sm:$0xff]
    %v862 = vld [vmem:[#allocation5 + $0x4f8] sm:$0xff]
    %v863 = vld [vmem:[#allocation5 + $0x500] sm:$0xff]
    %v864 = vld [vmem:[#allocation5 + $0x508] sm:$0xff]
    %v865 = vld [vmem:[#allocation5 + $0x510] sm:$0xff]
    %v866 = vld [vmem:[#allocation5 + $0x518] sm:$0xff]
    %v867 = vld [vmem:[#allocation5 + $0x520] sm:$0xff]
    %v868 = vld [vmem:[#allocation5 + $0x528] sm:$0xff]
    %v869 = vld [vmem:[#allocation5 + $0x530] sm:$0xff]
    %v870 = vld [vmem:[#allocation5 + $0x538] sm:$0xff]
    %v871 = vld [vmem:[#allocation5 + $0x540] sm:$0xff]
    %v872 = vld [vmem:[#allocation5 + $0x548] sm:$0xff]
    %v873 = vld [vmem:[#allocation5 + $0x550] sm:$0xff]
    %v874 = vld [vmem:[#allocation5 + $0x558] sm:$0xff]
    %v875 = vld [vmem:[#allocation5 + $0x560] sm:$0xff]
    %v876 = vld [vmem:[#allocation5 + $0x568] sm:$0xff]
    %v877 = vld [vmem:[#allocation5 + $0x570] sm:$0xff]
    %v878 = vld [vmem:[#allocation5 + $0x578] sm:$0xff]
    %v879 = vld [vmem:[#allocation5 + $0x580] sm:$0xff]
    %v880 = vld [vmem:[#allocation5 + $0x588] sm:$0xff]
    %v881 = vld [vmem:[#allocation5 + $0x590] sm:$0xff]
    %v882 = vld [vmem:[#allocation5 + $0x598] sm:$0xff]
    %v883 = vld [vmem:[#allocation5 + $0x5a0] sm:$0xff]
    %v884 = vld [vmem:[#allocation5 + $0x5a8] sm:$0xff]
    %v885 = vld [vmem:[#allocation5 + $0x5b0] sm:$0xff]
    %v886 = vld [vmem:[#allocation5 + $0x5b8] sm:$0xff]
    %v887 = vld [vmem:[#allocation5 + $0x5c0] sm:$0xff]
    %v888 = vld [vmem:[#allocation5 + $0x5c8] sm:$0xff]
    %v889 = vld [vmem:[#allocation5 + $0x5d0] sm:$0xff]
    %v890 = vld [vmem:[#allocation5 + $0x5d8] sm:$0xff]
    %v891 = vld [vmem:[#allocation5 + $0x5e0] sm:$0xff]
    %v892 = vld [vmem:[#allocation5 + $0x5e8] sm:$0xff]
    %v893 = vld [vmem:[#allocation5 + $0x5f0] sm:$0xff]
    %v894 = vld [vmem:[#allocation5 + $0x5f8] sm:$0xff]
    %v895 = vld [vmem:[#allocation5 + $0x600] sm:$0xff]
    %v896 = vld [vmem:[#allocation5 + $0x608] sm:$0xff]
    %v897 = vld [vmem:[#allocation5 + $0x610] sm:$0xff]
    %v898 = vld [vmem:[#allocation5 + $0x618] sm:$0xff]
    %v899 = vld [vmem:[#allocation5 + $0x620] sm:$0xff]
    %v900 = vld [vmem:[#allocation5 + $0x628] sm:$0xff]
    %v901 = vld [vmem:[#allocation5 + $0x630] sm:$0xff]
    %v902 = vld [vmem:[#allocation5 + $0x638] sm:$0xff]
    %v903 = vld [vmem:[#allocation5 + $0x640] sm:$0xff]
    %v904 = vld [vmem:[#allocation5 + $0x648] sm:$0xff]
    %v905 = vld [vmem:[#allocation5 + $0x650] sm:$0xff]
    %v906 = vld [vmem:[#allocation5 + $0x658] sm:$0xff]
    %v907 = vld [vmem:[#allocation5 + $0x660] sm:$0xff]
    %v908 = vld [vmem:[#allocation5 + $0x668] sm:$0xff]
    %v909 = vld [vmem:[#allocation5 + $0x670] sm:$0xff]
    %v910 = vld [vmem:[#allocation5 + $0x678] sm:$0xff]
    %v911 = vld [vmem:[#allocation5 + $0x680] sm:$0xff]
    %v912 = vld [vmem:[#allocation5 + $0x688] sm:$0xff]
    %v913 = vld [vmem:[#allocation5 + $0x690] sm:$0xff]
    %v914 = vld [vmem:[#allocation5 + $0x698] sm:$0xff]
    %v915 = vld [vmem:[#allocation5 + $0x6a0] sm:$0xff]
    %v916 = vld [vmem:[#allocation5 + $0x6a8] sm:$0xff]
    %v917 = vld [vmem:[#allocation5 + $0x6b0] sm:$0xff]
    %v918 = vld [vmem:[#allocation5 + $0x6b8] sm:$0xff]
    %v919 = vld [vmem:[#allocation5 + $0x6c0] sm:$0xff]
    %v920 = vld [vmem:[#allocation5 + $0x6c8] sm:$0xff]
    %v921 = vld [vmem:[#allocation5 + $0x6d0] sm:$0xff]
    %v922 = vld [vmem:[#allocation5 + $0x6d8] sm:$0xff]
    %v923 = vld [vmem:[#allocation5 + $0x6e0] sm:$0xff]
    %v924 = vld [vmem:[#allocation5 + $0x6e8] sm:$0xff]
    %v925 = vld [vmem:[#allocation5 + $0x6f0] sm:$0xff]
    %v926 = vld [vmem:[#allocation5 + $0x6f8] sm:$0xff]
    %v927 = vld [vmem:[#allocation5 + $0x700] sm:$0xff]
    %v928 = vld [vmem:[#allocation5 + $0x708] sm:$0xff]
    %v929 = vld [vmem:[#allocation5 + $0x710] sm:$0xff]
    %v930 = vld [vmem:[#allocation5 + $0x718] sm:$0xff]
    %v931 = vld [vmem:[#allocation5 + $0x720] sm:$0xff]
    %v932 = vld [vmem:[#allocation5 + $0x728] sm:$0xff]
    %v933 = vld [vmem:[#allocation5 + $0x730] sm:$0xff]
    %v934 = vld [vmem:[#allocation5 + $0x738] sm:$0xff]
    %v935 = vld [vmem:[#allocation5 + $0x740] sm:$0xff]
    %v936 = vld [vmem:[#allocation5 + $0x748] sm:$0xff]
    %v937 = vld [vmem:[#allocation5 + $0x750] sm:$0xff]
    %v938 = vld [vmem:[#allocation5 + $0x758] sm:$0xff]
    %v939 = vld [vmem:[#allocation5 + $0x760] sm:$0xff]
    %v940 = vld [vmem:[#allocation5 + $0x768] sm:$0xff]
    %v941 = vld [vmem:[#allocation5 + $0x770] sm:$0xff]
    %v942 = vld [vmem:[#allocation5 + $0x778] sm:$0xff]
    %v943 = vld [vmem:[#allocation5 + $0x780] sm:$0xff]
    %v944 = vld [vmem:[#allocation5 + $0x788] sm:$0xff]
    %v945 = vld [vmem:[#allocation5 + $0x790] sm:$0xff]
    %v946 = vld [vmem:[#allocation5 + $0x798] sm:$0xff]
    %v947 = vld [vmem:[#allocation5 + $0x7a0] sm:$0xff]
    %v948 = vld [vmem:[#allocation5 + $0x7a8] sm:$0xff]
    %v949 = vld [vmem:[#allocation5 + $0x7b0] sm:$0xff]
    %v950 = vld [vmem:[#allocation5 + $0x7b8] sm:$0xff]
    %v951 = vld [vmem:[#allocation5 + $0x7c0] sm:$0xff]
    %v952 = vld [vmem:[#allocation5 + $0x7c8] sm:$0xff]
    %v953 = vld [vmem:[#allocation5 + $0x7d0] sm:$0xff]
    %v954 = vld [vmem:[#allocation5 + $0x7d8] sm:$0xff]
    %v955 = vld [vmem:[#allocation5 + $0x7e0] sm:$0xff]
    %v956 = vld [vmem:[#allocation5 + $0x7e8] sm:$0xff]
    %v957 = vld [vmem:[#allocation5 + $0x7f0] sm:$0xff]
    %v958 = vld [vmem:[#allocation5 + $0x7f8] sm:$0xff]
    %v959 = vld [vmem:[%s4] sm:$0xf]
    %v961 = vlaneseq
    %v962 = vshrl.u32 %v961, 7
    %v963 = vsub.s32 0, %v962
    %v964 = vrot.slane %v959, %v963
    %v965 = vlaneseq
    %v966 = vshrl.u32 %v965, 7
    %v967 = vsub.s32 1, %v966
    %v968 = vrot.slane %v959, %v967
    %v969 = vlaneseq
    %v970 = vshrl.u32 %v969, 7
    %v971 = vsub.s32 2, %v970
    %v972 = vrot.slane %v959, %v971
    %v973 = vlaneseq
    %v974 = vshrl.u32 %v973, 7
    %v975 = vsub.s32 3, %v974
    %v976 = vrot.slane %v959, %v975
    %v1237 = vunpack.c.l.b16 %v703
    %v1238 = vunpack.c.h.b16 %v703
    %v1239 = vunpack.c.l.b16 %v704
    %v1240 = vunpack.c.h.b16 %v704
    %v1241 = vunpack.c.l.b16 %v705
    %v1242 = vunpack.c.h.b16 %v705
    %v1243 = vunpack.c.l.b16 %v706
    %v1244 = vunpack.c.h.b16 %v706
    %v1245 = vunpack.c.l.b16 %v707
    %v1246 = vunpack.c.h.b16 %v707
    %v1247 = vunpack.c.l.b16 %v708
    %v1248 = vunpack.c.h.b16 %v708
    %v1249 = vunpack.c.l.b16 %v709
    %v1250 = vunpack.c.h.b16 %v709
    %v1251 = vunpack.c.l.b16 %v710
    %v1252 = vunpack.c.h.b16 %v710
    %v1253 = vunpack.c.l.b16 %v711
    %v1254 = vunpack.c.h.b16 %v711
    %v1255 = vunpack.c.l.b16 %v712
    %v1256 = vunpack.c.h.b16 %v712
    %v1257 = vunpack.c.l.b16 %v713
    %v1258 = vunpack.c.h.b16 %v713
    %v1259 = vunpack.c.l.b16 %v714
    %v1260 = vunpack.c.h.b16 %v714
    %v1261 = vunpack.c.l.b16 %v715
    %v1262 = vunpack.c.h.b16 %v715
    %v1263 = vunpack.c.l.b16 %v716
    %v1264 = vunpack.c.h.b16 %v716
    %v1265 = vunpack.c.l.b16 %v717
    %v1266 = vunpack.c.h.b16 %v717
    %v1267 = vunpack.c.l.b16 %v718
    %v1268 = vunpack.c.h.b16 %v718
    %v1269 = vunpack.c.l.b16 %v719
    %v1270 = vunpack.c.h.b16 %v719
    %v1271 = vunpack.c.l.b16 %v720
    %v1272 = vunpack.c.h.b16 %v720
    %v1273 = vunpack.c.l.b16 %v721
    %v1274 = vunpack.c.h.b16 %v721
    %v1275 = vunpack.c.l.b16 %v722
    %v1276 = vunpack.c.h.b16 %v722
    %v1277 = vunpack.c.l.b16 %v723
    %v1278 = vunpack.c.h.b16 %v723
    %v1279 = vunpack.c.l.b16 %v724
    %v1280 = vunpack.c.h.b16 %v724
    %v1281 = vunpack.c.l.b16 %v725
    %v1282 = vunpack.c.h.b16 %v725
    %v1283 = vunpack.c.l.b16 %v726
    %v1284 = vunpack.c.h.b16 %v726
    %v1285 = vunpack.c.l.b16 %v727
    %v1286 = vunpack.c.h.b16 %v727
    %v1287 = vunpack.c.l.b16 %v728
    %v1288 = vunpack.c.h.b16 %v728
    %v1289 = vunpack.c.l.b16 %v729
    %v1290 = vunpack.c.h.b16 %v729
    %v1291 = vunpack.c.l.b16 %v730
    %v1292 = vunpack.c.h.b16 %v730
    %v1293 = vunpack.c.l.b16 %v731
    %v1294 = vunpack.c.h.b16 %v731
    %v1295 = vunpack.c.l.b16 %v732
    %v1296 = vunpack.c.h.b16 %v732
    %v1297 = vunpack.c.l.b16 %v733
    %v1298 = vunpack.c.h.b16 %v733
    %v1299 = vunpack.c.l.b16 %v734
    %v1300 = vunpack.c.h.b16 %v734
    %v1301 = vunpack.c.l.b16 %v735
    %v1302 = vunpack.c.h.b16 %v735
    %v1303 = vunpack.c.l.b16 %v736
    %v1304 = vunpack.c.h.b16 %v736
    %v1305 = vunpack.c.l.b16 %v737
    %v1306 = vunpack.c.h.b16 %v737
    %v1307 = vunpack.c.l.b16 %v738
    %v1308 = vunpack.c.h.b16 %v738
    %v1309 = vunpack.c.l.b16 %v739
    %v1310 = vunpack.c.h.b16 %v739
    %v1311 = vunpack.c.l.b16 %v740
    %v1312 = vunpack.c.h.b16 %v740
    %v1313 = vunpack.c.l.b16 %v741
    %v1314 = vunpack.c.h.b16 %v741
    %v1315 = vunpack.c.l.b16 %v742
    %v1316 = vunpack.c.h.b16 %v742
    %v1317 = vunpack.c.l.b16 %v743
    %v1318 = vunpack.c.h.b16 %v743
    %v1319 = vunpack.c.l.b16 %v744
    %v1320 = vunpack.c.h.b16 %v744
    %v1321 = vunpack.c.l.b16 %v745
    %v1322 = vunpack.c.h.b16 %v745
    %v1323 = vunpack.c.l.b16 %v746
    %v1324 = vunpack.c.h.b16 %v746
    %v1325 = vunpack.c.l.b16 %v747
    %v1326 = vunpack.c.h.b16 %v747
    %v1327 = vunpack.c.l.b16 %v748
    %v1328 = vunpack.c.h.b16 %v748
    %v1329 = vunpack.c.l.b16 %v749
    %v1330 = vunpack.c.h.b16 %v749
    %v1331 = vunpack.c.l.b16 %v750
    %v1332 = vunpack.c.h.b16 %v750
    %v1333 = vunpack.c.l.b16 %v751
    %v1334 = vunpack.c.h.b16 %v751
    %v1335 = vunpack.c.l.b16 %v752
    %v1336 = vunpack.c.h.b16 %v752
    %v1337 = vunpack.c.l.b16 %v753
    %v1338 = vunpack.c.h.b16 %v753
    %v1339 = vunpack.c.l.b16 %v754
    %v1340 = vunpack.c.h.b16 %v754
    %v1341 = vunpack.c.l.b16 %v755
    %v1342 = vunpack.c.h.b16 %v755
    %v1343 = vunpack.c.l.b16 %v756
    %v1344 = vunpack.c.h.b16 %v756
    %v1345 = vunpack.c.l.b16 %v757
    %v1346 = vunpack.c.h.b16 %v757
    %v1347 = vunpack.c.l.b16 %v758
    %v1348 = vunpack.c.h.b16 %v758
    %v1349 = vunpack.c.l.b16 %v759
    %v1350 = vunpack.c.h.b16 %v759
    %v1351 = vunpack.c.l.b16 %v760
    %v1352 = vunpack.c.h.b16 %v760
    %v1353 = vunpack.c.l.b16 %v761
    %v1354 = vunpack.c.h.b16 %v761
    %v1355 = vunpack.c.l.b16 %v762
    %v1356 = vunpack.c.h.b16 %v762
    %v1357 = vunpack.c.l.b16 %v763
    %v1358 = vunpack.c.h.b16 %v763
    %v1359 = vunpack.c.l.b16 %v764
    %v1360 = vunpack.c.h.b16 %v764
    %v1361 = vunpack.c.l.b16 %v765
    %v1362 = vunpack.c.h.b16 %v765
    %v1363 = vunpack.c.l.b16 %v766
    %v1364 = vunpack.c.h.b16 %v766
    %v1365 = vunpack.c.l.b16 %v767
    %v1366 = vunpack.c.h.b16 %v767
    %v1367 = vunpack.c.l.b16 %v768
    %v1368 = vunpack.c.h.b16 %v768
    %v1369 = vunpack.c.l.b16 %v769
    %v1370 = vunpack.c.h.b16 %v769
    %v1371 = vunpack.c.l.b16 %v770
    %v1372 = vunpack.c.h.b16 %v770
    %v1373 = vunpack.c.l.b16 %v771
    %v1374 = vunpack.c.h.b16 %v771
    %v1375 = vunpack.c.l.b16 %v772
    %v1376 = vunpack.c.h.b16 %v772
    %v1377 = vunpack.c.l.b16 %v773
    %v1378 = vunpack.c.h.b16 %v773
    %v1379 = vunpack.c.l.b16 %v774
    %v1380 = vunpack.c.h.b16 %v774
    %v1381 = vunpack.c.l.b16 %v775
    %v1382 = vunpack.c.h.b16 %v775
    %v1383 = vunpack.c.l.b16 %v776
    %v1384 = vunpack.c.h.b16 %v776
    %v1385 = vunpack.c.l.b16 %v777
    %v1386 = vunpack.c.h.b16 %v777
    %v1387 = vunpack.c.l.b16 %v778
    %v1388 = vunpack.c.h.b16 %v778
    %v1389 = vunpack.c.l.b16 %v779
    %v1390 = vunpack.c.h.b16 %v779
    %v1391 = vunpack.c.l.b16 %v780
    %v1392 = vunpack.c.h.b16 %v780
    %v1393 = vunpack.c.l.b16 %v781
    %v1394 = vunpack.c.h.b16 %v781
    %v1395 = vunpack.c.l.b16 %v782
    %v1396 = vunpack.c.h.b16 %v782
    %v1397 = vunpack.c.l.b16 %v783
    %v1398 = vunpack.c.h.b16 %v783
    %v1399 = vunpack.c.l.b16 %v784
    %v1400 = vunpack.c.h.b16 %v784
    %v1401 = vunpack.c.l.b16 %v785
    %v1402 = vunpack.c.h.b16 %v785
    %v1403 = vunpack.c.l.b16 %v786
    %v1404 = vunpack.c.h.b16 %v786
    %v1405 = vunpack.c.l.b16 %v787
    %v1406 = vunpack.c.h.b16 %v787
    %v1407 = vunpack.c.l.b16 %v788
    %v1408 = vunpack.c.h.b16 %v788
    %v1409 = vunpack.c.l.b16 %v789
    %v1410 = vunpack.c.h.b16 %v789
    %v1411 = vunpack.c.l.b16 %v790
    %v1412 = vunpack.c.h.b16 %v790
    %v1413 = vunpack.c.l.b16 %v791
    %v1414 = vunpack.c.h.b16 %v791
    %v1415 = vunpack.c.l.b16 %v792
    %v1416 = vunpack.c.h.b16 %v792
    %v1417 = vunpack.c.l.b16 %v793
    %v1418 = vunpack.c.h.b16 %v793
    %v1419 = vunpack.c.l.b16 %v794
    %v1420 = vunpack.c.h.b16 %v794
    %v1421 = vunpack.c.l.b16 %v795
    %v1422 = vunpack.c.h.b16 %v795
    %v1423 = vunpack.c.l.b16 %v796
    %v1424 = vunpack.c.h.b16 %v796
    %v1425 = vunpack.c.l.b16 %v797
    %v1426 = vunpack.c.h.b16 %v797
    %v1427 = vunpack.c.l.b16 %v798
    %v1428 = vunpack.c.h.b16 %v798
    %v1429 = vunpack.c.l.b16 %v799
    %v1430 = vunpack.c.h.b16 %v799
    %v1431 = vunpack.c.l.b16 %v800
    %v1432 = vunpack.c.h.b16 %v800
    %v1433 = vunpack.c.l.b16 %v801
    %v1434 = vunpack.c.h.b16 %v801
    %v1435 = vunpack.c.l.b16 %v802
    %v1436 = vunpack.c.h.b16 %v802
    %v1437 = vunpack.c.l.b16 %v803
    %v1438 = vunpack.c.h.b16 %v803
    %v1439 = vunpack.c.l.b16 %v804
    %v1440 = vunpack.c.h.b16 %v804
    %v1441 = vunpack.c.l.b16 %v805
    %v1442 = vunpack.c.h.b16 %v805
    %v1443 = vunpack.c.l.b16 %v806
    %v1444 = vunpack.c.h.b16 %v806
    %v1445 = vunpack.c.l.b16 %v807
    %v1446 = vunpack.c.h.b16 %v807
    %v1447 = vunpack.c.l.b16 %v808
    %v1448 = vunpack.c.h.b16 %v808
    %v1449 = vunpack.c.l.b16 %v809
    %v1450 = vunpack.c.h.b16 %v809
    %v1451 = vunpack.c.l.b16 %v810
    %v1452 = vunpack.c.h.b16 %v810
    %v1453 = vunpack.c.l.b16 %v811
    %v1454 = vunpack.c.h.b16 %v811
    %v1455 = vunpack.c.l.b16 %v812
    %v1456 = vunpack.c.h.b16 %v812
    %v1457 = vunpack.c.l.b16 %v813
    %v1458 = vunpack.c.h.b16 %v813
    %v1459 = vunpack.c.l.b16 %v814
    %v1460 = vunpack.c.h.b16 %v814
    %v1461 = vunpack.c.l.b16 %v815
    %v1462 = vunpack.c.h.b16 %v815
    %v1463 = vunpack.c.l.b16 %v816
    %v1464 = vunpack.c.h.b16 %v816
    %v1465 = vunpack.c.l.b16 %v817
    %v1466 = vunpack.c.h.b16 %v817
    %v1467 = vunpack.c.l.b16 %v818
    %v1468 = vunpack.c.h.b16 %v818
    %v1469 = vunpack.c.l.b16 %v819
    %v1470 = vunpack.c.h.b16 %v819
    %v1471 = vunpack.c.l.b16 %v820
    %v1472 = vunpack.c.h.b16 %v820
    %v1473 = vunpack.c.l.b16 %v821
    %v1474 = vunpack.c.h.b16 %v821
    %v1475 = vunpack.c.l.b16 %v822
    %v1476 = vunpack.c.h.b16 %v822
    %v1477 = vunpack.c.l.b16 %v823
    %v1478 = vunpack.c.h.b16 %v823
    %v1479 = vunpack.c.l.b16 %v824
    %v1480 = vunpack.c.h.b16 %v824
    %v1481 = vunpack.c.l.b16 %v825
    %v1482 = vunpack.c.h.b16 %v825
    %v1483 = vunpack.c.l.b16 %v826
    %v1484 = vunpack.c.h.b16 %v826
    %v1485 = vunpack.c.l.b16 %v827
    %v1486 = vunpack.c.h.b16 %v827
    %v1487 = vunpack.c.l.b16 %v828
    %v1488 = vunpack.c.h.b16 %v828
    %v1489 = vunpack.c.l.b16 %v829
    %v1490 = vunpack.c.h.b16 %v829
    %v1491 = vunpack.c.l.b16 %v830
    %v1492 = vunpack.c.h.b16 %v830
    %v1493 = vunpack.c.l.b16 %v831
    %v1494 = vunpack.c.h.b16 %v831
    %v1495 = vunpack.c.l.b16 %v832
    %v1496 = vunpack.c.h.b16 %v832
    %v1497 = vunpack.c.l.b16 %v833
    %v1498 = vunpack.c.h.b16 %v833
    %v1499 = vunpack.c.l.b16 %v834
    %v1500 = vunpack.c.h.b16 %v834
    %v1501 = vunpack.c.l.b16 %v835
    %v1502 = vunpack.c.h.b16 %v835
    %v1503 = vunpack.c.l.b16 %v836
    %v1504 = vunpack.c.h.b16 %v836
    %v1505 = vunpack.c.l.b16 %v837
    %v1506 = vunpack.c.h.b16 %v837
    %v1507 = vunpack.c.l.b16 %v838
    %v1508 = vunpack.c.h.b16 %v838
    %v1509 = vunpack.c.l.b16 %v839
    %v1510 = vunpack.c.h.b16 %v839
    %v1511 = vunpack.c.l.b16 %v840
    %v1512 = vunpack.c.h.b16 %v840
    %v1513 = vunpack.c.l.b16 %v841
    %v1514 = vunpack.c.h.b16 %v841
    %v1515 = vunpack.c.l.b16 %v842
    %v1516 = vunpack.c.h.b16 %v842
    %v1517 = vunpack.c.l.b16 %v843
    %v1518 = vunpack.c.h.b16 %v843
    %v1519 = vunpack.c.l.b16 %v844
    %v1520 = vunpack.c.h.b16 %v844
    %v1521 = vunpack.c.l.b16 %v845
    %v1522 = vunpack.c.h.b16 %v845
    %v1523 = vunpack.c.l.b16 %v846
    %v1524 = vunpack.c.h.b16 %v846
    %v1525 = vunpack.c.l.b16 %v847
    %v1526 = vunpack.c.h.b16 %v847
    %v1527 = vunpack.c.l.b16 %v848
    %v1528 = vunpack.c.h.b16 %v848
    %v1529 = vunpack.c.l.b16 %v849
    %v1530 = vunpack.c.h.b16 %v849
    %v1531 = vunpack.c.l.b16 %v850
    %v1532 = vunpack.c.h.b16 %v850
    %v1533 = vunpack.c.l.b16 %v851
    %v1534 = vunpack.c.h.b16 %v851
    %v1535 = vunpack.c.l.b16 %v852
    %v1536 = vunpack.c.h.b16 %v852
    %v1537 = vunpack.c.l.b16 %v853
    %v1538 = vunpack.c.h.b16 %v853
    %v1539 = vunpack.c.l.b16 %v854
    %v1540 = vunpack.c.h.b16 %v854
    %v1541 = vunpack.c.l.b16 %v855
    %v1542 = vunpack.c.h.b16 %v855
    %v1543 = vunpack.c.l.b16 %v856
    %v1544 = vunpack.c.h.b16 %v856
    %v1545 = vunpack.c.l.b16 %v857
    %v1546 = vunpack.c.h.b16 %v857
    %v1547 = vunpack.c.l.b16 %v858
    %v1548 = vunpack.c.h.b16 %v858
    %v1549 = vunpack.c.l.b16 %v859
    %v1550 = vunpack.c.h.b16 %v859
    %v1551 = vunpack.c.l.b16 %v860
    %v1552 = vunpack.c.h.b16 %v860
    %v1553 = vunpack.c.l.b16 %v861
    %v1554 = vunpack.c.h.b16 %v861
    %v1555 = vunpack.c.l.b16 %v862
    %v1556 = vunpack.c.h.b16 %v862
    %v1557 = vunpack.c.l.b16 %v863
    %v1558 = vunpack.c.h.b16 %v863
    %v1559 = vunpack.c.l.b16 %v864
    %v1560 = vunpack.c.h.b16 %v864
    %v1561 = vunpack.c.l.b16 %v865
    %v1562 = vunpack.c.h.b16 %v865
    %v1563 = vunpack.c.l.b16 %v866
    %v1564 = vunpack.c.h.b16 %v866
    %v1565 = vunpack.c.l.b16 %v867
    %v1566 = vunpack.c.h.b16 %v867
    %v1567 = vunpack.c.l.b16 %v868
    %v1568 = vunpack.c.h.b16 %v868
    %v1569 = vunpack.c.l.b16 %v869
    %v1570 = vunpack.c.h.b16 %v869
    %v1571 = vunpack.c.l.b16 %v870
    %v1572 = vunpack.c.h.b16 %v870
    %v1573 = vunpack.c.l.b16 %v871
    %v1574 = vunpack.c.h.b16 %v871
    %v1575 = vunpack.c.l.b16 %v872
    %v1576 = vunpack.c.h.b16 %v872
    %v1577 = vunpack.c.l.b16 %v873
    %v1578 = vunpack.c.h.b16 %v873
    %v1579 = vunpack.c.l.b16 %v874
    %v1580 = vunpack.c.h.b16 %v874
    %v1581 = vunpack.c.l.b16 %v875
    %v1582 = vunpack.c.h.b16 %v875
    %v1583 = vunpack.c.l.b16 %v876
    %v1584 = vunpack.c.h.b16 %v876
    %v1585 = vunpack.c.l.b16 %v877
    %v1586 = vunpack.c.h.b16 %v877
    %v1587 = vunpack.c.l.b16 %v878
    %v1588 = vunpack.c.h.b16 %v878
    %v1589 = vunpack.c.l.b16 %v879
    %v1590 = vunpack.c.h.b16 %v879
    %v1591 = vunpack.c.l.b16 %v880
    %v1592 = vunpack.c.h.b16 %v880
    %v1593 = vunpack.c.l.b16 %v881
    %v1594 = vunpack.c.h.b16 %v881
    %v1595 = vunpack.c.l.b16 %v882
    %v1596 = vunpack.c.h.b16 %v882
    %v1597 = vunpack.c.l.b16 %v883
    %v1598 = vunpack.c.h.b16 %v883
    %v1599 = vunpack.c.l.b16 %v884
    %v1600 = vunpack.c.h.b16 %v884
    %v1601 = vunpack.c.l.b16 %v885
    %v1602 = vunpack.c.h.b16 %v885
    %v1603 = vunpack.c.l.b16 %v886
    %v1604 = vunpack.c.h.b16 %v886
    %v1605 = vunpack.c.l.b16 %v887
    %v1606 = vunpack.c.h.b16 %v887
    %v1607 = vunpack.c.l.b16 %v888
    %v1608 = vunpack.c.h.b16 %v888
    %v1609 = vunpack.c.l.b16 %v889
    %v1610 = vunpack.c.h.b16 %v889
    %v1611 = vunpack.c.l.b16 %v890
    %v1612 = vunpack.c.h.b16 %v890
    %v1613 = vunpack.c.l.b16 %v891
    %v1614 = vunpack.c.h.b16 %v891
    %v1615 = vunpack.c.l.b16 %v892
    %v1616 = vunpack.c.h.b16 %v892
    %v1617 = vunpack.c.l.b16 %v893
    %v1618 = vunpack.c.h.b16 %v893
    %v1619 = vunpack.c.l.b16 %v894
    %v1620 = vunpack.c.h.b16 %v894
    %v1621 = vunpack.c.l.b16 %v895
    %v1622 = vunpack.c.h.b16 %v895
    %v1623 = vunpack.c.l.b16 %v896
    %v1624 = vunpack.c.h.b16 %v896
    %v1625 = vunpack.c.l.b16 %v897
    %v1626 = vunpack.c.h.b16 %v897
    %v1627 = vunpack.c.l.b16 %v898
    %v1628 = vunpack.c.h.b16 %v898
    %v1629 = vunpack.c.l.b16 %v899
    %v1630 = vunpack.c.h.b16 %v899
    %v1631 = vunpack.c.l.b16 %v900
    %v1632 = vunpack.c.h.b16 %v900
    %v1633 = vunpack.c.l.b16 %v901
    %v1634 = vunpack.c.h.b16 %v901
    %v1635 = vunpack.c.l.b16 %v902
    %v1636 = vunpack.c.h.b16 %v902
    %v1637 = vunpack.c.l.b16 %v903
    %v1638 = vunpack.c.h.b16 %v903
    %v1639 = vunpack.c.l.b16 %v904
    %v1640 = vunpack.c.h.b16 %v904
    %v1641 = vunpack.c.l.b16 %v905
    %v1642 = vunpack.c.h.b16 %v905
    %v1643 = vunpack.c.l.b16 %v906
    %v1644 = vunpack.c.h.b16 %v906
    %v1645 = vunpack.c.l.b16 %v907
    %v1646 = vunpack.c.h.b16 %v907
    %v1647 = vunpack.c.l.b16 %v908
    %v1648 = vunpack.c.h.b16 %v908
    %v1649 = vunpack.c.l.b16 %v909
    %v1650 = vunpack.c.h.b16 %v909
    %v1651 = vunpack.c.l.b16 %v910
    %v1652 = vunpack.c.h.b16 %v910
    %v1653 = vunpack.c.l.b16 %v911
    %v1654 = vunpack.c.h.b16 %v911
    %v1655 = vunpack.c.l.b16 %v912
    %v1656 = vunpack.c.h.b16 %v912
    %v1657 = vunpack.c.l.b16 %v913
    %v1658 = vunpack.c.h.b16 %v913
    %v1659 = vunpack.c.l.b16 %v914
    %v1660 = vunpack.c.h.b16 %v914
    %v1661 = vunpack.c.l.b16 %v915
    %v1662 = vunpack.c.h.b16 %v915
    %v1663 = vunpack.c.l.b16 %v916
    %v1664 = vunpack.c.h.b16 %v916
    %v1665 = vunpack.c.l.b16 %v917
    %v1666 = vunpack.c.h.b16 %v917
    %v1667 = vunpack.c.l.b16 %v918
    %v1668 = vunpack.c.h.b16 %v918
    %v1669 = vunpack.c.l.b16 %v919
    %v1670 = vunpack.c.h.b16 %v919
    %v1671 = vunpack.c.l.b16 %v920
    %v1672 = vunpack.c.h.b16 %v920
    %v1673 = vunpack.c.l.b16 %v921
    %v1674 = vunpack.c.h.b16 %v921
    %v1675 = vunpack.c.l.b16 %v922
    %v1676 = vunpack.c.h.b16 %v922
    %v1677 = vunpack.c.l.b16 %v923
    %v1678 = vunpack.c.h.b16 %v923
    %v1679 = vunpack.c.l.b16 %v924
    %v1680 = vunpack.c.h.b16 %v924
    %v1681 = vunpack.c.l.b16 %v925
    %v1682 = vunpack.c.h.b16 %v925
    %v1683 = vunpack.c.l.b16 %v926
    %v1684 = vunpack.c.h.b16 %v926
    %v1685 = vunpack.c.l.b16 %v927
    %v1686 = vunpack.c.h.b16 %v927
    %v1687 = vunpack.c.l.b16 %v928
    %v1688 = vunpack.c.h.b16 %v928
    %v1689 = vunpack.c.l.b16 %v929
    %v1690 = vunpack.c.h.b16 %v929
    %v1691 = vunpack.c.l.b16 %v930
    %v1692 = vunpack.c.h.b16 %v930
    %v1693 = vunpack.c.l.b16 %v931
    %v1694 = vunpack.c.h.b16 %v931
    %v1695 = vunpack.c.l.b16 %v932
    %v1696 = vunpack.c.h.b16 %v932
    %v1697 = vunpack.c.l.b16 %v933
    %v1698 = vunpack.c.h.b16 %v933
    %v1699 = vunpack.c.l.b16 %v934
    %v1700 = vunpack.c.h.b16 %v934
    %v1701 = vunpack.c.l.b16 %v935
    %v1702 = vunpack.c.h.b16 %v935
    %v1703 = vunpack.c.l.b16 %v936
    %v1704 = vunpack.c.h.b16 %v936
    %v1705 = vunpack.c.l.b16 %v937
    %v1706 = vunpack.c.h.b16 %v937
    %v1707 = vunpack.c.l.b16 %v938
    %v1708 = vunpack.c.h.b16 %v938
    %v1709 = vunpack.c.l.b16 %v939
    %v1710 = vunpack.c.h.b16 %v939
    %v1711 = vunpack.c.l.b16 %v940
    %v1712 = vunpack.c.h.b16 %v940
    %v1713 = vunpack.c.l.b16 %v941
    %v1714 = vunpack.c.h.b16 %v941
    %v1715 = vunpack.c.l.b16 %v942
    %v1716 = vunpack.c.h.b16 %v942
    %v1717 = vunpack.c.l.b16 %v943
    %v1718 = vunpack.c.h.b16 %v943
    %v1719 = vunpack.c.l.b16 %v944
    %v1720 = vunpack.c.h.b16 %v944
    %v1721 = vunpack.c.l.b16 %v945
    %v1722 = vunpack.c.h.b16 %v945
    %v1723 = vunpack.c.l.b16 %v946
    %v1724 = vunpack.c.h.b16 %v946
    %v1725 = vunpack.c.l.b16 %v947
    %v1726 = vunpack.c.h.b16 %v947
    %v1727 = vunpack.c.l.b16 %v948
    %v1728 = vunpack.c.h.b16 %v948
    %v1729 = vunpack.c.l.b16 %v949
    %v1730 = vunpack.c.h.b16 %v949
    %v1731 = vunpack.c.l.b16 %v950
    %v1732 = vunpack.c.h.b16 %v950
    %v1733 = vunpack.c.l.b16 %v951
    %v1734 = vunpack.c.h.b16 %v951
    %v1735 = vunpack.c.l.b16 %v952
    %v1736 = vunpack.c.h.b16 %v952
    %v1737 = vunpack.c.l.b16 %v953
    %v1738 = vunpack.c.h.b16 %v953
    %v1739 = vunpack.c.l.b16 %v954
    %v1740 = vunpack.c.h.b16 %v954
    %v1741 = vunpack.c.l.b16 %v955
    %v1742 = vunpack.c.h.b16 %v955
    %v1743 = vunpack.c.l.b16 %v956
    %v1744 = vunpack.c.h.b16 %v956
    %v1745 = vunpack.c.l.b16 %v957
    %v1746 = vunpack.c.h.b16 %v957
    %v1747 = vunpack.c.l.b16 %v958
    %v1748 = vunpack.c.h.b16 %v958
    %v1749 = vpack.c.b16 %v1241, %v1237
    %v1750 = vpack.c.b16 %v1242, %v1238
    %v1751 = vpack.c.b16 %v1243, %v1239
    %v1752 = vpack.c.b16 %v1244, %v1240
    %v1753 = vpack.c.b16 %v1249, %v1245
    %v1754 = vpack.c.b16 %v1250, %v1246
    %v1755 = vpack.c.b16 %v1251, %v1247
    %v1756 = vpack.c.b16 %v1252, %v1248
    %v1757 = vpack.c.b16 %v1257, %v1253
    %v1758 = vpack.c.b16 %v1258, %v1254
    %v1759 = vpack.c.b16 %v1259, %v1255
    %v1760 = vpack.c.b16 %v1260, %v1256
    %v1761 = vpack.c.b16 %v1265, %v1261
    %v1762 = vpack.c.b16 %v1266, %v1262
    %v1763 = vpack.c.b16 %v1267, %v1263
    %v1764 = vpack.c.b16 %v1268, %v1264
    %v1765 = vpack.c.b16 %v1273, %v1269
    %v1766 = vpack.c.b16 %v1274, %v1270
    %v1767 = vpack.c.b16 %v1275, %v1271
    %v1768 = vpack.c.b16 %v1276, %v1272
    %v1769 = vpack.c.b16 %v1281, %v1277
    %v1770 = vpack.c.b16 %v1282, %v1278
    %v1771 = vpack.c.b16 %v1283, %v1279
    %v1772 = vpack.c.b16 %v1284, %v1280
    %v1773 = vpack.c.b16 %v1289, %v1285
    %v1774 = vpack.c.b16 %v1290, %v1286
    %v1775 = vpack.c.b16 %v1291, %v1287
    %v1776 = vpack.c.b16 %v1292, %v1288
    %v1777 = vpack.c.b16 %v1297, %v1293
    %v1778 = vpack.c.b16 %v1298, %v1294
    %v1779 = vpack.c.b16 %v1299, %v1295
    %v1780 = vpack.c.b16 %v1300, %v1296
    %v1781 = vpack.c.b16 %v1305, %v1301
    %v1782 = vpack.c.b16 %v1306, %v1302
    %v1783 = vpack.c.b16 %v1307, %v1303
    %v1784 = vpack.c.b16 %v1308, %v1304
    %v1785 = vpack.c.b16 %v1313, %v1309
    %v1786 = vpack.c.b16 %v1314, %v1310
    %v1787 = vpack.c.b16 %v1315, %v1311
    %v1788 = vpack.c.b16 %v1316, %v1312
    %v1789 = vpack.c.b16 %v1321, %v1317
    %v1790 = vpack.c.b16 %v1322, %v1318
    %v1791 = vpack.c.b16 %v1323, %v1319
    %v1792 = vpack.c.b16 %v1324, %v1320
    %v1793 = vpack.c.b16 %v1329, %v1325
    %v1794 = vpack.c.b16 %v1330, %v1326
    %v1795 = vpack.c.b16 %v1331, %v1327
    %v1796 = vpack.c.b16 %v1332, %v1328
    %v1797 = vpack.c.b16 %v1337, %v1333
    %v1798 = vpack.c.b16 %v1338, %v1334
    %v1799 = vpack.c.b16 %v1339, %v1335
    %v1800 = vpack.c.b16 %v1340, %v1336
    %v1801 = vpack.c.b16 %v1345, %v1341
    %v1802 = vpack.c.b16 %v1346, %v1342
    %v1803 = vpack.c.b16 %v1347, %v1343
    %v1804 = vpack.c.b16 %v1348, %v1344
    %v1805 = vpack.c.b16 %v1353, %v1349
    %v1806 = vpack.c.b16 %v1354, %v1350
    %v1807 = vpack.c.b16 %v1355, %v1351
    %v1808 = vpack.c.b16 %v1356, %v1352
    %v1809 = vpack.c.b16 %v1361, %v1357
    %v1810 = vpack.c.b16 %v1362, %v1358
    %v1811 = vpack.c.b16 %v1363, %v1359
    %v1812 = vpack.c.b16 %v1364, %v1360
    %v1813 = vpack.c.b16 %v1369, %v1365
    %v1814 = vpack.c.b16 %v1370, %v1366
    %v1815 = vpack.c.b16 %v1371, %v1367
    %v1816 = vpack.c.b16 %v1372, %v1368
    %v1817 = vpack.c.b16 %v1377, %v1373
    %v1818 = vpack.c.b16 %v1378, %v1374
    %v1819 = vpack.c.b16 %v1379, %v1375
    %v1820 = vpack.c.b16 %v1380, %v1376
    %v1821 = vpack.c.b16 %v1385, %v1381
    %v1822 = vpack.c.b16 %v1386, %v1382
    %v1823 = vpack.c.b16 %v1387, %v1383
    %v1824 = vpack.c.b16 %v1388, %v1384
    %v1825 = vpack.c.b16 %v1393, %v1389
    %v1826 = vpack.c.b16 %v1394, %v1390
    %v1827 = vpack.c.b16 %v1395, %v1391
    %v1828 = vpack.c.b16 %v1396, %v1392
    %v1829 = vpack.c.b16 %v1401, %v1397
    %v1830 = vpack.c.b16 %v1402, %v1398
    %v1831 = vpack.c.b16 %v1403, %v1399
    %v1832 = vpack.c.b16 %v1404, %v1400
    %v1833 = vpack.c.b16 %v1409, %v1405
    %v1834 = vpack.c.b16 %v1410, %v1406
    %v1835 = vpack.c.b16 %v1411, %v1407
    %v1836 = vpack.c.b16 %v1412, %v1408
    %v1837 = vpack.c.b16 %v1417, %v1413
    %v1838 = vpack.c.b16 %v1418, %v1414
    %v1839 = vpack.c.b16 %v1419, %v1415
    %v1840 = vpack.c.b16 %v1420, %v1416
    %v1841 = vpack.c.b16 %v1425, %v1421
    %v1842 = vpack.c.b16 %v1426, %v1422
    %v1843 = vpack.c.b16 %v1427, %v1423
    %v1844 = vpack.c.b16 %v1428, %v1424
    %v1845 = vpack.c.b16 %v1433, %v1429
    %v1846 = vpack.c.b16 %v1434, %v1430
    %v1847 = vpack.c.b16 %v1435, %v1431
    %v1848 = vpack.c.b16 %v1436, %v1432
    %v1849 = vpack.c.b16 %v1441, %v1437
    %v1850 = vpack.c.b16 %v1442, %v1438
    %v1851 = vpack.c.b16 %v1443, %v1439
    %v1852 = vpack.c.b16 %v1444, %v1440
    %v1853 = vpack.c.b16 %v1449, %v1445
    %v1854 = vpack.c.b16 %v1450, %v1446
    %v1855 = vpack.c.b16 %v1451, %v1447
    %v1856 = vpack.c.b16 %v1452, %v1448
    %v1857 = vpack.c.b16 %v1457, %v1453
    %v1858 = vpack.c.b16 %v1458, %v1454
    %v1859 = vpack.c.b16 %v1459, %v1455
    %v1860 = vpack.c.b16 %v1460, %v1456
    %v1861 = vpack.c.b16 %v1465, %v1461
    %v1862 = vpack.c.b16 %v1466, %v1462
    %v1863 = vpack.c.b16 %v1467, %v1463
    %v1864 = vpack.c.b16 %v1468, %v1464
    %v1865 = vpack.c.b16 %v1473, %v1469
    %v1866 = vpack.c.b16 %v1474, %v1470
    %v1867 = vpack.c.b16 %v1475, %v1471
    %v1868 = vpack.c.b16 %v1476, %v1472
    %v1869 = vpack.c.b16 %v1481, %v1477
    %v1870 = vpack.c.b16 %v1482, %v1478
    %v1871 = vpack.c.b16 %v1483, %v1479
    %v1872 = vpack.c.b16 %v1484, %v1480
    %v1873 = vpack.c.b16 %v1489, %v1485
    %v1874 = vpack.c.b16 %v1490, %v1486
    %v1875 = vpack.c.b16 %v1491, %v1487
    %v1876 = vpack.c.b16 %v1492, %v1488
    %v1877 = vpack.c.b16 %v1497, %v1493
    %v1878 = vpack.c.b16 %v1498, %v1494
    %v1879 = vpack.c.b16 %v1499, %v1495
    %v1880 = vpack.c.b16 %v1500, %v1496
    %v1881 = vpack.c.b16 %v1505, %v1501
    %v1882 = vpack.c.b16 %v1506, %v1502
    %v1883 = vpack.c.b16 %v1507, %v1503
    %v1884 = vpack.c.b16 %v1508, %v1504
    %v1885 = vpack.c.b16 %v1513, %v1509
    %v1886 = vpack.c.b16 %v1514, %v1510
    %v1887 = vpack.c.b16 %v1515, %v1511
    %v1888 = vpack.c.b16 %v1516, %v1512
    %v1889 = vpack.c.b16 %v1521, %v1517
    %v1890 = vpack.c.b16 %v1522, %v1518
    %v1891 = vpack.c.b16 %v1523, %v1519
    %v1892 = vpack.c.b16 %v1524, %v1520
    %v1893 = vpack.c.b16 %v1529, %v1525
    %v1894 = vpack.c.b16 %v1530, %v1526
    %v1895 = vpack.c.b16 %v1531, %v1527
    %v1896 = vpack.c.b16 %v1532, %v1528
    %v1897 = vpack.c.b16 %v1537, %v1533
    %v1898 = vpack.c.b16 %v1538, %v1534
    %v1899 = vpack.c.b16 %v1539, %v1535
    %v1900 = vpack.c.b16 %v1540, %v1536
    %v1901 = vpack.c.b16 %v1545, %v1541
    %v1902 = vpack.c.b16 %v1546, %v1542
    %v1903 = vpack.c.b16 %v1547, %v1543
    %v1904 = vpack.c.b16 %v1548, %v1544
    %v1905 = vpack.c.b16 %v1553, %v1549
    %v1906 = vpack.c.b16 %v1554, %v1550
    %v1907 = vpack.c.b16 %v1555, %v1551
    %v1908 = vpack.c.b16 %v1556, %v1552
    %v1909 = vpack.c.b16 %v1561, %v1557
    %v1910 = vpack.c.b16 %v1562, %v1558
    %v1911 = vpack.c.b16 %v1563, %v1559
    %v1912 = vpack.c.b16 %v1564, %v1560
    %v1913 = vpack.c.b16 %v1569, %v1565
    %v1914 = vpack.c.b16 %v1570, %v1566
    %v1915 = vpack.c.b16 %v1571, %v1567
    %v1916 = vpack.c.b16 %v1572, %v1568
    %v1917 = vpack.c.b16 %v1577, %v1573
    %v1918 = vpack.c.b16 %v1578, %v1574
    %v1919 = vpack.c.b16 %v1579, %v1575
    %v1920 = vpack.c.b16 %v1580, %v1576
    %v1921 = vpack.c.b16 %v1585, %v1581
    %v1922 = vpack.c.b16 %v1586, %v1582
    %v1923 = vpack.c.b16 %v1587, %v1583
    %v1924 = vpack.c.b16 %v1588, %v1584
    %v1925 = vpack.c.b16 %v1593, %v1589
    %v1926 = vpack.c.b16 %v1594, %v1590
    %v1927 = vpack.c.b16 %v1595, %v1591
    %v1928 = vpack.c.b16 %v1596, %v1592
    %v1929 = vpack.c.b16 %v1601, %v1597
    %v1930 = vpack.c.b16 %v1602, %v1598
    %v1931 = vpack.c.b16 %v1603, %v1599
    %v1932 = vpack.c.b16 %v1604, %v1600
    %v1933 = vpack.c.b16 %v1609, %v1605
    %v1934 = vpack.c.b16 %v1610, %v1606
    %v1935 = vpack.c.b16 %v1611, %v1607
    %v1936 = vpack.c.b16 %v1612, %v1608
    %v1937 = vpack.c.b16 %v1617, %v1613
    %v1938 = vpack.c.b16 %v1618, %v1614
    %v1939 = vpack.c.b16 %v1619, %v1615
    %v1940 = vpack.c.b16 %v1620, %v1616
    %v1941 = vpack.c.b16 %v1625, %v1621
    %v1942 = vpack.c.b16 %v1626, %v1622
    %v1943 = vpack.c.b16 %v1627, %v1623
    %v1944 = vpack.c.b16 %v1628, %v1624
    %v1945 = vpack.c.b16 %v1633, %v1629
    %v1946 = vpack.c.b16 %v1634, %v1630
    %v1947 = vpack.c.b16 %v1635, %v1631
    %v1948 = vpack.c.b16 %v1636, %v1632
    %v1949 = vpack.c.b16 %v1641, %v1637
    %v1950 = vpack.c.b16 %v1642, %v1638
    %v1951 = vpack.c.b16 %v1643, %v1639
    %v1952 = vpack.c.b16 %v1644, %v1640
    %v1953 = vpack.c.b16 %v1649, %v1645
    %v1954 = vpack.c.b16 %v1650, %v1646
    %v1955 = vpack.c.b16 %v1651, %v1647
    %v1956 = vpack.c.b16 %v1652, %v1648
    %v1957 = vpack.c.b16 %v1657, %v1653
    %v1958 = vpack.c.b16 %v1658, %v1654
    %v1959 = vpack.c.b16 %v1659, %v1655
    %v1960 = vpack.c.b16 %v1660, %v1656
    %v1961 = vpack.c.b16 %v1665, %v1661
    %v1962 = vpack.c.b16 %v1666, %v1662
    %v1963 = vpack.c.b16 %v1667, %v1663
    %v1964 = vpack.c.b16 %v1668, %v1664
    %v1965 = vpack.c.b16 %v1673, %v1669
    %v1966 = vpack.c.b16 %v1674, %v1670
    %v1967 = vpack.c.b16 %v1675, %v1671
    %v1968 = vpack.c.b16 %v1676, %v1672
    %v1969 = vpack.c.b16 %v1681, %v1677
    %v1970 = vpack.c.b16 %v1682, %v1678
    %v1971 = vpack.c.b16 %v1683, %v1679
    %v1972 = vpack.c.b16 %v1684, %v1680
    %v1973 = vpack.c.b16 %v1689, %v1685
    %v1974 = vpack.c.b16 %v1690, %v1686
    %v1975 = vpack.c.b16 %v1691, %v1687
    %v1976 = vpack.c.b16 %v1692, %v1688
    %v1977 = vpack.c.b16 %v1697, %v1693
    %v1978 = vpack.c.b16 %v1698, %v1694
    %v1979 = vpack.c.b16 %v1699, %v1695
    %v1980 = vpack.c.b16 %v1700, %v1696
    %v1981 = vpack.c.b16 %v1705, %v1701
    %v1982 = vpack.c.b16 %v1706, %v1702
    %v1983 = vpack.c.b16 %v1707, %v1703
    %v1984 = vpack.c.b16 %v1708, %v1704
    %v1985 = vpack.c.b16 %v1713, %v1709
    %v1986 = vpack.c.b16 %v1714, %v1710
    %v1987 = vpack.c.b16 %v1715, %v1711
    %v1988 = vpack.c.b16 %v1716, %v1712
    %v1989 = vpack.c.b16 %v1721, %v1717
    %v1990 = vpack.c.b16 %v1722, %v1718
    %v1991 = vpack.c.b16 %v1723, %v1719
    %v1992 = vpack.c.b16 %v1724, %v1720
    %v1993 = vpack.c.b16 %v1729, %v1725
    %v1994 = vpack.c.b16 %v1730, %v1726
    %v1995 = vpack.c.b16 %v1731, %v1727
    %v1996 = vpack.c.b16 %v1732, %v1728
    %v1997 = vpack.c.b16 %v1737, %v1733
    %v1998 = vpack.c.b16 %v1738, %v1734
    %v1999 = vpack.c.b16 %v1739, %v1735
    %v2000 = vpack.c.b16 %v1740, %v1736
    %v2001 = vpack.c.b16 %v1745, %v1741
    %v2002 = vpack.c.b16 %v1746, %v1742
    %v2003 = vpack.c.b16 %v1747, %v1743
    %v2004 = vpack.c.b16 %v1748, %v1744
    %2261 = vmatprep.subr.bf16.mxu0 %v1750
    %2262 = vmatpush1.bf16.msra.mxu0 %v1749
    %2263 = vmatprep.subr.bf16.mxu0 %v1754
    %2264 = vmatpush1.bf16.msra.mxu0 %v1753
    %2265 = vmatprep.subr.bf16.mxu0 %v1758
    %2266 = vmatpush1.bf16.msra.mxu0 %v1757
    %2267 = vmatprep.subr.bf16.mxu0 %v1762
    %2268 = vmatpush1.bf16.msra.mxu0 %v1761
    %2269 = vmatprep.subr.bf16.mxu0 %v1766
    %2270 = vmatpush1.bf16.msra.mxu0 %v1765
    %2271 = vmatprep.subr.bf16.mxu0 %v1770
    %2272 = vmatpush1.bf16.msra.mxu0 %v1769
    %2273 = vmatprep.subr.bf16.mxu0 %v1774
    %2274 = vmatpush1.bf16.msra.mxu0 %v1773
    %2275 = vmatprep.subr.bf16.mxu0 %v1778
    %2276 = vmatpush1.bf16.msra.mxu0 %v1777
    %2277 = vmatprep.subr.bf16.mxu0 %v1782
    %2278 = vmatpush1.bf16.msra.mxu0 %v1781
    %2279 = vmatprep.subr.bf16.mxu0 %v1786
    %2280 = vmatpush1.bf16.msra.mxu0 %v1785
    %2281 = vmatprep.subr.bf16.mxu0 %v1790
    %2282 = vmatpush1.bf16.msra.mxu0 %v1789
    %2283 = vmatprep.subr.bf16.mxu0 %v1794
    %2284 = vmatpush1.bf16.msra.mxu0 %v1793
    %2285 = vmatprep.subr.bf16.mxu0 %v1798
    %2286 = vmatpush1.bf16.msra.mxu0 %v1797
    %2287 = vmatprep.subr.bf16.mxu0 %v1802
    %2288 = vmatpush1.bf16.msra.mxu0 %v1801
    %2289 = vmatprep.subr.bf16.mxu0 %v1806
    %2290 = vmatpush1.bf16.msra.mxu0 %v1805
    %2291 = vmatprep.subr.bf16.mxu0 %v1810
    %2292 = vmatpush1.bf16.msra.mxu0 %v1809
    %2293 = vmatprep.mubr.bf16.mxu0 %v696
    %2294 = vmatmul.mubr.bf16.gmra.mrb[0].mxu0 %v695
    %v2295 = vpop.f32.mrb[0].mxu0
    %v2296 = vadd.f32 %v964, %v2295
    %v2297 = vpop.f32.mrb[0].mxu0
    %v2298 = vadd.f32 %v968, %v2297
    %v2299 = vpop.f32.mrb[0].mxu0
    %v2300 = vpop.f32.mrb[0].mxu0
    %2301 = vdwg.mxu0
    %2302 = vmatprep.subr.bf16.mxu0 %v1814
    %2303 = vmatpush1.bf16.msra.mxu0 %v1813
    %2304 = vmatprep.subr.bf16.mxu0 %v1818
    %2305 = vmatpush1.bf16.msra.mxu0 %v1817
    %2306 = vmatprep.subr.bf16.mxu0 %v1822
    %2307 = vmatpush1.bf16.msra.mxu0 %v1821
    %2308 = vmatprep.subr.bf16.mxu0 %v1826
    %2309 = vmatpush1.bf16.msra.mxu0 %v1825
    %2310 = vmatprep.subr.bf16.mxu0 %v1830
    %2311 = vmatpush1.bf16.msra.mxu0 %v1829
    %2312 = vmatprep.subr.bf16.mxu0 %v1834
    %2313 = vmatpush1.bf16.msra.mxu0 %v1833
    %2314 = vmatprep.subr.bf16.mxu0 %v1838
    %2315 = vmatpush1.bf16.msra.mxu0 %v1837
    %2316 = vmatprep.subr.bf16.mxu0 %v1842
    %2317 = vmatpush1.bf16.msra.mxu0 %v1841
    %2318 = vmatprep.subr.bf16.mxu0 %v1846
    %2319 = vmatpush1.bf16.msra.mxu0 %v1845
    %2320 = vmatprep.subr.bf16.mxu0 %v1850
    %2321 = vmatpush1.bf16.msra.mxu0 %v1849
    %2322 = vmatprep.subr.bf16.mxu0 %v1854
    %2323 = vmatpush1.bf16.msra.mxu0 %v1853
    %2324 = vmatprep.subr.bf16.mxu0 %v1858
    %2325 = vmatpush1.bf16.msra.mxu0 %v1857
    %2326 = vmatprep.subr.bf16.mxu0 %v1862
    %2327 = vmatpush1.bf16.msra.mxu0 %v1861
    %2328 = vmatprep.subr.bf16.mxu0 %v1866
    %2329 = vmatpush1.bf16.msra.mxu0 %v1865
    %2330 = vmatprep.subr.bf16.mxu0 %v1870
    %2331 = vmatpush1.bf16.msra.mxu0 %v1869
    %2332 = vmatprep.subr.bf16.mxu0 %v1874
    %2333 = vmatpush1.bf16.msra.mxu0 %v1873
    %2334 = vmatprep.mubr.bf16.mxu0 %v698
    %2335 = vmatmul.mubr.bf16.gmra.mrb[0].mxu0 %v697
    %v2336 = vpop.f32.mrb[0].mxu0
    %v2337 = vadd.f32 %v2296, %v2336
    %v2338 = vpop.f32.mrb[0].mxu0
    %v2339 = vadd.f32 %v2298, %v2338
    %v2340 = vpop.f32.mrb[0].mxu0
    %v2341 = vpop.f32.mrb[0].mxu0
    %2342 = vdwg.mxu0
    %2343 = vmatprep.subr.bf16.mxu0 %v1878
    %2344 = vmatpush1.bf16.msra.mxu0 %v1877
    %2345 = vmatprep.subr.bf16.mxu0 %v1882
    %2346 = vmatpush1.bf16.msra.mxu0 %v1881
    %2347 = vmatprep.subr.bf16.mxu0 %v1886
    %2348 = vmatpush1.bf16.msra.mxu0 %v1885
    %2349 = vmatprep.subr.bf16.mxu0 %v1890
    %2350 = vmatpush1.bf16.msra.mxu0 %v1889
    %2351 = vmatprep.subr.bf16.mxu0 %v1894
    %2352 = vmatpush1.bf16.msra.mxu0 %v1893
    %2353 = vmatprep.subr.bf16.mxu0 %v1898
    %2354 = vmatpush1.bf16.msra.mxu0 %v1897
    %2355 = vmatprep.subr.bf16.mxu0 %v1902
    %2356 = vmatpush1.bf16.msra.mxu0 %v1901
    %2357 = vmatprep.subr.bf16.mxu0 %v1906
    %2358 = vmatpush1.bf16.msra.mxu0 %v1905
    %2359 = vmatprep.subr.bf16.mxu0 %v1910
    %2360 = vmatpush1.bf16.msra.mxu0 %v1909
    %2361 = vmatprep.subr.bf16.mxu0 %v1914
    %2362 = vmatpush1.bf16.msra.mxu0 %v1913
    %2363 = vmatprep.subr.bf16.mxu0 %v1918
    %2364 = vmatpush1.bf16.msra.mxu0 %v1917
    %2365 = vmatprep.subr.bf16.mxu0 %v1922
    %2366 = vmatpush1.bf16.msra.mxu0 %v1921
    %2367 = vmatprep.subr.bf16.mxu0 %v1926
    %2368 = vmatpush1.bf16.msra.mxu0 %v1925
    %2369 = vmatprep.subr.bf16.mxu0 %v1930
    %2370 = vmatpush1.bf16.msra.mxu0 %v1929
    %2371 = vmatprep.subr.bf16.mxu0 %v1934
    %2372 = vmatpush1.bf16.msra.mxu0 %v1933
    %2373 = vmatprep.subr.bf16.mxu0 %v1938
    %2374 = vmatpush1.bf16.msra.mxu0 %v1937
    %2375 = vmatprep.mubr.bf16.mxu0 %v700
    %2376 = vmatmul.mubr.bf16.gmra.mrb[0].mxu0 %v699
    %v2377 = vpop.f32.mrb[0].mxu0
    %v2378 = vadd.f32 %v2337, %v2377
    %v2379 = vpop.f32.mrb[0].mxu0
    %v2380 = vadd.f32 %v2339, %v2379
    %v2381 = vpop.f32.mrb[0].mxu0
    %v2382 = vpop.f32.mrb[0].mxu0
    %2383 = vdwg.mxu0
    %2384 = vmatprep.subr.bf16.mxu0 %v1942
    %2385 = vmatpush1.bf16.msra.mxu0 %v1941
    %2386 = vmatprep.subr.bf16.mxu0 %v1946
    %2387 = vmatpush1.bf16.msra.mxu0 %v1945
    %2388 = vmatprep.subr.bf16.mxu0 %v1950
    %2389 = vmatpush1.bf16.msra.mxu0 %v1949
    %2390 = vmatprep.subr.bf16.mxu0 %v1954
    %2391 = vmatpush1.bf16.msra.mxu0 %v1953
    %2392 = vmatprep.subr.bf16.mxu0 %v1958
    %2393 = vmatpush1.bf16.msra.mxu0 %v1957
    %2394 = vmatprep.subr.bf16.mxu0 %v1962
    %2395 = vmatpush1.bf16.msra.mxu0 %v1961
    %2396 = vmatprep.subr.bf16.mxu0 %v1966
    %2397 = vmatpush1.bf16.msra.mxu0 %v1965
    %2398 = vmatprep.subr.bf16.mxu0 %v1970
    %2399 = vmatpush1.bf16.msra.mxu0 %v1969
    %2400 = vmatprep.subr.bf16.mxu0 %v1974
    %2401 = vmatpush1.bf16.msra.mxu0 %v1973
    %2402 = vmatprep.subr.bf16.mxu0 %v1978
    %2403 = vmatpush1.bf16.msra.mxu0 %v1977
    %2404 = vmatprep.subr.bf16.mxu0 %v1982
    %2405 = vmatpush1.bf16.msra.mxu0 %v1981
    %2406 = vmatprep.subr.bf16.mxu0 %v1986
    %2407 = vmatpush1.bf16.msra.mxu0 %v1985
    %2408 = vmatprep.subr.bf16.mxu0 %v1990
    %2409 = vmatpush1.bf16.msra.mxu0 %v1989
    %2410 = vmatprep.subr.bf16.mxu0 %v1994
    %2411 = vmatpush1.bf16.msra.mxu0 %v1993
    %2412 = vmatprep.subr.bf16.mxu0 %v1998
    %2413 = vmatpush1.bf16.msra.mxu0 %v1997
    %2414 = vmatprep.subr.bf16.mxu0 %v2002
    %2415 = vmatpush1.bf16.msra.mxu0 %v2001
    %2416 = vmatprep.mubr.bf16.mxu0 %v702
    %2417 = vmatmul.mubr.bf16.gmra.mrb[0].mxu0 %v701
    %v2418 = vpop.f32.mrb[0].mxu0
    %v2419 = vadd.f32 %v2378, %v2418
    %v2420 = vpop.f32.mrb[0].mxu0
    %v2421 = vadd.f32 %v2380, %v2420
    %v2422 = vpop.f32.mrb[0].mxu0
    %v2423 = vpop.f32.mrb[0].mxu0
    %2424 = vdwg.mxu0
    %2425 = vmatprep.subr.bf16.mxu0 %v1752
    %2426 = vmatpush1.bf16.msra.mxu0 %v1751
    %2427 = vmatprep.subr.bf16.mxu0 %v1756
    %2428 = vmatpush1.bf16.msra.mxu0 %v1755
    %2429 = vmatprep.subr.bf16.mxu0 %v1760
    %2430 = vmatpush1.bf16.msra.mxu0 %v1759
    %2431 = vmatprep.subr.bf16.mxu0 %v1764
    %2432 = vmatpush1.bf16.msra.mxu0 %v1763
    %2433 = vmatprep.subr.bf16.mxu0 %v1768
    %2434 = vmatpush1.bf16.msra.mxu0 %v1767
    %2435 = vmatprep.subr.bf16.mxu0 %v1772
    %2436 = vmatpush1.bf16.msra.mxu0 %v1771
    %2437 = vmatprep.subr.bf16.mxu0 %v1776
    %2438 = vmatpush1.bf16.msra.mxu0 %v1775
    %2439 = vmatprep.subr.bf16.mxu0 %v1780
    %2440 = vmatpush1.bf16.msra.mxu0 %v1779
    %2441 = vmatprep.subr.bf16.mxu0 %v1784
    %2442 = vmatpush1.bf16.msra.mxu0 %v1783
    %2443 = vmatprep.subr.bf16.mxu0 %v1788
    %2444 = vmatpush1.bf16.msra.mxu0 %v1787
    %2445 = vmatprep.subr.bf16.mxu0 %v1792
    %2446 = vmatpush1.bf16.msra.mxu0 %v1791
    %2447 = vmatprep.subr.bf16.mxu0 %v1796
    %2448 = vmatpush1.bf16.msra.mxu0 %v1795
    %2449 = vmatprep.subr.bf16.mxu0 %v1800
    %2450 = vmatpush1.bf16.msra.mxu0 %v1799
    %2451 = vmatprep.subr.bf16.mxu0 %v1804
    %2452 = vmatpush1.bf16.msra.mxu0 %v1803
    %2453 = vmatprep.subr.bf16.mxu0 %v1808
    %2454 = vmatpush1.bf16.msra.mxu0 %v1807
    %2455 = vmatprep.subr.bf16.mxu0 %v1812
    %2456 = vmatpush1.bf16.msra.mxu0 %v1811
    %2457 = vmatprep.mubr.bf16.mxu0 %v696
    %2458 = vmatmul.mubr.bf16.gmra.mrb[0].mxu0 %v695
    %v2459 = vpop.f32.mrb[0].mxu0
    %v2460 = vadd.f32 %v972, %v2459
    %v2461 = vpop.f32.mrb[0].mxu0
    %v2462 = vadd.f32 %v976, %v2461
    %v2463 = vpop.f32.mrb[0].mxu0
    %v2464 = vpop.f32.mrb[0].mxu0
    %2465 = vdwg.mxu0
    %2466 = vmatprep.subr.bf16.mxu0 %v1816
    %2467 = vmatpush1.bf16.msra.mxu0 %v1815
    %2468 = vmatprep.subr.bf16.mxu0 %v1820
    %2469 = vmatpush1.bf16.msra.mxu0 %v1819
    %2470 = vmatprep.subr.bf16.mxu0 %v1824
    %2471 = vmatpush1.bf16.msra.mxu0 %v1823
    %2472 = vmatprep.subr.bf16.mxu0 %v1828
    %2473 = vmatpush1.bf16.msra.mxu0 %v1827
    %2474 = vmatprep.subr.bf16.mxu0 %v1832
    %2475 = vmatpush1.bf16.msra.mxu0 %v1831
    %2476 = vmatprep.subr.bf16.mxu0 %v1836
    %2477 = vmatpush1.bf16.msra.mxu0 %v1835
    %2478 = vmatprep.subr.bf16.mxu0 %v1840
    %2479 = vmatpush1.bf16.msra.mxu0 %v1839
    %2480 = vmatprep.subr.bf16.mxu0 %v1844
    %2481 = vmatpush1.bf16.msra.mxu0 %v1843
    %2482 = vmatprep.subr.bf16.mxu0 %v1848
    %2483 = vmatpush1.bf16.msra.mxu0 %v1847
    %2484 = vmatprep.subr.bf16.mxu0 %v1852
    %2485 = vmatpush1.bf16.msra.mxu0 %v1851
    %2486 = vmatprep.subr.bf16.mxu0 %v1856
    %2487 = vmatpush1.bf16.msra.mxu0 %v1855
    %2488 = vmatprep.subr.bf16.mxu0 %v1860
    %2489 = vmatpush1.bf16.msra.mxu0 %v1859
    %2490 = vmatprep.subr.bf16.mxu0 %v1864
    %2491 = vmatpush1.bf16.msra.mxu0 %v1863
    %2492 = vmatprep.subr.bf16.mxu0 %v1868
    %2493 = vmatpush1.bf16.msra.mxu0 %v1867
    %2494 = vmatprep.subr.bf16.mxu0 %v1872
    %2495 = vmatpush1.bf16.msra.mxu0 %v1871
    %2496 = vmatprep.subr.bf16.mxu0 %v1876
    %2497 = vmatpush1.bf16.msra.mxu0 %v1875
    %2498 = vmatprep.mubr.bf16.mxu0 %v698
    %2499 = vmatmul.mubr.bf16.gmra.mrb[0].mxu0 %v697
    %v2500 = vpop.f32.mrb[0].mxu0
    %v2501 = vadd.f32 %v2460, %v2500
    %v2502 = vpop.f32.mrb[0].mxu0
    %v2503 = vadd.f32 %v2462, %v2502
    %v2504 = vpop.f32.mrb[0].mxu0
    %v2505 = vpop.f32.mrb[0].mxu0
    %2506 = vdwg.mxu0
    %2507 = vmatprep.subr.bf16.mxu0 %v1880
    %2508 = vmatpush1.bf16.msra.mxu0 %v1879
    %2509 = vmatprep.subr.bf16.mxu0 %v1884
    %2510 = vmatpush1.bf16.msra.mxu0 %v1883
    %2511 = vmatprep.subr.bf16.mxu0 %v1888
    %2512 = vmatpush1.bf16.msra.mxu0 %v1887
    %2513 = vmatprep.subr.bf16.mxu0 %v1892
    %2514 = vmatpush1.bf16.msra.mxu0 %v1891
    %2515 = vmatprep.subr.bf16.mxu0 %v1896
    %2516 = vmatpush1.bf16.msra.mxu0 %v1895
    %2517 = vmatprep.subr.bf16.mxu0 %v1900
    %2518 = vmatpush1.bf16.msra.mxu0 %v1899
    %2519 = vmatprep.subr.bf16.mxu0 %v1904
    %2520 = vmatpush1.bf16.msra.mxu0 %v1903
    %2521 = vmatprep.subr.bf16.mxu0 %v1908
    %2522 = vmatpush1.bf16.msra.mxu0 %v1907
    %2523 = vmatprep.subr.bf16.mxu0 %v1912
    %2524 = vmatpush1.bf16.msra.mxu0 %v1911
    %2525 = vmatprep.subr.bf16.mxu0 %v1916
    %2526 = vmatpush1.bf16.msra.mxu0 %v1915
    %2527 = vmatprep.subr.bf16.mxu0 %v1920
    %2528 = vmatpush1.bf16.msra.mxu0 %v1919
    %2529 = vmatprep.subr.bf16.mxu0 %v1924
    %2530 = vmatpush1.bf16.msra.mxu0 %v1923
    %2531 = vmatprep.subr.bf16.mxu0 %v1928
    %2532 = vmatpush1.bf16.msra.mxu0 %v1927
    %2533 = vmatprep.subr.bf16.mxu0 %v1932
    %2534 = vmatpush1.bf16.msra.mxu0 %v1931
    %2535 = vmatprep.subr.bf16.mxu0 %v1936
    %2536 = vmatpush1.bf16.msra.mxu0 %v1935
    %2537 = vmatprep.subr.bf16.mxu0 %v1940
    %2538 = vmatpush1.bf16.msra.mxu0 %v1939
    %2539 = vmatprep.mubr.bf16.mxu0 %v700
    %2540 = vmatmul.mubr.bf16.gmra.mrb[0].mxu0 %v699
    %v2541 = vpop.f32.mrb[0].mxu0
    %v2542 = vadd.f32 %v2501, %v2541
    %v2543 = vpop.f32.mrb[0].mxu0
    %v2544 = vadd.f32 %v2503, %v2543
    %v2545 = vpop.f32.mrb[0].mxu0
    %v2546 = vpop.f32.mrb[0].mxu0
    %2547 = vdwg.mxu0
    %2548 = vmatprep.subr.bf16.mxu0 %v1944
    %2549 = vmatpush1.bf16.msra.mxu0 %v1943
    %2550 = vmatprep.subr.bf16.mxu0 %v1948
    %2551 = vmatpush1.bf16.msra.mxu0 %v1947
    %2552 = vmatprep.subr.bf16.mxu0 %v1952
    %2553 = vmatpush1.bf16.msra.mxu0 %v1951
    %2554 = vmatprep.subr.bf16.mxu0 %v1956
    %2555 = vmatpush1.bf16.msra.mxu0 %v1955
    %2556 = vmatprep.subr.bf16.mxu0 %v1960
    %2557 = vmatpush1.bf16.msra.mxu0 %v1959
    %2558 = vmatprep.subr.bf16.mxu0 %v1964
    %2559 = vmatpush1.bf16.msra.mxu0 %v1963
    %2560 = vmatprep.subr.bf16.mxu0 %v1968
    %2561 = vmatpush1.bf16.msra.mxu0 %v1967
    %2562 = vmatprep.subr.bf16.mxu0 %v1972
    %2563 = vmatpush1.bf16.msra.mxu0 %v1971
    %2564 = vmatprep.subr.bf16.mxu0 %v1976
    %2565 = vmatpush1.bf16.msra.mxu0 %v1975
    %2566 = vmatprep.subr.bf16.mxu0 %v1980
    %2567 = vmatpush1.bf16.msra.mxu0 %v1979
    %2568 = vmatprep.subr.bf16.mxu0 %v1984
    %2569 = vmatpush1.bf16.msra.mxu0 %v1983
    %2570 = vmatprep.subr.bf16.mxu0 %v1988
    %2571 = vmatpush1.bf16.msra.mxu0 %v1987
    %2572 = vmatprep.subr.bf16.mxu0 %v1992
    %2573 = vmatpush1.bf16.msra.mxu0 %v1991
    %2574 = vmatprep.subr.bf16.mxu0 %v1996
    %2575 = vmatpush1.bf16.msra.mxu0 %v1995
    %2576 = vmatprep.subr.bf16.mxu0 %v2000
    %2577 = vmatpush1.bf16.msra.mxu0 %v1999
    %2578 = vmatprep.subr.bf16.mxu0 %v2004
    %2579 = vmatpush1.bf16.msra.mxu0 %v2003
    %2580 = vmatprep.mubr.bf16.mxu0 %v702
    %2581 = vmatmul.mubr.bf16.gmra.mrb[0].mxu0 %v701
    %v2582 = vpop.f32.mrb[0].mxu0
    %v2583 = vadd.f32 %v2542, %v2582
    %v2584 = vpop.f32.mrb[0].mxu0
    %v2585 = vadd.f32 %v2544, %v2584
    %v2586 = vpop.f32.mrb[0].mxu0
    %v2587 = vpop.f32.mrb[0].mxu0
    %2588 = vdwg.mxu0
    %v2589 = vmax.f32 %v2419, 0.0
    %v2590 = vmax.f32 %v2421, 0.0
    %v2591 = vmax.f32 %v2583, 0.0
    %v2592 = vmax.f32 %v2585, 0.0
    %v2593 = vpack.c.bf16 %v2589, %v2589
    %v2594 = vpack.c.bf16 %v2590, %v2590
    %v2595 = vpack.c.bf16 %v2591, %v2591
    %v2596 = vpack.c.bf16 %v2592, %v2592
    %v2597 = vld [vmem:[#allocation7] sm:$0xff]
    %v2598 = vld [vmem:[#allocation7 + $0x8] sm:$0xff]
    %v2599 = vld [vmem:[#allocation7 + $0x10] sm:$0xff]
    %v2600 = vld [vmem:[#allocation7 + $0x18] sm:$0xff]
    %v2601 = vld [vmem:[#allocation7 + $0x20] sm:$0xff]
    %v2602 = vld [vmem:[#allocation7 + $0x28] sm:$0xff]
    %v2603 = vld [vmem:[#allocation7 + $0x30] sm:$0xff]
    %v2604 = vld [vmem:[#allocation7 + $0x38] sm:$0xff]
    %v2605 = vld [vmem:[#allocation7 + $0x40] sm:$0xff]
    %v2606 = vld [vmem:[#allocation7 + $0x48] sm:$0xff]
    %v2607 = vld [vmem:[#allocation7 + $0x50] sm:$0xff]
    %v2608 = vld [vmem:[#allocation7 + $0x58] sm:$0xff]
    %v2609 = vld [vmem:[#allocation7 + $0x60] sm:$0xff]
    %v2610 = vld [vmem:[#allocation7 + $0x68] sm:$0xff]
    %v2611 = vld [vmem:[#allocation7 + $0x70] sm:$0xff]
    %v2612 = vld [vmem:[#allocation7 + $0x78] sm:$0xff]
    %v2613 = vld [vmem:[#allocation7 + $0x80] sm:$0xff]
    %v2614 = vld [vmem:[#allocation7 + $0x88] sm:$0xff]
    %v2615 = vld [vmem:[#allocation7 + $0x90] sm:$0xff]
    %v2616 = vld [vmem:[#allocation7 + $0x98] sm:$0xff]
    %v2617 = vld [vmem:[#allocation7 + $0xa0] sm:$0xff]
    %v2618 = vld [vmem:[#allocation7 + $0xa8] sm:$0xff]
    %v2619 = vld [vmem:[#allocation7 + $0xb0] sm:$0xff]
    %v2620 = vld [vmem:[#allocation7 + $0xb8] sm:$0xff]
    %v2621 = vld [vmem:[#allocation7 + $0xc0] sm:$0xff]
    %v2622 = vld [vmem:[#allocation7 + $0xc8] sm:$0xff]
    %v2623 = vld [vmem:[#allocation7 + $0xd0] sm:$0xff]
    %v2624 = vld [vmem:[#allocation7 + $0xd8] sm:$0xff]
    %v2625 = vld [vmem:[#allocation7 + $0xe0] sm:$0xff]
    %v2626 = vld [vmem:[#allocation7 + $0xe8] sm:$0xff]
    %v2627 = vld [vmem:[#allocation7 + $0xf0] sm:$0xff]
    %v2628 = vld [vmem:[#allocation7 + $0xf8] sm:$0xff]
    %v2629 = vld [vmem:[#allocation7 + $0x100] sm:$0xff]
    %v2630 = vld [vmem:[#allocation7 + $0x108] sm:$0xff]
    %v2631 = vld [vmem:[#allocation7 + $0x110] sm:$0xff]
    %v2632 = vld [vmem:[#allocation7 + $0x118] sm:$0xff]
    %v2633 = vld [vmem:[#allocation7 + $0x120] sm:$0xff]
    %v2634 = vld [vmem:[#allocation7 + $0x128] sm:$0xff]
    %v2635 = vld [vmem:[#allocation7 + $0x130] sm:$0xff]
    %v2636 = vld [vmem:[#allocation7 + $0x138] sm:$0xff]
    %v2637 = vld [vmem:[#allocation7 + $0x140] sm:$0xff]
    %v2638 = vld [vmem:[#allocation7 + $0x148] sm:$0xff]
    %v2639 = vld [vmem:[#allocation7 + $0x150] sm:$0xff]
    %v2640 = vld [vmem:[#allocation7 + $0x158] sm:$0xff]
    %v2641 = vld [vmem:[#allocation7 + $0x160] sm:$0xff]
    %v2642 = vld [vmem:[#allocation7 + $0x168] sm:$0xff]
    %v2643 = vld [vmem:[#allocation7 + $0x170] sm:$0xff]
    %v2644 = vld [vmem:[#allocation7 + $0x178] sm:$0xff]
    %v2645 = vld [vmem:[#allocation7 + $0x180] sm:$0xff]
    %v2646 = vld [vmem:[#allocation7 + $0x188] sm:$0xff]
    %v2647 = vld [vmem:[#allocation7 + $0x190] sm:$0xff]
    %v2648 = vld [vmem:[#allocation7 + $0x198] sm:$0xff]
    %v2649 = vld [vmem:[#allocation7 + $0x1a0] sm:$0xff]
    %v2650 = vld [vmem:[#allocation7 + $0x1a8] sm:$0xff]
    %v2651 = vld [vmem:[#allocation7 + $0x1b0] sm:$0xff]
    %v2652 = vld [vmem:[#allocation7 + $0x1b8] sm:$0xff]
    %v2653 = vld [vmem:[#allocation7 + $0x1c0] sm:$0xff]
    %v2654 = vld [vmem:[#allocation7 + $0x1c8] sm:$0xff]
    %v2655 = vld [vmem:[#allocation7 + $0x1d0] sm:$0xff]
    %v2656 = vld [vmem:[#allocation7 + $0x1d8] sm:$0xff]
    %v2657 = vld [vmem:[#allocation7 + $0x1e0] sm:$0xff]
    %v2658 = vld [vmem:[#allocation7 + $0x1e8] sm:$0xff]
    %v2659 = vld [vmem:[#allocation7 + $0x1f0] sm:$0xff]
    %v2660 = vld [vmem:[#allocation7 + $0x1f8] sm:$0xff]
    %v2661 = vld [vmem:[#allocation7 + $0x200] sm:$0xff]
    %v2662 = vld [vmem:[#allocation7 + $0x208] sm:$0xff]
    %v2663 = vld [vmem:[#allocation7 + $0x210] sm:$0xff]
    %v2664 = vld [vmem:[#allocation7 + $0x218] sm:$0xff]
    %v2665 = vld [vmem:[#allocation7 + $0x220] sm:$0xff]
    %v2666 = vld [vmem:[#allocation7 + $0x228] sm:$0xff]
    %v2667 = vld [vmem:[#allocation7 + $0x230] sm:$0xff]
    %v2668 = vld [vmem:[#allocation7 + $0x238] sm:$0xff]
    %v2669 = vld [vmem:[#allocation7 + $0x240] sm:$0xff]
    %v2670 = vld [vmem:[#allocation7 + $0x248] sm:$0xff]
    %v2671 = vld [vmem:[#allocation7 + $0x250] sm:$0xff]
    %v2672 = vld [vmem:[#allocation7 + $0x258] sm:$0xff]
    %v2673 = vld [vmem:[#allocation7 + $0x260] sm:$0xff]
    %v2674 = vld [vmem:[#allocation7 + $0x268] sm:$0xff]
    %v2675 = vld [vmem:[#allocation7 + $0x270] sm:$0xff]
    %v2676 = vld [vmem:[#allocation7 + $0x278] sm:$0xff]
    %v2677 = vld [vmem:[#allocation7 + $0x280] sm:$0xff]
    %v2678 = vld [vmem:[#allocation7 + $0x288] sm:$0xff]
    %v2679 = vld [vmem:[#allocation7 + $0x290] sm:$0xff]
    %v2680 = vld [vmem:[#allocation7 + $0x298] sm:$0xff]
    %v2681 = vld [vmem:[#allocation7 + $0x2a0] sm:$0xff]
    %v2682 = vld [vmem:[#allocation7 + $0x2a8] sm:$0xff]
    %v2683 = vld [vmem:[#allocation7 + $0x2b0] sm:$0xff]
    %v2684 = vld [vmem:[#allocation7 + $0x2b8] sm:$0xff]
    %v2685 = vld [vmem:[#allocation7 + $0x2c0] sm:$0xff]
    %v2686 = vld [vmem:[#allocation7 + $0x2c8] sm:$0xff]
    %v2687 = vld [vmem:[#allocation7 + $0x2d0] sm:$0xff]
    %v2688 = vld [vmem:[#allocation7 + $0x2d8] sm:$0xff]
    %v2689 = vld [vmem:[#allocation7 + $0x2e0] sm:$0xff]
    %v2690 = vld [vmem:[#allocation7 + $0x2e8] sm:$0xff]
    %v2691 = vld [vmem:[#allocation7 + $0x2f0] sm:$0xff]
    %v2692 = vld [vmem:[#allocation7 + $0x2f8] sm:$0xff]
    %v2693 = vld [vmem:[#allocation7 + $0x300] sm:$0xff]
    %v2694 = vld [vmem:[#allocation7 + $0x308] sm:$0xff]
    %v2695 = vld [vmem:[#allocation7 + $0x310] sm:$0xff]
    %v2696 = vld [vmem:[#allocation7 + $0x318] sm:$0xff]
    %v2697 = vld [vmem:[#allocation7 + $0x320] sm:$0xff]
    %v2698 = vld [vmem:[#allocation7 + $0x328] sm:$0xff]
    %v2699 = vld [vmem:[#allocation7 + $0x330] sm:$0xff]
    %v2700 = vld [vmem:[#allocation7 + $0x338] sm:$0xff]
    %v2701 = vld [vmem:[#allocation7 + $0x340] sm:$0xff]
    %v2702 = vld [vmem:[#allocation7 + $0x348] sm:$0xff]
    %v2703 = vld [vmem:[#allocation7 + $0x350] sm:$0xff]
    %v2704 = vld [vmem:[#allocation7 + $0x358] sm:$0xff]
    %v2705 = vld [vmem:[#allocation7 + $0x360] sm:$0xff]
    %v2706 = vld [vmem:[#allocation7 + $0x368] sm:$0xff]
    %v2707 = vld [vmem:[#allocation7 + $0x370] sm:$0xff]
    %v2708 = vld [vmem:[#allocation7 + $0x378] sm:$0xff]
    %v2709 = vld [vmem:[#allocation7 + $0x380] sm:$0xff]
    %v2710 = vld [vmem:[#allocation7 + $0x388] sm:$0xff]
    %v2711 = vld [vmem:[#allocation7 + $0x390] sm:$0xff]
    %v2712 = vld [vmem:[#allocation7 + $0x398] sm:$0xff]
    %v2713 = vld [vmem:[#allocation7 + $0x3a0] sm:$0xff]
    %v2714 = vld [vmem:[#allocation7 + $0x3a8] sm:$0xff]
    %v2715 = vld [vmem:[#allocation7 + $0x3b0] sm:$0xff]
    %v2716 = vld [vmem:[#allocation7 + $0x3b8] sm:$0xff]
    %v2717 = vld [vmem:[#allocation7 + $0x3c0] sm:$0xff]
    %v2718 = vld [vmem:[#allocation7 + $0x3c8] sm:$0xff]
    %v2719 = vld [vmem:[#allocation7 + $0x3d0] sm:$0xff]
    %v2720 = vld [vmem:[#allocation7 + $0x3d8] sm:$0xff]
    %v2721 = vld [vmem:[#allocation7 + $0x3e0] sm:$0xff]
    %v2722 = vld [vmem:[#allocation7 + $0x3e8] sm:$0xff]
    %v2723 = vld [vmem:[#allocation7 + $0x3f0] sm:$0xff]
    %v2724 = vld [vmem:[#allocation7 + $0x3f8] sm:$0xff]
    %v2725 = vld [vmem:[%s6] sm:$0xf]
    %v2727 = vlaneseq
    %v2728 = vshrl.u32 %v2727, 7
    %v2729 = vsub.s32 0, %v2728
    %v2730 = vrot.slane %v2725, %v2729
    %v2731 = vlaneseq
    %v2732 = vshrl.u32 %v2731, 7
    %v2733 = vsub.s32 1, %v2732
    %v2734 = vrot.slane %v2725, %v2733
    %v2735 = vlaneseq
    %v2736 = vshrl.u32 %v2735, 7
    %v2737 = vsub.s32 2, %v2736
    %v2738 = vrot.slane %v2725, %v2737
    %v2739 = vlaneseq
    %v2740 = vshrl.u32 %v2739, 7
    %v2741 = vsub.s32 3, %v2740
    %v2742 = vrot.slane %v2725, %v2741
    %v2875 = vunpack.c.l.b16 %v2597
    %v2876 = vunpack.c.h.b16 %v2597
    %v2877 = vunpack.c.l.b16 %v2598
    %v2878 = vunpack.c.h.b16 %v2598
    %v2879 = vunpack.c.l.b16 %v2599
    %v2880 = vunpack.c.h.b16 %v2599
    %v2881 = vunpack.c.l.b16 %v2600
    %v2882 = vunpack.c.h.b16 %v2600
    %v2883 = vunpack.c.l.b16 %v2601
    %v2884 = vunpack.c.h.b16 %v2601
    %v2885 = vunpack.c.l.b16 %v2602
    %v2886 = vunpack.c.h.b16 %v2602
    %v2887 = vunpack.c.l.b16 %v2603
    %v2888 = vunpack.c.h.b16 %v2603
    %v2889 = vunpack.c.l.b16 %v2604
    %v2890 = vunpack.c.h.b16 %v2604
    %v2891 = vunpack.c.l.b16 %v2605
    %v2892 = vunpack.c.h.b16 %v2605
    %v2893 = vunpack.c.l.b16 %v2606
    %v2894 = vunpack.c.h.b16 %v2606
    %v2895 = vunpack.c.l.b16 %v2607
    %v2896 = vunpack.c.h.b16 %v2607
    %v2897 = vunpack.c.l.b16 %v2608
    %v2898 = vunpack.c.h.b16 %v2608
    %v2899 = vunpack.c.l.b16 %v2609
    %v2900 = vunpack.c.h.b16 %v2609
    %v2901 = vunpack.c.l.b16 %v2610
    %v2902 = vunpack.c.h.b16 %v2610
    %v2903 = vunpack.c.l.b16 %v2611
    %v2904 = vunpack.c.h.b16 %v2611
    %v2905 = vunpack.c.l.b16 %v2612
    %v2906 = vunpack.c.h.b16 %v2612
    %v2907 = vunpack.c.l.b16 %v2613
    %v2908 = vunpack.c.h.b16 %v2613
    %v2909 = vunpack.c.l.b16 %v2614
    %v2910 = vunpack.c.h.b16 %v2614
    %v2911 = vunpack.c.l.b16 %v2615
    %v2912 = vunpack.c.h.b16 %v2615
    %v2913 = vunpack.c.l.b16 %v2616
    %v2914 = vunpack.c.h.b16 %v2616
    %v2915 = vunpack.c.l.b16 %v2617
    %v2916 = vunpack.c.h.b16 %v2617
    %v2917 = vunpack.c.l.b16 %v2618
    %v2918 = vunpack.c.h.b16 %v2618
    %v2919 = vunpack.c.l.b16 %v2619
    %v2920 = vunpack.c.h.b16 %v2619
    %v2921 = vunpack.c.l.b16 %v2620
    %v2922 = vunpack.c.h.b16 %v2620
    %v2923 = vunpack.c.l.b16 %v2621
    %v2924 = vunpack.c.h.b16 %v2621
    %v2925 = vunpack.c.l.b16 %v2622
    %v2926 = vunpack.c.h.b16 %v2622
    %v2927 = vunpack.c.l.b16 %v2623
    %v2928 = vunpack.c.h.b16 %v2623
    %v2929 = vunpack.c.l.b16 %v2624
    %v2930 = vunpack.c.h.b16 %v2624
    %v2931 = vunpack.c.l.b16 %v2625
    %v2932 = vunpack.c.h.b16 %v2625
    %v2933 = vunpack.c.l.b16 %v2626
    %v2934 = vunpack.c.h.b16 %v2626
    %v2935 = vunpack.c.l.b16 %v2627
    %v2936 = vunpack.c.h.b16 %v2627
    %v2937 = vunpack.c.l.b16 %v2628
    %v2938 = vunpack.c.h.b16 %v2628
    %v2939 = vunpack.c.l.b16 %v2629
    %v2940 = vunpack.c.h.b16 %v2629
    %v2941 = vunpack.c.l.b16 %v2630
    %v2942 = vunpack.c.h.b16 %v2630
    %v2943 = vunpack.c.l.b16 %v2631
    %v2944 = vunpack.c.h.b16 %v2631
    %v2945 = vunpack.c.l.b16 %v2632
    %v2946 = vunpack.c.h.b16 %v2632
    %v2947 = vunpack.c.l.b16 %v2633
    %v2948 = vunpack.c.h.b16 %v2633
    %v2949 = vunpack.c.l.b16 %v2634
    %v2950 = vunpack.c.h.b16 %v2634
    %v2951 = vunpack.c.l.b16 %v2635
    %v2952 = vunpack.c.h.b16 %v2635
    %v2953 = vunpack.c.l.b16 %v2636
    %v2954 = vunpack.c.h.b16 %v2636
    %v2955 = vunpack.c.l.b16 %v2637
    %v2956 = vunpack.c.h.b16 %v2637
    %v2957 = vunpack.c.l.b16 %v2638
    %v2958 = vunpack.c.h.b16 %v2638
    %v2959 = vunpack.c.l.b16 %v2639
    %v2960 = vunpack.c.h.b16 %v2639
    %v2961 = vunpack.c.l.b16 %v2640
    %v2962 = vunpack.c.h.b16 %v2640
    %v2963 = vunpack.c.l.b16 %v2641
    %v2964 = vunpack.c.h.b16 %v2641
    %v2965 = vunpack.c.l.b16 %v2642
    %v2966 = vunpack.c.h.b16 %v2642
    %v2967 = vunpack.c.l.b16 %v2643
    %v2968 = vunpack.c.h.b16 %v2643
    %v2969 = vunpack.c.l.b16 %v2644
    %v2970 = vunpack.c.h.b16 %v2644
    %v2971 = vunpack.c.l.b16 %v2645
    %v2972 = vunpack.c.h.b16 %v2645
    %v2973 = vunpack.c.l.b16 %v2646
    %v2974 = vunpack.c.h.b16 %v2646
    %v2975 = vunpack.c.l.b16 %v2647
    %v2976 = vunpack.c.h.b16 %v2647
    %v2977 = vunpack.c.l.b16 %v2648
    %v2978 = vunpack.c.h.b16 %v2648
    %v2979 = vunpack.c.l.b16 %v2649
    %v2980 = vunpack.c.h.b16 %v2649
    %v2981 = vunpack.c.l.b16 %v2650
    %v2982 = vunpack.c.h.b16 %v2650
    %v2983 = vunpack.c.l.b16 %v2651
    %v2984 = vunpack.c.h.b16 %v2651
    %v2985 = vunpack.c.l.b16 %v2652
    %v2986 = vunpack.c.h.b16 %v2652
    %v2987 = vunpack.c.l.b16 %v2653
    %v2988 = vunpack.c.h.b16 %v2653
    %v2989 = vunpack.c.l.b16 %v2654
    %v2990 = vunpack.c.h.b16 %v2654
    %v2991 = vunpack.c.l.b16 %v2655
    %v2992 = vunpack.c.h.b16 %v2655
    %v2993 = vunpack.c.l.b16 %v2656
    %v2994 = vunpack.c.h.b16 %v2656
    %v2995 = vunpack.c.l.b16 %v2657
    %v2996 = vunpack.c.h.b16 %v2657
    %v2997 = vunpack.c.l.b16 %v2658
    %v2998 = vunpack.c.h.b16 %v2658
    %v2999 = vunpack.c.l.b16 %v2659
    %v3000 = vunpack.c.h.b16 %v2659
    %v3001 = vunpack.c.l.b16 %v2660
    %v3002 = vunpack.c.h.b16 %v2660
    %v3003 = vunpack.c.l.b16 %v2661
    %v3004 = vunpack.c.h.b16 %v2661
    %v3005 = vunpack.c.l.b16 %v2662
    %v3006 = vunpack.c.h.b16 %v2662
    %v3007 = vunpack.c.l.b16 %v2663
    %v3008 = vunpack.c.h.b16 %v2663
    %v3009 = vunpack.c.l.b16 %v2664
    %v3010 = vunpack.c.h.b16 %v2664
    %v3011 = vunpack.c.l.b16 %v2665
    %v3012 = vunpack.c.h.b16 %v2665
    %v3013 = vunpack.c.l.b16 %v2666
    %v3014 = vunpack.c.h.b16 %v2666
    %v3015 = vunpack.c.l.b16 %v2667
    %v3016 = vunpack.c.h.b16 %v2667
    %v3017 = vunpack.c.l.b16 %v2668
    %v3018 = vunpack.c.h.b16 %v2668
    %v3019 = vunpack.c.l.b16 %v2669
    %v3020 = vunpack.c.h.b16 %v2669
    %v3021 = vunpack.c.l.b16 %v2670
    %v3022 = vunpack.c.h.b16 %v2670
    %v3023 = vunpack.c.l.b16 %v2671
    %v3024 = vunpack.c.h.b16 %v2671
    %v3025 = vunpack.c.l.b16 %v2672
    %v3026 = vunpack.c.h.b16 %v2672
    %v3027 = vunpack.c.l.b16 %v2673
    %v3028 = vunpack.c.h.b16 %v2673
    %v3029 = vunpack.c.l.b16 %v2674
    %v3030 = vunpack.c.h.b16 %v2674
    %v3031 = vunpack.c.l.b16 %v2675
    %v3032 = vunpack.c.h.b16 %v2675
    %v3033 = vunpack.c.l.b16 %v2676
    %v3034 = vunpack.c.h.b16 %v2676
    %v3035 = vunpack.c.l.b16 %v2677
    %v3036 = vunpack.c.h.b16 %v2677
    %v3037 = vunpack.c.l.b16 %v2678
    %v3038 = vunpack.c.h.b16 %v2678
    %v3039 = vunpack.c.l.b16 %v2679
    %v3040 = vunpack.c.h.b16 %v2679
    %v3041 = vunpack.c.l.b16 %v2680
    %v3042 = vunpack.c.h.b16 %v2680
    %v3043 = vunpack.c.l.b16 %v2681
    %v3044 = vunpack.c.h.b16 %v2681
    %v3045 = vunpack.c.l.b16 %v2682
    %v3046 = vunpack.c.h.b16 %v2682
    %v3047 = vunpack.c.l.b16 %v2683
    %v3048 = vunpack.c.h.b16 %v2683
    %v3049 = vunpack.c.l.b16 %v2684
    %v3050 = vunpack.c.h.b16 %v2684
    %v3051 = vunpack.c.l.b16 %v2685
    %v3052 = vunpack.c.h.b16 %v2685
    %v3053 = vunpack.c.l.b16 %v2686
    %v3054 = vunpack.c.h.b16 %v2686
    %v3055 = vunpack.c.l.b16 %v2687
    %v3056 = vunpack.c.h.b16 %v2687
    %v3057 = vunpack.c.l.b16 %v2688
    %v3058 = vunpack.c.h.b16 %v2688
    %v3059 = vunpack.c.l.b16 %v2689
    %v3060 = vunpack.c.h.b16 %v2689
    %v3061 = vunpack.c.l.b16 %v2690
    %v3062 = vunpack.c.h.b16 %v2690
    %v3063 = vunpack.c.l.b16 %v2691
    %v3064 = vunpack.c.h.b16 %v2691
    %v3065 = vunpack.c.l.b16 %v2692
    %v3066 = vunpack.c.h.b16 %v2692
    %v3067 = vunpack.c.l.b16 %v2693
    %v3068 = vunpack.c.h.b16 %v2693
    %v3069 = vunpack.c.l.b16 %v2694
    %v3070 = vunpack.c.h.b16 %v2694
    %v3071 = vunpack.c.l.b16 %v2695
    %v3072 = vunpack.c.h.b16 %v2695
    %v3073 = vunpack.c.l.b16 %v2696
    %v3074 = vunpack.c.h.b16 %v2696
    %v3075 = vunpack.c.l.b16 %v2697
    %v3076 = vunpack.c.h.b16 %v2697
    %v3077 = vunpack.c.l.b16 %v2698
    %v3078 = vunpack.c.h.b16 %v2698
    %v3079 = vunpack.c.l.b16 %v2699
    %v3080 = vunpack.c.h.b16 %v2699
    %v3081 = vunpack.c.l.b16 %v2700
    %v3082 = vunpack.c.h.b16 %v2700
    %v3083 = vunpack.c.l.b16 %v2701
    %v3084 = vunpack.c.h.b16 %v2701
    %v3085 = vunpack.c.l.b16 %v2702
    %v3086 = vunpack.c.h.b16 %v2702
    %v3087 = vunpack.c.l.b16 %v2703
    %v3088 = vunpack.c.h.b16 %v2703
    %v3089 = vunpack.c.l.b16 %v2704
    %v3090 = vunpack.c.h.b16 %v2704
    %v3091 = vunpack.c.l.b16 %v2705
    %v3092 = vunpack.c.h.b16 %v2705
    %v3093 = vunpack.c.l.b16 %v2706
    %v3094 = vunpack.c.h.b16 %v2706
    %v3095 = vunpack.c.l.b16 %v2707
    %v3096 = vunpack.c.h.b16 %v2707
    %v3097 = vunpack.c.l.b16 %v2708
    %v3098 = vunpack.c.h.b16 %v2708
    %v3099 = vunpack.c.l.b16 %v2709
    %v3100 = vunpack.c.h.b16 %v2709
    %v3101 = vunpack.c.l.b16 %v2710
    %v3102 = vunpack.c.h.b16 %v2710
    %v3103 = vunpack.c.l.b16 %v2711
    %v3104 = vunpack.c.h.b16 %v2711
    %v3105 = vunpack.c.l.b16 %v2712
    %v3106 = vunpack.c.h.b16 %v2712
    %v3107 = vunpack.c.l.b16 %v2713
    %v3108 = vunpack.c.h.b16 %v2713
    %v3109 = vunpack.c.l.b16 %v2714
    %v3110 = vunpack.c.h.b16 %v2714
    %v3111 = vunpack.c.l.b16 %v2715
    %v3112 = vunpack.c.h.b16 %v2715
    %v3113 = vunpack.c.l.b16 %v2716
    %v3114 = vunpack.c.h.b16 %v2716
    %v3115 = vunpack.c.l.b16 %v2717
    %v3116 = vunpack.c.h.b16 %v2717
    %v3117 = vunpack.c.l.b16 %v2718
    %v3118 = vunpack.c.h.b16 %v2718
    %v3119 = vunpack.c.l.b16 %v2719
    %v3120 = vunpack.c.h.b16 %v2719
    %v3121 = vunpack.c.l.b16 %v2720
    %v3122 = vunpack.c.h.b16 %v2720
    %v3123 = vunpack.c.l.b16 %v2721
    %v3124 = vunpack.c.h.b16 %v2721
    %v3125 = vunpack.c.l.b16 %v2722
    %v3126 = vunpack.c.h.b16 %v2722
    %v3127 = vunpack.c.l.b16 %v2723
    %v3128 = vunpack.c.h.b16 %v2723
    %v3129 = vunpack.c.l.b16 %v2724
    %v3130 = vunpack.c.h.b16 %v2724
    %v3131 = vpack.c.b16 %v2879, %v2875
    %v3132 = vpack.c.b16 %v2880, %v2876
    %v3133 = vpack.c.b16 %v2881, %v2877
    %v3134 = vpack.c.b16 %v2882, %v2878
    %v3135 = vpack.c.b16 %v2887, %v2883
    %v3136 = vpack.c.b16 %v2888, %v2884
    %v3137 = vpack.c.b16 %v2889, %v2885
    %v3138 = vpack.c.b16 %v2890, %v2886
    %v3139 = vpack.c.b16 %v2895, %v2891
    %v3140 = vpack.c.b16 %v2896, %v2892
    %v3141 = vpack.c.b16 %v2897, %v2893
    %v3142 = vpack.c.b16 %v2898, %v2894
    %v3143 = vpack.c.b16 %v2903, %v2899
    %v3144 = vpack.c.b16 %v2904, %v2900
    %v3145 = vpack.c.b16 %v2905, %v2901
    %v3146 = vpack.c.b16 %v2906, %v2902
    %v3147 = vpack.c.b16 %v2911, %v2907
    %v3148 = vpack.c.b16 %v2912, %v2908
    %v3149 = vpack.c.b16 %v2913, %v2909
    %v3150 = vpack.c.b16 %v2914, %v2910
    %v3151 = vpack.c.b16 %v2919, %v2915
    %v3152 = vpack.c.b16 %v2920, %v2916
    %v3153 = vpack.c.b16 %v2921, %v2917
    %v3154 = vpack.c.b16 %v2922, %v2918
    %v3155 = vpack.c.b16 %v2927, %v2923
    %v3156 = vpack.c.b16 %v2928, %v2924
    %v3157 = vpack.c.b16 %v2929, %v2925
    %v3158 = vpack.c.b16 %v2930, %v2926
    %v3159 = vpack.c.b16 %v2935, %v2931
    %v3160 = vpack.c.b16 %v2936, %v2932
    %v3161 = vpack.c.b16 %v2937, %v2933
    %v3162 = vpack.c.b16 %v2938, %v2934
    %v3163 = vpack.c.b16 %v2943, %v2939
    %v3164 = vpack.c.b16 %v2944, %v2940
    %v3165 = vpack.c.b16 %v2945, %v2941
    %v3166 = vpack.c.b16 %v2946, %v2942
    %v3167 = vpack.c.b16 %v2951, %v2947
    %v3168 = vpack.c.b16 %v2952, %v2948
    %v3169 = vpack.c.b16 %v2953, %v2949
    %v3170 = vpack.c.b16 %v2954, %v2950
    %v3171 = vpack.c.b16 %v2959, %v2955
    %v3172 = vpack.c.b16 %v2960, %v2956
    %v3173 = vpack.c.b16 %v2961, %v2957
    %v3174 = vpack.c.b16 %v2962, %v2958
    %v3175 = vpack.c.b16 %v2967, %v2963
    %v3176 = vpack.c.b16 %v2968, %v2964
    %v3177 = vpack.c.b16 %v2969, %v2965
    %v3178 = vpack.c.b16 %v2970, %v2966
    %v3179 = vpack.c.b16 %v2975, %v2971
    %v3180 = vpack.c.b16 %v2976, %v2972
    %v3181 = vpack.c.b16 %v2977, %v2973
    %v3182 = vpack.c.b16 %v2978, %v2974
    %v3183 = vpack.c.b16 %v2983, %v2979
    %v3184 = vpack.c.b16 %v2984, %v2980
    %v3185 = vpack.c.b16 %v2985, %v2981
    %v3186 = vpack.c.b16 %v2986, %v2982
    %v3187 = vpack.c.b16 %v2991, %v2987
    %v3188 = vpack.c.b16 %v2992, %v2988
    %v3189 = vpack.c.b16 %v2993, %v2989
    %v3190 = vpack.c.b16 %v2994, %v2990
    %v3191 = vpack.c.b16 %v2999, %v2995
    %v3192 = vpack.c.b16 %v3000, %v2996
    %v3193 = vpack.c.b16 %v3001, %v2997
    %v3194 = vpack.c.b16 %v3002, %v2998
    %v3195 = vpack.c.b16 %v3007, %v3003
    %v3196 = vpack.c.b16 %v3008, %v3004
    %v3197 = vpack.c.b16 %v3009, %v3005
    %v3198 = vpack.c.b16 %v3010, %v3006
    %v3199 = vpack.c.b16 %v3015, %v3011
    %v3200 = vpack.c.b16 %v3016, %v3012
    %v3201 = vpack.c.b16 %v3017, %v3013
    %v3202 = vpack.c.b16 %v3018, %v3014
    %v3203 = vpack.c.b16 %v3023, %v3019
    %v3204 = vpack.c.b16 %v3024, %v3020
    %v3205 = vpack.c.b16 %v3025, %v3021
    %v3206 = vpack.c.b16 %v3026, %v3022
    %v3207 = vpack.c.b16 %v3031, %v3027
    %v3208 = vpack.c.b16 %v3032, %v3028
    %v3209 = vpack.c.b16 %v3033, %v3029
    %v3210 = vpack.c.b16 %v3034, %v3030
    %v3211 = vpack.c.b16 %v3039, %v3035
    %v3212 = vpack.c.b16 %v3040, %v3036
    %v3213 = vpack.c.b16 %v3041, %v3037
    %v3214 = vpack.c.b16 %v3042, %v3038
    %v3215 = vpack.c.b16 %v3047, %v3043
    %v3216 = vpack.c.b16 %v3048, %v3044
    %v3217 = vpack.c.b16 %v3049, %v3045
    %v3218 = vpack.c.b16 %v3050, %v3046
    %v3219 = vpack.c.b16 %v3055, %v3051
    %v3220 = vpack.c.b16 %v3056, %v3052
    %v3221 = vpack.c.b16 %v3057, %v3053
    %v3222 = vpack.c.b16 %v3058, %v3054
    %v3223 = vpack.c.b16 %v3063, %v3059
    %v3224 = vpack.c.b16 %v3064, %v3060
    %v3225 = vpack.c.b16 %v3065, %v3061
    %v3226 = vpack.c.b16 %v3066, %v3062
    %v3227 = vpack.c.b16 %v3071, %v3067
    %v3228 = vpack.c.b16 %v3072, %v3068
    %v3229 = vpack.c.b16 %v3073, %v3069
    %v3230 = vpack.c.b16 %v3074, %v3070
    %v3231 = vpack.c.b16 %v3079, %v3075
    %v3232 = vpack.c.b16 %v3080, %v3076
    %v3233 = vpack.c.b16 %v3081, %v3077
    %v3234 = vpack.c.b16 %v3082, %v3078
    %v3235 = vpack.c.b16 %v3087, %v3083
    %v3236 = vpack.c.b16 %v3088, %v3084
    %v3237 = vpack.c.b16 %v3089, %v3085
    %v3238 = vpack.c.b16 %v3090, %v3086
    %v3239 = vpack.c.b16 %v3095, %v3091
    %v3240 = vpack.c.b16 %v3096, %v3092
    %v3241 = vpack.c.b16 %v3097, %v3093
    %v3242 = vpack.c.b16 %v3098, %v3094
    %v3243 = vpack.c.b16 %v3103, %v3099
    %v3244 = vpack.c.b16 %v3104, %v3100
    %v3245 = vpack.c.b16 %v3105, %v3101
    %v3246 = vpack.c.b16 %v3106, %v3102
    %v3247 = vpack.c.b16 %v3111, %v3107
    %v3248 = vpack.c.b16 %v3112, %v3108
    %v3249 = vpack.c.b16 %v3113, %v3109
    %v3250 = vpack.c.b16 %v3114, %v3110
    %v3251 = vpack.c.b16 %v3119, %v3115
    %v3252 = vpack.c.b16 %v3120, %v3116
    %v3253 = vpack.c.b16 %v3121, %v3117
    %v3254 = vpack.c.b16 %v3122, %v3118
    %v3255 = vpack.c.b16 %v3127, %v3123
    %v3256 = vpack.c.b16 %v3128, %v3124
    %v3257 = vpack.c.b16 %v3129, %v3125
    %v3258 = vpack.c.b16 %v3130, %v3126
    %3387 = vmatprep.subr.bf16.mxu0 %v3132
    %3388 = vmatpush1.bf16.msra.mxu0 %v3131
    %3389 = vmatprep.subr.bf16.mxu0 %v3136
    %3390 = vmatpush1.bf16.msra.mxu0 %v3135
    %3391 = vmatprep.subr.bf16.mxu0 %v3140
    %3392 = vmatpush1.bf16.msra.mxu0 %v3139
    %3393 = vmatprep.subr.bf16.mxu0 %v3144
    %3394 = vmatpush1.bf16.msra.mxu0 %v3143
    %3395 = vmatprep.subr.bf16.mxu0 %v3148
    %3396 = vmatpush1.bf16.msra.mxu0 %v3147
    %3397 = vmatprep.subr.bf16.mxu0 %v3152
    %3398 = vmatpush1.bf16.msra.mxu0 %v3151
    %3399 = vmatprep.subr.bf16.mxu0 %v3156
    %3400 = vmatpush1.bf16.msra.mxu0 %v3155
    %3401 = vmatprep.subr.bf16.mxu0 %v3160
    %3402 = vmatpush1.bf16.msra.mxu0 %v3159
    %3403 = vmatprep.subr.bf16.mxu0 %v3164
    %3404 = vmatpush1.bf16.msra.mxu0 %v3163
    %3405 = vmatprep.subr.bf16.mxu0 %v3168
    %3406 = vmatpush1.bf16.msra.mxu0 %v3167
    %3407 = vmatprep.subr.bf16.mxu0 %v3172
    %3408 = vmatpush1.bf16.msra.mxu0 %v3171
    %3409 = vmatprep.subr.bf16.mxu0 %v3176
    %3410 = vmatpush1.bf16.msra.mxu0 %v3175
    %3411 = vmatprep.subr.bf16.mxu0 %v3180
    %3412 = vmatpush1.bf16.msra.mxu0 %v3179
    %3413 = vmatprep.subr.bf16.mxu0 %v3184
    %3414 = vmatpush1.bf16.msra.mxu0 %v3183
    %3415 = vmatprep.subr.bf16.mxu0 %v3188
    %3416 = vmatpush1.bf16.msra.mxu0 %v3187
    %3417 = vmatprep.subr.bf16.mxu0 %v3192
    %3418 = vmatpush1.bf16.msra.mxu0 %v3191
    %3419 = vmatprep.mubr.bf16.mxu0 %v2594
    %3420 = vmatmul.mubr.bf16.gmra.mrb[0].mxu0 %v2593
    %v3421 = vpop.f32.mrb[0].mxu0
    %v3422 = vadd.f32 %v2730, %v3421
    %v3423 = vpop.f32.mrb[0].mxu0
    %v3424 = vadd.f32 %v2734, %v3423
    %v3425 = vpop.f32.mrb[0].mxu0
    %v3426 = vpop.f32.mrb[0].mxu0
    %3427 = vdwg.mxu0
    %3428 = vmatprep.subr.bf16.mxu0 %v3196
    %3429 = vmatpush1.bf16.msra.mxu0 %v3195
    %3430 = vmatprep.subr.bf16.mxu0 %v3200
    %3431 = vmatpush1.bf16.msra.mxu0 %v3199
    %3432 = vmatprep.subr.bf16.mxu0 %v3204
    %3433 = vmatpush1.bf16.msra.mxu0 %v3203
    %3434 = vmatprep.subr.bf16.mxu0 %v3208
    %3435 = vmatpush1.bf16.msra.mxu0 %v3207
    %3436 = vmatprep.subr.bf16.mxu0 %v3212
    %3437 = vmatpush1.bf16.msra.mxu0 %v3211
    %3438 = vmatprep.subr.bf16.mxu0 %v3216
    %3439 = vmatpush1.bf16.msra.mxu0 %v3215
    %3440 = vmatprep.subr.bf16.mxu0 %v3220
    %3441 = vmatpush1.bf16.msra.mxu0 %v3219
    %3442 = vmatprep.subr.bf16.mxu0 %v3224
    %3443 = vmatpush1.bf16.msra.mxu0 %v3223
    %3444 = vmatprep.subr.bf16.mxu0 %v3228
    %3445 = vmatpush1.bf16.msra.mxu0 %v3227
    %3446 = vmatprep.subr.bf16.mxu0 %v3232
    %3447 = vmatpush1.bf16.msra.mxu0 %v3231
    %3448 = vmatprep.subr.bf16.mxu0 %v3236
    %3449 = vmatpush1.bf16.msra.mxu0 %v3235
    %3450 = vmatprep.subr.bf16.mxu0 %v3240
    %3451 = vmatpush1.bf16.msra.mxu0 %v3239
    %3452 = vmatprep.subr.bf16.mxu0 %v3244
    %3453 = vmatpush1.bf16.msra.mxu0 %v3243
    %3454 = vmatprep.subr.bf16.mxu0 %v3248
    %3455 = vmatpush1.bf16.msra.mxu0 %v3247
    %3456 = vmatprep.subr.bf16.mxu0 %v3252
    %3457 = vmatpush1.bf16.msra.mxu0 %v3251
    %3458 = vmatprep.subr.bf16.mxu0 %v3256
    %3459 = vmatpush1.bf16.msra.mxu0 %v3255
    %3460 = vmatprep.mubr.bf16.mxu0 %v2596
    %3461 = vmatmul.mubr.bf16.gmra.mrb[0].mxu0 %v2595
    %v3462 = vpop.f32.mrb[0].mxu0
    %v3463 = vadd.f32 %v3422, %v3462
    %v3464 = vpop.f32.mrb[0].mxu0
    %v3465 = vadd.f32 %v3424, %v3464
    %v3466 = vpop.f32.mrb[0].mxu0
    %v3467 = vpop.f32.mrb[0].mxu0
    %3468 = vdwg.mxu0
    %3469 = vmatprep.subr.bf16.mxu0 %v3134
    %3470 = vmatpush1.bf16.msra.mxu0 %v3133
    %3471 = vmatprep.subr.bf16.mxu0 %v3138
    %3472 = vmatpush1.bf16.msra.mxu0 %v3137
    %3473 = vmatprep.subr.bf16.mxu0 %v3142
    %3474 = vmatpush1.bf16.msra.mxu0 %v3141
    %3475 = vmatprep.subr.bf16.mxu0 %v3146
    %3476 = vmatpush1.bf16.msra.mxu0 %v3145
    %3477 = vmatprep.subr.bf16.mxu0 %v3150
    %3478 = vmatpush1.bf16.msra.mxu0 %v3149
    %3479 = vmatprep.subr.bf16.mxu0 %v3154
    %3480 = vmatpush1.bf16.msra.mxu0 %v3153
    %3481 = vmatprep.subr.bf16.mxu0 %v3158
    %3482 = vmatpush1.bf16.msra.mxu0 %v3157
    %3483 = vmatprep.subr.bf16.mxu0 %v3162
    %3484 = vmatpush1.bf16.msra.mxu0 %v3161
    %3485 = vmatprep.subr.bf16.mxu0 %v3166
    %3486 = vmatpush1.bf16.msra.mxu0 %v3165
    %3487 = vmatprep.subr.bf16.mxu0 %v3170
    %3488 = vmatpush1.bf16.msra.mxu0 %v3169
    %3489 = vmatprep.subr.bf16.mxu0 %v3174
    %3490 = vmatpush1.bf16.msra.mxu0 %v3173
    %3491 = vmatprep.subr.bf16.mxu0 %v3178
    %3492 = vmatpush1.bf16.msra.mxu0 %v3177
    %3493 = vmatprep.subr.bf16.mxu0 %v3182
    %3494 = vmatpush1.bf16.msra.mxu0 %v3181
    %3495 = vmatprep.subr.bf16.mxu0 %v3186
    %3496 = vmatpush1.bf16.msra.mxu0 %v3185
    %3497 = vmatprep.subr.bf16.mxu0 %v3190
    %3498 = vmatpush1.bf16.msra.mxu0 %v3189
    %3499 = vmatprep.subr.bf16.mxu0 %v3194
    %3500 = vmatpush1.bf16.msra.mxu0 %v3193
    %3501 = vmatprep.mubr.bf16.mxu0 %v2594
    %3502 = vmatmul.mubr.bf16.gmra.mrb[0].mxu0 %v2593
    %v3503 = vpop.f32.mrb[0].mxu0
    %v3504 = vadd.f32 %v2738, %v3503
    %v3505 = vpop.f32.mrb[0].mxu0
    %v3506 = vadd.f32 %v2742, %v3505
    %v3507 = vpop.f32.mrb[0].mxu0
    %v3508 = vpop.f32.mrb[0].mxu0
    %3509 = vdwg.mxu0
    %3510 = vmatprep.subr.bf16.mxu0 %v3198
    %3511 = vmatpush1.bf16.msra.mxu0 %v3197
    %3512 = vmatprep.subr.bf16.mxu0 %v3202
    %3513 = vmatpush1.bf16.msra.mxu0 %v3201
    %3514 = vmatprep.subr.bf16.mxu0 %v3206
    %3515 = vmatpush1.bf16.msra.mxu0 %v3205
    %3516 = vmatprep.subr.bf16.mxu0 %v3210
    %3517 = vmatpush1.bf16.msra.mxu0 %v3209
    %3518 = vmatprep.subr.bf16.mxu0 %v3214
    %3519 = vmatpush1.bf16.msra.mxu0 %v3213
    %3520 = vmatprep.subr.bf16.mxu0 %v3218
    %3521 = vmatpush1.bf16.msra.mxu0 %v3217
    %3522 = vmatprep.subr.bf16.mxu0 %v3222
    %3523 = vmatpush1.bf16.msra.mxu0 %v3221
    %3524 = vmatprep.subr.bf16.mxu0 %v3226
    %3525 = vmatpush1.bf16.msra.mxu0 %v3225
    %3526 = vmatprep.subr.bf16.mxu0 %v3230
    %3527 = vmatpush1.bf16.msra.mxu0 %v3229
    %3528 = vmatprep.subr.bf16.mxu0 %v3234
    %3529 = vmatpush1.bf16.msra.mxu0 %v3233
    %3530 = vmatprep.subr.bf16.mxu0 %v3238
    %3531 = vmatpush1.bf16.msra.mxu0 %v3237
    %3532 = vmatprep.subr.bf16.mxu0 %v3242
    %3533 = vmatpush1.bf16.msra.mxu0 %v3241
    %3534 = vmatprep.subr.bf16.mxu0 %v3246
    %3535 = vmatpush1.bf16.msra.mxu0 %v3245
    %3536 = vmatprep.subr.bf16.mxu0 %v3250
    %3537 = vmatpush1.bf16.msra.mxu0 %v3249
    %3538 = vmatprep.subr.bf16.mxu0 %v3254
    %3539 = vmatpush1.bf16.msra.mxu0 %v3253
    %3540 = vmatprep.subr.bf16.mxu0 %v3258
    %3541 = vmatpush1.bf16.msra.mxu0 %v3257
    %3542 = vmatprep.mubr.bf16.mxu0 %v2596
    %3543 = vmatmul.mubr.bf16.gmra.mrb[0].mxu0 %v2595
    %v3544 = vpop.f32.mrb[0].mxu0
    %v3545 = vadd.f32 %v3504, %v3544
    %v3546 = vpop.f32.mrb[0].mxu0
    %v3547 = vadd.f32 %v3506, %v3546
    %v3548 = vpop.f32.mrb[0].mxu0
    %v3549 = vpop.f32.mrb[0].mxu0
    %3550 = vdwg.mxu0
    %v3551 = vmax.f32 %v3463, 0.0
    %v3552 = vmax.f32 %v3465, 0.0
    %v3553 = vmax.f32 %v3545, 0.0
    %v3554 = vmax.f32 %v3547, 0.0
    %v3555 = vpack.c.bf16 %v3551, %v3551
    %v3556 = vpack.c.bf16 %v3552, %v3552
    %v3557 = vpack.c.bf16 %v3553, %v3553
    %v3558 = vpack.c.bf16 %v3554, %v3554
    %v3559 = vld [vmem:[#allocation8] sm:$0xf]
    %v3560 = vld [vmem:[#allocation8 + $0x4] sm:$0xf]
    %v3561 = vld [vmem:[#allocation8 + $0x8] sm:$0xf]
    %v3562 = vld [vmem:[#allocation8 + $0xc] sm:$0xf]
    %v3563 = vld [vmem:[#allocation8 + $0x10] sm:$0xf]
    %v3564 = vld [vmem:[#allocation8 + $0x14] sm:$0xf]
    %v3565 = vld [vmem:[#allocation8 + $0x18] sm:$0xf]
    %v3566 = vld [vmem:[#allocation8 + $0x1c] sm:$0xf]
    %v3567 = vld [vmem:[#allocation8 + $0x20] sm:$0xf]
    %v3568 = vld [vmem:[#allocation8 + $0x24] sm:$0xf]
    %v3569 = vld [vmem:[#allocation8 + $0x28] sm:$0xf]
    %v3570 = vld [vmem:[#allocation8 + $0x2c] sm:$0xf]
    %v3571 = vld [vmem:[#allocation8 + $0x30] sm:$0xf]
    %v3572 = vld [vmem:[#allocation8 + $0x34] sm:$0xf]
    %v3573 = vld [vmem:[#allocation8 + $0x38] sm:$0xf]
    %v3574 = vld [vmem:[#allocation8 + $0x3c] sm:$0xf]
    %v3575 = vld [vmem:[#allocation8 + $0x40] sm:$0xf]
    %v3576 = vld [vmem:[#allocation8 + $0x44] sm:$0xf]
    %v3577 = vld [vmem:[#allocation8 + $0x48] sm:$0xf]
    %v3578 = vld [vmem:[#allocation8 + $0x4c] sm:$0xf]
    %v3579 = vld [vmem:[#allocation8 + $0x50] sm:$0xf]
    %v3580 = vld [vmem:[#allocation8 + $0x54] sm:$0xf]
    %v3581 = vld [vmem:[#allocation8 + $0x58] sm:$0xf]
    %v3582 = vld [vmem:[#allocation8 + $0x5c] sm:$0xf]
    %v3583 = vld [vmem:[#allocation8 + $0x60] sm:$0xf]
    %v3584 = vld [vmem:[#allocation8 + $0x64] sm:$0xf]
    %v3585 = vld [vmem:[#allocation8 + $0x68] sm:$0xf]
    %v3586 = vld [vmem:[#allocation8 + $0x6c] sm:$0xf]
    %v3587 = vld [vmem:[#allocation8 + $0x70] sm:$0xf]
    %v3588 = vld [vmem:[#allocation8 + $0x74] sm:$0xf]
    %v3589 = vld [vmem:[#allocation8 + $0x78] sm:$0xf]
    %v3590 = vld [vmem:[#allocation8 + $0x7c] sm:$0xf]
    %v3591 = vld [vmem:[#allocation8 + $0x80] sm:$0xf]
    %v3592 = vld [vmem:[#allocation8 + $0x84] sm:$0xf]
    %v3593 = vld [vmem:[#allocation8 + $0x88] sm:$0xf]
    %v3594 = vld [vmem:[#allocation8 + $0x8c] sm:$0xf]
    %v3595 = vld [vmem:[#allocation8 + $0x90] sm:$0xf]
    %v3596 = vld [vmem:[#allocation8 + $0x94] sm:$0xf]
    %v3597 = vld [vmem:[#allocation8 + $0x98] sm:$0xf]
    %v3598 = vld [vmem:[#allocation8 + $0x9c] sm:$0xf]
    %v3599 = vld [vmem:[#allocation8 + $0xa0] sm:$0xf]
    %v3600 = vld [vmem:[#allocation8 + $0xa4] sm:$0xf]
    %v3601 = vld [vmem:[#allocation8 + $0xa8] sm:$0xf]
    %v3602 = vld [vmem:[#allocation8 + $0xac] sm:$0xf]
    %v3603 = vld [vmem:[#allocation8 + $0xb0] sm:$0xf]
    %v3604 = vld [vmem:[#allocation8 + $0xb4] sm:$0xf]
    %v3605 = vld [vmem:[#allocation8 + $0xb8] sm:$0xf]
    %v3606 = vld [vmem:[#allocation8 + $0xbc] sm:$0xf]
    %v3607 = vld [vmem:[#allocation8 + $0xc0] sm:$0xf]
    %v3608 = vld [vmem:[#allocation8 + $0xc4] sm:$0xf]
    %v3609 = vld [vmem:[#allocation8 + $0xc8] sm:$0xf]
    %v3610 = vld [vmem:[#allocation8 + $0xcc] sm:$0xf]
    %v3611 = vld [vmem:[#allocation8 + $0xd0] sm:$0xf]
    %v3612 = vld [vmem:[#allocation8 + $0xd4] sm:$0xf]
    %v3613 = vld [vmem:[#allocation8 + $0xd8] sm:$0xf]
    %v3614 = vld [vmem:[#allocation8 + $0xdc] sm:$0xf]
    %v3615 = vld [vmem:[#allocation8 + $0xe0] sm:$0xf]
    %v3616 = vld [vmem:[#allocation8 + $0xe4] sm:$0xf]
    %v3617 = vld [vmem:[#allocation8 + $0xe8] sm:$0xf]
    %v3618 = vld [vmem:[#allocation8 + $0xec] sm:$0xf]
    %v3619 = vld [vmem:[#allocation8 + $0xf0] sm:$0xf]
    %v3620 = vld [vmem:[#allocation8 + $0xf4] sm:$0xf]
    %v3621 = vld [vmem:[#allocation8 + $0xf8] sm:$0xf]
    %v3622 = vld [vmem:[#allocation8 + $0xfc] sm:$0xf]
    %v3623 = vld [vmem:[%s8] sm:$0x1]
    %v3625 = vlaneseq
    %v3626 = vshrl.u32 %v3625, 7
    %v3627 = vsub.s32 0, %v3626
    %v3628 = vrot.slane %v3623, %v3627
    %v3694 = vunpack.c.l.b16 %v3559
    %v3695 = vunpack.c.l.b16 %v3560
    %v3696 = vunpack.c.l.b16 %v3561
    %v3697 = vunpack.c.l.b16 %v3562
    %v3698 = vunpack.c.l.b16 %v3563
    %v3699 = vunpack.c.l.b16 %v3564
    %v3700 = vunpack.c.l.b16 %v3565
    %v3701 = vunpack.c.l.b16 %v3566
    %v3702 = vunpack.c.l.b16 %v3567
    %v3703 = vunpack.c.l.b16 %v3568
    %v3704 = vunpack.c.l.b16 %v3569
    %v3705 = vunpack.c.l.b16 %v3570
    %v3706 = vunpack.c.l.b16 %v3571
    %v3707 = vunpack.c.l.b16 %v3572
    %v3708 = vunpack.c.l.b16 %v3573
    %v3709 = vunpack.c.l.b16 %v3574
    %v3710 = vunpack.c.l.b16 %v3575
    %v3711 = vunpack.c.l.b16 %v3576
    %v3712 = vunpack.c.l.b16 %v3577
    %v3713 = vunpack.c.l.b16 %v3578
    %v3714 = vunpack.c.l.b16 %v3579
    %v3715 = vunpack.c.l.b16 %v3580
    %v3716 = vunpack.c.l.b16 %v3581
    %v3717 = vunpack.c.l.b16 %v3582
    %v3718 = vunpack.c.l.b16 %v3583
    %v3719 = vunpack.c.l.b16 %v3584
    %v3720 = vunpack.c.l.b16 %v3585
    %v3721 = vunpack.c.l.b16 %v3586
    %v3722 = vunpack.c.l.b16 %v3587
    %v3723 = vunpack.c.l.b16 %v3588
    %v3724 = vunpack.c.l.b16 %v3589
    %v3725 = vunpack.c.l.b16 %v3590
    %v3726 = vunpack.c.l.b16 %v3591
    %v3727 = vunpack.c.l.b16 %v3592
    %v3728 = vunpack.c.l.b16 %v3593
    %v3729 = vunpack.c.l.b16 %v3594
    %v3730 = vunpack.c.l.b16 %v3595
    %v3731 = vunpack.c.l.b16 %v3596
    %v3732 = vunpack.c.l.b16 %v3597
    %v3733 = vunpack.c.l.b16 %v3598
    %v3734 = vunpack.c.l.b16 %v3599
    %v3735 = vunpack.c.l.b16 %v3600
    %v3736 = vunpack.c.l.b16 %v3601
    %v3737 = vunpack.c.l.b16 %v3602
    %v3738 = vunpack.c.l.b16 %v3603
    %v3739 = vunpack.c.l.b16 %v3604
    %v3740 = vunpack.c.l.b16 %v3605
    %v3741 = vunpack.c.l.b16 %v3606
    %v3742 = vunpack.c.l.b16 %v3607
    %v3743 = vunpack.c.l.b16 %v3608
    %v3744 = vunpack.c.l.b16 %v3609
    %v3745 = vunpack.c.l.b16 %v3610
    %v3746 = vunpack.c.l.b16 %v3611
    %v3747 = vunpack.c.l.b16 %v3612
    %v3748 = vunpack.c.l.b16 %v3613
    %v3749 = vunpack.c.l.b16 %v3614
    %v3750 = vunpack.c.l.b16 %v3615
    %v3751 = vunpack.c.l.b16 %v3616
    %v3752 = vunpack.c.l.b16 %v3617
    %v3753 = vunpack.c.l.b16 %v3618
    %v3754 = vunpack.c.l.b16 %v3619
    %v3755 = vunpack.c.l.b16 %v3620
    %v3756 = vunpack.c.l.b16 %v3621
    %v3757 = vunpack.c.l.b16 %v3622
    %v3758 = vpack.c.b16 %v3695, %v3694
    %v3759 = vpack.c.b16 %v3697, %v3696
    %v3760 = vpack.c.b16 %v3699, %v3698
    %v3761 = vpack.c.b16 %v3701, %v3700
    %v3762 = vpack.c.b16 %v3703, %v3702
    %v3763 = vpack.c.b16 %v3705, %v3704
    %v3764 = vpack.c.b16 %v3707, %v3706
    %v3765 = vpack.c.b16 %v3709, %v3708
    %v3766 = vpack.c.b16 %v3711, %v3710
    %v3767 = vpack.c.b16 %v3713, %v3712
    %v3768 = vpack.c.b16 %v3715, %v3714
    %v3769 = vpack.c.b16 %v3717, %v3716
    %v3770 = vpack.c.b16 %v3719, %v3718
    %v3771 = vpack.c.b16 %v3721, %v3720
    %v3772 = vpack.c.b16 %v3723, %v3722
    %v3773 = vpack.c.b16 %v3725, %v3724
    %v3774 = vpack.c.b16 %v3727, %v3726
    %v3775 = vpack.c.b16 %v3729, %v3728
    %v3776 = vpack.c.b16 %v3731, %v3730
    %v3777 = vpack.c.b16 %v3733, %v3732
    %v3778 = vpack.c.b16 %v3735, %v3734
    %v3779 = vpack.c.b16 %v3737, %v3736
    %v3780 = vpack.c.b16 %v3739, %v3738
    %v3781 = vpack.c.b16 %v3741, %v3740
    %v3782 = vpack.c.b16 %v3743, %v3742
    %v3783 = vpack.c.b16 %v3745, %v3744
    %v3784 = vpack.c.b16 %v3747, %v3746
    %v3785 = vpack.c.b16 %v3749, %v3748
    %v3786 = vpack.c.b16 %v3751, %v3750
    %v3787 = vpack.c.b16 %v3753, %v3752
    %v3788 = vpack.c.b16 %v3755, %v3754
    %v3789 = vpack.c.b16 %v3757, %v3756
    %3822 = vmatprep.subr.bf16.mxu0 0
    %3823 = vmatpush1.bf16.msra.mxu0 %v3758
    %3824 = vmatprep.subr.bf16.mxu0 0
    %3825 = vmatpush1.bf16.msra.mxu0 %v3759
    %3826 = vmatprep.subr.bf16.mxu0 0
    %3827 = vmatpush1.bf16.msra.mxu0 %v3760
    %3828 = vmatprep.subr.bf16.mxu0 0
    %3829 = vmatpush1.bf16.msra.mxu0 %v3761
    %3830 = vmatprep.subr.bf16.mxu0 0
    %3831 = vmatpush1.bf16.msra.mxu0 %v3762
    %3832 = vmatprep.subr.bf16.mxu0 0
    %3833 = vmatpush1.bf16.msra.mxu0 %v3763
    %3834 = vmatprep.subr.bf16.mxu0 0
    %3835 = vmatpush1.bf16.msra.mxu0 %v3764
    %3836 = vmatprep.subr.bf16.mxu0 0
    %3837 = vmatpush1.bf16.msra.mxu0 %v3765
    %3838 = vmatprep.subr.bf16.mxu0 0
    %3839 = vmatpush1.bf16.msra.mxu0 %v3766
    %3840 = vmatprep.subr.bf16.mxu0 0
    %3841 = vmatpush1.bf16.msra.mxu0 %v3767
    %3842 = vmatprep.subr.bf16.mxu0 0
    %3843 = vmatpush1.bf16.msra.mxu0 %v3768
    %3844 = vmatprep.subr.bf16.mxu0 0
    %3845 = vmatpush1.bf16.msra.mxu0 %v3769
    %3846 = vmatprep.subr.bf16.mxu0 0
    %3847 = vmatpush1.bf16.msra.mxu0 %v3770
    %3848 = vmatprep.subr.bf16.mxu0 0
    %3849 = vmatpush1.bf16.msra.mxu0 %v3771
    %3850 = vmatprep.subr.bf16.mxu0 0
    %3851 = vmatpush1.bf16.msra.mxu0 %v3772
    %3852 = vmatprep.subr.bf16.mxu0 0
    %3853 = vmatpush1.bf16.msra.mxu0 %v3773
    %3854 = vmatprep.mubr.bf16.mxu0 %v3556
    %3855 = vmatmul.mubr.bf16.gmra.mrb[0].mxu0 %v3555
    %v3856 = vpop.f32.mrb[0].mxu0
    %v3857 = vadd.f32 %v3628, %v3856
    %v3858 = vpop.f32.mrb[0].mxu0
    %v3859 = vpop.f32.mrb[0].mxu0
    %v3860 = vpop.f32.mrb[0].mxu0
    %3861 = vdwg.mxu0
    %3862 = vmatprep.subr.bf16.mxu0 0
    %3863 = vmatpush1.bf16.msra.mxu0 %v3774
    %3864 = vmatprep.subr.bf16.mxu0 0
    %3865 = vmatpush1.bf16.msra.mxu0 %v3775
    %3866 = vmatprep.subr.bf16.mxu0 0
    %3867 = vmatpush1.bf16.msra.mxu0 %v3776
    %3868 = vmatprep.subr.bf16.mxu0 0
    %3869 = vmatpush1.bf16.msra.mxu0 %v3777
    %3870 = vmatprep.subr.bf16.mxu0 0
    %3871 = vmatpush1.bf16.msra.mxu0 %v3778
    %3872 = vmatprep.subr.bf16.mxu0 0
    %3873 = vmatpush1.bf16.msra.mxu0 %v3779
    %3874 = vmatprep.subr.bf16.mxu0 0
    %3875 = vmatpush1.bf16.msra.mxu0 %v3780
    %3876 = vmatprep.subr.bf16.mxu0 0
    %3877 = vmatpush1.bf16.msra.mxu0 %v3781
    %3878 = vmatprep.subr.bf16.mxu0 0
    %3879 = vmatpush1.bf16.msra.mxu0 %v3782
    %3880 = vmatprep.subr.bf16.mxu0 0
    %3881 = vmatpush1.bf16.msra.mxu0 %v3783
    %3882 = vmatprep.subr.bf16.mxu0 0
    %3883 = vmatpush1.bf16.msra.mxu0 %v3784
    %3884 = vmatprep.subr.bf16.mxu0 0
    %3885 = vmatpush1.bf16.msra.mxu0 %v3785
    %3886 = vmatprep.subr.bf16.mxu0 0
    %3887 = vmatpush1.bf16.msra.mxu0 %v3786
    %3888 = vmatprep.subr.bf16.mxu0 0
    %3889 = vmatpush1.bf16.msra.mxu0 %v3787
    %3890 = vmatprep.subr.bf16.mxu0 0
    %3891 = vmatpush1.bf16.msra.mxu0 %v3788
    %3892 = vmatprep.subr.bf16.mxu0 0
    %3893 = vmatpush1.bf16.msra.mxu0 %v3789
    %3894 = vmatprep.mubr.bf16.mxu0 %v3558
    %3895 = vmatmul.mubr.bf16.gmra.mrb[0].mxu0 %v3557
    %v3896 = vpop.f32.mrb[0].mxu0
    %v3897 = vadd.f32 %v3857, %v3896
    %v3898 = vpop.f32.mrb[0].mxu0
    %v3899 = vpop.f32.mrb[0].mxu0
    %v3900 = vpop.f32.mrb[0].mxu0
    %3901 = vdwg.mxu0
    %v3902 = vmax.f32 %v3897, 0.0
    %v3903 = vpack.c.bf16 %v3902, %v3902
    %v3904 = vld [vmem:[%s9] sm:$0xf]
    %v3905 = vld [vmem:[%s9 + $0x4] sm:$0xf]
    %v3906 = vld [vmem:[%s9 + $0x8] sm:$0xf]
    %v3907 = vld [vmem:[%s9 + $0xc] sm:$0xf]
    %v3908 = vld [vmem:[%s9 + $0x10] sm:$0xf]
    %v3909 = vld [vmem:[%s9 + $0x14] sm:$0xf]
    %v3910 = vld [vmem:[%s9 + $0x18] sm:$0xf]
    %v3911 = vld [vmem:[%s9 + $0x1c] sm:$0xf]
    %v3912 = vld [vmem:[%s9 + $0x20] sm:$0xf]
    %v3913 = vld [vmem:[%s9 + $0x24] sm:$0xf]
    %v3914 = vld [vmem:[%s9 + $0x28] sm:$0xf]
    %v3915 = vld [vmem:[%s9 + $0x2c] sm:$0xf]
    %v3916 = vld [vmem:[%s9 + $0x30] sm:$0xf]
    %v3917 = vld [vmem:[%s9 + $0x34] sm:$0xf]
    %v3918 = vld [vmem:[%s9 + $0x38] sm:$0xf]
    %v3919 = vld [vmem:[%s9 + $0x3c] sm:$0xf]
    %v3920 = vld [vmem:[%s10] sm:$0x1]
    %v3922 = vlaneseq
    %v3923 = vshrl.u32 %v3922, 7
    %v3924 = vsub.s32 0, %v3923
    %v3925 = vrot.slane %v3920, %v3924
    %v3943 = vunpack.c.l.b16 %v3904
    %v3944 = vunpack.c.l.b16 %v3905
    %v3945 = vunpack.c.l.b16 %v3906
    %v3946 = vunpack.c.l.b16 %v3907
    %v3947 = vunpack.c.l.b16 %v3908
    %v3948 = vunpack.c.l.b16 %v3909
    %v3949 = vunpack.c.l.b16 %v3910
    %v3950 = vunpack.c.l.b16 %v3911
    %v3951 = vunpack.c.l.b16 %v3912
    %v3952 = vunpack.c.l.b16 %v3913
    %v3953 = vunpack.c.l.b16 %v3914
    %v3954 = vunpack.c.l.b16 %v3915
    %v3955 = vunpack.c.l.b16 %v3916
    %v3956 = vunpack.c.l.b16 %v3917
    %v3957 = vunpack.c.l.b16 %v3918
    %v3958 = vunpack.c.l.b16 %v3919
    %v3959 = vpack.c.b16 %v3944, %v3943
    %v3960 = vpack.c.b16 %v3946, %v3945
    %v3961 = vpack.c.b16 %v3948, %v3947
    %v3962 = vpack.c.b16 %v3950, %v3949
    %v3963 = vpack.c.b16 %v3952, %v3951
    %v3964 = vpack.c.b16 %v3954, %v3953
    %v3965 = vpack.c.b16 %v3956, %v3955
    %v3966 = vpack.c.b16 %v3958, %v3957
    %3975 = vmatprep.subr.bf16.mxu0 0
    %3976 = vmatpush1.bf16.msra.mxu0 %v3959
    %3977 = vmatprep.subr.bf16.mxu0 0
    %3978 = vmatpush1.bf16.msra.mxu0 %v3960
    %3979 = vmatprep.subr.bf16.mxu0 0
    %3980 = vmatpush1.bf16.msra.mxu0 %v3961
    %3981 = vmatprep.subr.bf16.mxu0 0
    %3982 = vmatpush1.bf16.msra.mxu0 %v3962
    %3983 = vmatprep.subr.bf16.mxu0 0
    %3984 = vmatpush1.bf16.msra.mxu0 %v3963
    %3985 = vmatprep.subr.bf16.mxu0 0
    %3986 = vmatpush1.bf16.msra.mxu0 %v3964
    %3987 = vmatprep.subr.bf16.mxu0 0
    %3988 = vmatpush1.bf16.msra.mxu0 %v3965
    %3989 = vmatprep.subr.bf16.mxu0 0
    %3990 = vmatpush1.bf16.msra.mxu0 %v3966
    %3991 = vmatprep.subr.bf16.mxu0 0
    %3992 = vmatpush1.bf16.msra.mxu0 0
    %3993 = vmatprep.subr.bf16.mxu0 0
    %3994 = vmatpush1.bf16.msra.mxu0 0
    %3995 = vmatprep.subr.bf16.mxu0 0
    %3996 = vmatpush1.bf16.msra.mxu0 0
    %3997 = vmatprep.subr.bf16.mxu0 0
    %3998 = vmatpush1.bf16.msra.mxu0 0
    %3999 = vmatprep.subr.bf16.mxu0 0
    %4000 = vmatpush1.bf16.msra.mxu0 0
    %4001 = vmatprep.subr.bf16.mxu0 0
    %4002 = vmatpush1.bf16.msra.mxu0 0
    %4003 = vmatprep.subr.bf16.mxu0 0
    %4004 = vmatpush1.bf16.msra.mxu0 0
    %4005 = vmatprep.subr.bf16.mxu0 0
    %4006 = vmatpush1.bf16.msra.mxu0 0
    %4007 = vmatprep.mubr.bf16.mxu0 0
    %4008 = vmatmul.mubr.bf16.gmra.mrb[0].mxu0 %v3903
    %v4009 = vpop.f32.mrb[0].mxu0
    %v4010 = vadd.f32 %v3925, %v4009
    %v4011 = vpop.f32.mrb[0].mxu0
    %v4012 = vpop.f32.mrb[0].mxu0
    %v4013 = vpop.f32.mrb[0].mxu0
    %4014 = vdwg.mxu0
    %vm4015 = vcmask 56320
    %v4016 = vsel %vm4015, %v4010, -inf
    %4017 = vmax.xlane.f32.xlu0 %v4016
    %v4018 = vpop.xlane.xlu0 %4017
    %v4019 = vsub.f32 %v4010, %v4018
    %v4020 = vmul.f32 %v4019, 1.442695
    %v4021 = vpow.pop %v4020
    %v4022 = vsel %vm4015, %v4021, 0.0
    %4023 = vadd.xlane.f32.xlu0 %v4022
    %v4024 = vpop.xlane.xlu0 %4023
    %v4025 = vrcp.pop %v4024
    %v4026 = vmul.f32 %v4021, %v4025
    %4027 = vst.msk [vmem:[#allocation10] sm:$0xff] %vm4015, %v4026
    // Predicated region
    $region62: #{tpu_custom_call.1} parent=1 // pred_check
      _
    $region63: #{tpu_custom_call.1} parent=1 // pred_check_branch
      %4029 = sbr.rel (0) target = $region65
    $region64: #{tpu_custom_call.1} parent=1 // pred_region
      %s4031 = ssub.s32 128, 128
      %4032 = vsyncadd [#allocation4], %s4031
      %s4034 = sshll.u32 [#allocation10], 4
      %s4035 = int_to_ptr.vmem [resolvable:$true] %s4034
      %4037 = dma.vmem_to_hbm [thread:$0]  %s4035, 128, %s11, [#allocation4]
    $region65: #{tpu_custom_call.1} parent=1 // pred_fallthru
      _
    // Predicated region
    $region66: #{tpu_custom_call.1} parent=1 // pred_check
      _
    $region67: #{tpu_custom_call.1} parent=1 // pred_check_branch
      %4039 = sbr.rel (0) target = $region69
    $region68: #{tpu_custom_call.1} parent=1 // pred_region
      %4040 = dma.done [#allocation4], 128
    $region69: #{tpu_custom_call.1} parent=1 // pred_fallthru
      _
    %4041 = vsyncpa [#allocation3], 1
    %4042 = vsyncpa [#allocation6], 1
    %4043 = vsyncpa [#allocation9], 1
    %4044 = vsyncpa [#allocation4], 1

</llo_original>
